<compile_context>
chip_gen: v5e
topology: v5e:2x2
jax: 0.10.0
libtpu: 0.0.40
codegen_flags: <defaults>
</compile_context>

<pallas_src>
import math
import numpy as np
import jax
import jax.numpy as jnp
from jax.experimental import pallas as pl
from jax.experimental.pallas import tpu as pltpu

_LANE = 128
_C1 = 0.01 ** 2
_C2 = 0.03 ** 2


def _gaussian_1d(window_size: int, sigma: float) -> np.ndarray:
    """1D factor of gaussian(window_size, sigma, dim=2) from the module.
    The module's 2D window is the normalized outer product of this 1D kernel,
    so normalizing the 1D kernel makes the separable conv exactly equivalent."""
    coords = np.arange(window_size, dtype=np.float64)
    mean = (window_size - 1) / 2.0
    g = (1.0 / (sigma * math.sqrt(2.0 * math.pi))) * np.exp(
        -(((coords - mean) / (2.0 * sigma)) ** 2)
    )
    g = g / g.sum()
    return g.astype(np.float32)


def make_ssim_kernel(TB: int, H: int, W: int, ws: int, w1d: np.ndarray):
    pad = ws // 2
    taps = [float(v) for v in w1d]

    def kernel(a_ref, b_ref, out_ref, apad_ref, bpad_ref):
        # Zero-pad the plane block on a VMEM scratch tile (conv padding = ws//2).
        # Zeroed every step so the kernel has no cross-iteration scratch state
        # (safe under "parallel" grid semantics / megacore sharding).
        apad_ref[...] = jnp.zeros_like(apad_ref)
        bpad_ref[...] = jnp.zeros_like(bpad_ref)
        apad_ref[:, pad:pad + H, pad:pad + W] = a_ref[...]
        bpad_ref[:, pad:pad + H, pad:pad + W] = b_ref[...]

        A = apad_ref[...]          # (TB, Hp, Wp)
        B = bpad_ref[...]
        # Hoist the products: computed once per tile, not per tap.
        A2 = A * A
        B2 = B * B
        AB = A * B

        def hconv(x):              # (TB, Hp, Wp) -> (TB, Hp, W)
            acc = taps[0] * x[:, :, 0:W]
            for d in range(1, ws):
                acc = acc + taps[d] * x[:, :, d:d + W]
            return acc

        def vconv(x):              # (TB, Hp, W) -> (TB, H, W)
            acc = taps[0] * x[:, 0:H, :]
            for d in range(1, ws):
                acc = acc + taps[d] * x[:, d:d + H, :]
            return acc

        mu1 = vconv(hconv(A))
        mu2 = vconv(hconv(B))
        s11 = vconv(hconv(A2))
        s22 = vconv(hconv(B2))
        s12 = vconv(hconv(AB))

        mu1_sq = mu1 * mu1
        mu2_sq = mu2 * mu2
        mu1_mu2 = mu1 * mu2
        sigma1_sq = s11 - mu1_sq
        sigma2_sq = s22 - mu2_sq
        sigma12 = s12 - mu1_mu2

        num = (2.0 * mu1_mu2 + _C1) * (2.0 * sigma12 + _C2)
        den = (mu1_sq + mu2_sq + _C1) * (sigma1_sq + sigma2_sq + _C2)
        ssim_map = num / den       # (TB, H, W)

        # In-kernel per-plane reduction (lane reduce, then sublane reduce).
        s_lane = jnp.sum(ssim_map, axis=2, keepdims=True)   # (TB, H, 1)
        s_all = jnp.sum(s_lane, axis=1, keepdims=True)      # (TB, 1, 1)
        out_ref[...] = jnp.broadcast_to(s_all, (TB, 1, _LANE))

    return kernel


def _choose_planes_per_step(P: int, H: int, W: int, ws: int) -> int:
    """Batch several (n,c) planes per grid step while keeping VMEM modest and
    leaving >= 2 grid steps when possible (v7x 2-TC split)."""
    hp, wp = H + ws - 1, W + ws - 1
    per_plane_bytes = hp * wp * 4 * 16        # ~16 live f32 planes per image plane
    budget = 8 * 1024 * 1024
    tb = int(max(1, min(8, budget // max(per_plane_bytes, 1))))
    if 2 <= P < 2 * tb:
        tb = max(1, P // 2)
    return tb


def ssim_pallas(img1: jax.Array, img2: jax.Array,
                window_size: int = 11, size_average: bool = True) -> jax.Array:
    """SSIM forward pass matching the PyTorch module (NCHW inputs)."""
    assert img1.shape == img2.shape and img1.ndim == 4, "expected NCHW inputs"
    N, C, H, W = img1.shape
    ws = window_size
    pad = ws // 2
    Hp, Wp = H + 2 * pad, W + 2 * pad
    w1d = _gaussian_1d(ws, sigma=0.5)

    P = N * C
    x1 = img1.astype(jnp.float32).reshape(P, H, W)
    x2 = img2.astype(jnp.float32).reshape(P, H, W)

    TB = _choose_planes_per_step(P, H, W, ws)
    nblocks = -(-P // TB)
    P_pad = nblocks * TB
    if P_pad != P:
        x1 = jnp.pad(x1, ((0, P_pad - P), (0, 0), (0, 0)))
        x2 = jnp.pad(x2, ((0, P_pad - P), (0, 0), (0, 0)))

    kernel = make_ssim_kernel(TB, H, W, ws, w1d)

    sums = pl.pallas_call(
        kernel,
        out_shape=jax.ShapeDtypeStruct((P_pad, 1, _LANE), jnp.float32),
        grid=(nblocks,),
        in_specs=[
            pl.BlockSpec((TB, H, W), lambda i: (i, 0, 0)),
            pl.BlockSpec((TB, H, W), lambda i: (i, 0, 0)),
        ],
        out_specs=pl.BlockSpec((TB, 1, _LANE), lambda i: (i, 0, 0)),
        scratch_shapes=[
            pltpu.VMEM((TB, Hp, Wp), jnp.float32),
            pltpu.VMEM((TB, Hp, Wp), jnp.float32),
        ],
        compiler_params=pltpu.CompilerParams(
            dimension_semantics=("parallel",),
            vmem_limit_bytes=32 * 1024 * 1024,
        ),
    )(x1, x2)

    plane_sums = sums[:P, 0, 0]                       # (N*C,)
    per_plane_mean = plane_sums / float(H * W)        # mean over (H, W) per plane
    if size_average:
        return jnp.mean(per_plane_mean)
    # matches ssim_map.mean(1).mean(1).mean(1) -> per-batch scalar
    return jnp.mean(per_plane_mean.reshape(N, C), axis=1)


# ---------------- pure-JAX reference (for a light correctness check) ---------
def _ssim_reference(img1, img2, window_size=11, size_average=True):
    N, C, H, W = img1.shape
    w1d = _gaussian_1d(window_size, 0.5)
    w2d = jnp.asarray(np.outer(w1d, w1d), jnp.float32)
    w = jnp.tile(w2d[None, None], (C, 1, 1, 1))
    pad = window_size // 2

    def conv(x):
        return jax.lax.conv_general_dilated(
            x, w, window_strides=(1, 1), padding=[(pad, pad), (pad, pad)],
            dimension_numbers=("NCHW", "OIHW", "NCHW"),
            feature_group_count=C, precision=jax.lax.Precision.HIGHEST)

    img1 = img1.astype(jnp.float32)
    img2 = img2.astype(jnp.float32)
    mu1, mu2 = conv(img1), conv(img2)
    mu1_sq, mu2_sq, mu1_mu2 = mu1 * mu1, mu2 * mu2, mu1 * mu2
    sigma1_sq = conv(img1 * img1) - mu1_sq
    sigma2_sq = conv(img2 * img2) - mu2_sq
    sigma12 = conv(img1 * img2) - mu1_mu2
    ssim_map = ((2 * mu1_mu2 + _C1) * (2 * sigma12 + _C2)) / (
        (mu1_sq + mu2_sq + _C1) * (sigma1_sq + sigma2_sq + _C2))
    if size_average:
        return ssim_map.mean()
    return ssim_map.mean(axis=(1, 2, 3))


if __name__ == "__main__":
    key = jax.random.PRNGKey(0)
    k1, k2 = jax.random.split(key)
    N, C, H, W = 2, 4, 16, 16
    img1 = jax.random.uniform(k1, (N, C, H, W), dtype=jnp.float32)
    img2 = jax.random.uniform(k2, (N, C, H, W), dtype=jnp.float32)

    out = jax.block_until_ready(ssim_pallas(img1, img2, window_size=11, size_average=True))
    ref = jax.block_until_ready(_ssim_reference(img1, img2, 11, True))
    assert out.shape == ()
    assert abs(float(out) - float(ref)) < 2e-3, (float(out), float(ref))

    per_batch = jax.block_until_ready(ssim_pallas(img1, img2, size_average=False))
    assert per_batch.shape == (N,)

    self_ssim = jax.block_until_ready(ssim_pallas(img1, img1))
    assert float(self_ssim) > 0.99

    print("KERNEL_OK")
</pallas_src>

<mosaic_0001>
module attributes {stable_mosaic.version = 11 : i64} {
  func.func @kernel(%arg0: i32, %arg1: memref<4x16x16xf32, #tpu.memory_space<vmem>>, %arg2: memref<4x16x16xf32, #tpu.memory_space<vmem>>, %arg3: memref<4x1x128xf32, #tpu.memory_space<vmem>>, %arg4: memref<4x26x26xf32, #tpu.memory_space<vmem>>, %arg5: memref<4x26x26xf32, #tpu.memory_space<vmem>>) attributes {dimension_semantics = [#tpu.dimension_semantics<parallel>], iteration_bounds = array<i64: 2>, scalar_prefetch = 0 : i64, scratch_operands = 2 : i64, tpu.core_type = #tpu.core_type<tc>, window_params = [{transform_indices = @transform_0, window_bounds = array<i64: 4, 16, 16>}, {transform_indices = @transform_1, window_bounds = array<i64: 4, 16, 16>}, {transform_indices = @transform_2, window_bounds = array<i64: 4, 1, 128>}]} {
    %cst = arith.constant 0.000000e+00 : f32
    %0 = vector.broadcast %cst : f32 to vector<4x26x26xf32>
    %c0 = arith.constant 0 : index
    %c0_0 = arith.constant 0 : index
    %c0_1 = arith.constant 0 : index
    %1 = vector.load %arg4[%c0, %c0_0, %c0_1] : memref<4x26x26xf32, #tpu.memory_space<vmem>>, vector<4x26x26xf32>
    tpu.vector_store %arg4[%c0, %c0_0, %c0_1], %0 {strides = array<i32>} : memref<4x26x26xf32, #tpu.memory_space<vmem>>, vector<4x26x26xf32>,
    %cst_2 = arith.constant 0.000000e+00 : f32
    %2 = vector.broadcast %cst_2 : f32 to vector<4x26x26xf32>
    %c0_3 = arith.constant 0 : index
    %c0_4 = arith.constant 0 : index
    %c0_5 = arith.constant 0 : index
    %3 = vector.load %arg5[%c0_3, %c0_4, %c0_5] : memref<4x26x26xf32, #tpu.memory_space<vmem>>, vector<4x26x26xf32>
    tpu.vector_store %arg5[%c0_3, %c0_4, %c0_5], %2 {strides = array<i32>} : memref<4x26x26xf32, #tpu.memory_space<vmem>>, vector<4x26x26xf32>,
    %c0_6 = arith.constant 0 : index
    %c0_7 = arith.constant 0 : index
    %c0_8 = arith.constant 0 : index
    %4 = vector.load %arg1[%c0_6, %c0_7, %c0_8] : memref<4x16x16xf32, #tpu.memory_space<vmem>>, vector<4x16x16xf32>
    %c0_9 = arith.constant 0 : index
    %c5 = arith.constant 5 : index
    %c5_10 = arith.constant 5 : index
    %5 = vector.load %arg4[%c0_9, %c5, %c5_10] : memref<4x26x26xf32, #tpu.memory_space<vmem>>, vector<4x16x16xf32>
    tpu.vector_store %arg4[%c0_9, %c5, %c5_10], %4 {strides = array<i32>} : memref<4x26x26xf32, #tpu.memory_space<vmem>>, vector<4x16x16xf32>,
    %c0_11 = arith.constant 0 : index
    %c0_12 = arith.constant 0 : index
    %c0_13 = arith.constant 0 : index
    %6 = vector.load %arg2[%c0_11, %c0_12, %c0_13] : memref<4x16x16xf32, #tpu.memory_space<vmem>>, vector<4x16x16xf32>
    %c0_14 = arith.constant 0 : index
    %c5_15 = arith.constant 5 : index
    %c5_16 = arith.constant 5 : index
    %7 = vector.load %arg5[%c0_14, %c5_15, %c5_16] : memref<4x26x26xf32, #tpu.memory_space<vmem>>, vector<4x16x16xf32>
    tpu.vector_store %arg5[%c0_14, %c5_15, %c5_16], %6 {strides = array<i32>} : memref<4x26x26xf32, #tpu.memory_space<vmem>>, vector<4x16x16xf32>,
    %c0_17 = arith.constant 0 : index
    %c0_18 = arith.constant 0 : index
    %c0_19 = arith.constant 0 : index
    %8 = vector.load %arg4[%c0_17, %c0_18, %c0_19] : memref<4x26x26xf32, #tpu.memory_space<vmem>>, vector<4x26x26xf32>
    %c0_20 = arith.constant 0 : index
    %c0_21 = arith.constant 0 : index
    %c0_22 = arith.constant 0 : index
    %9 = vector.load %arg5[%c0_20, %c0_21, %c0_22] : memref<4x26x26xf32, #tpu.memory_space<vmem>>, vector<4x26x26xf32>
    %10 = arith.mulf %8, %8 : vector<4x26x26xf32>
    %11 = arith.mulf %9, %9 : vector<4x26x26xf32>
    %12 = arith.mulf %8, %9 : vector<4x26x26xf32>
    %13 = vector.extract_strided_slice %8 {offsets = [0, 0, 0], sizes = [4, 26, 16], strides = [1, 1, 1]} : vector<4x26x26xf32> to vector<4x26x16xf32>
    %cst_23 = arith.constant 7.8346227E-12 : f32
    %14 = vector.broadcast %cst_23 : f32 to vector<4x26x16xf32>
    %15 = arith.mulf %14, %13 : vector<4x26x16xf32>
    %16 = vector.extract_strided_slice %8 {offsets = [0, 0, 1], sizes = [4, 26, 16], strides = [1, 1, 1]} : vector<4x26x26xf32> to vector<4x26x16xf32>
    %cst_24 = arith.constant 6.3484606E-8 : f32
    %17 = vector.broadcast %cst_24 : f32 to vector<4x26x16xf32>
    %18 = arith.mulf %17, %16 : vector<4x26x16xf32>
    %19 = arith.addf %15, %18 : vector<4x26x16xf32>
    %20 = vector.extract_strided_slice %8 {offsets = [0, 0, 2], sizes = [4, 26, 16], strides = [1, 1, 1]} : vector<4x26x26xf32> to vector<4x26x16xf32>
    %cst_25 = arith.constant 6.96193237E-5 : f32
    %21 = vector.broadcast %cst_25 : f32 to vector<4x26x16xf32>
    %22 = arith.mulf %21, %20 : vector<4x26x16xf32>
    %23 = arith.addf %19, %22 : vector<4x26x16xf32>
    %24 = vector.extract_strided_slice %8 {offsets = [0, 0, 3], sizes = [4, 26, 16], strides = [1, 1, 1]} : vector<4x26x26xf32> to vector<4x26x16xf32>
    %cst_26 = arith.constant 0.0103324242 : f32
    %25 = vector.broadcast %cst_26 : f32 to vector<4x26x16xf32>
    %26 = arith.mulf %25, %24 : vector<4x26x16xf32>
    %27 = arith.addf %23, %26 : vector<4x26x16xf32>
    %28 = vector.extract_strided_slice %8 {offsets = [0, 0, 4], sizes = [4, 26, 16], strides = [1, 1, 1]} : vector<4x26x26xf32> to vector<4x26x16xf32>
    %cst_27 = arith.constant 0.207532287 : f32
    %29 = vector.broadcast %cst_27 : f32 to vector<4x26x16xf32>
    %30 = arith.mulf %29, %28 : vector<4x26x16xf32>
    %31 = arith.addf %27, %30 : vector<4x26x16xf32>
    %32 = vector.extract_strided_slice %8 {offsets = [0, 0, 5], sizes = [4, 26, 16], strides = [1, 1, 1]} : vector<4x26x26xf32> to vector<4x26x16xf32>
    %cst_28 = arith.constant 0.5641312 : f32
    %33 = vector.broadcast %cst_28 : f32 to vector<4x26x16xf32>
    %34 = arith.mulf %33, %32 : vector<4x26x16xf32>
    %35 = arith.addf %31, %34 : vector<4x26x16xf32>
    %36 = vector.extract_strided_slice %8 {offsets = [0, 0, 6], sizes = [4, 26, 16], strides = [1, 1, 1]} : vector<4x26x26xf32> to vector<4x26x16xf32>
    %cst_29 = arith.constant 0.207532287 : f32
    %37 = vector.broadcast %cst_29 : f32 to vector<4x26x16xf32>
    %38 = arith.mulf %37, %36 : vector<4x26x16xf32>
    %39 = arith.addf %35, %38 : vector<4x26x16xf32>
    %40 = vector.extract_strided_slice %8 {offsets = [0, 0, 7], sizes = [4, 26, 16], strides = [1, 1, 1]} : vector<4x26x26xf32> to vector<4x26x16xf32>
    %cst_30 = arith.constant 0.0103324242 : f32
    %41 = vector.broadcast %cst_30 : f32 to vector<4x26x16xf32>
    %42 = arith.mulf %41, %40 : vector<4x26x16xf32>
    %43 = arith.addf %39, %42 : vector<4x26x16xf32>
    %44 = vector.extract_strided_slice %8 {offsets = [0, 0, 8], sizes = [4, 26, 16], strides = [1, 1, 1]} : vector<4x26x26xf32> to vector<4x26x16xf32>
    %cst_31 = arith.constant 6.96193237E-5 : f32
    %45 = vector.broadcast %cst_31 : f32 to vector<4x26x16xf32>
    %46 = arith.mulf %45, %44 : vector<4x26x16xf32>
    %47 = arith.addf %43, %46 : vector<4x26x16xf32>
    %48 = vector.extract_strided_slice %8 {offsets = [0, 0, 9], sizes = [4, 26, 16], strides = [1, 1, 1]} : vector<4x26x26xf32> to vector<4x26x16xf32>
    %cst_32 = arith.constant 6.3484606E-8 : f32
    %49 = vector.broadcast %cst_32 : f32 to vector<4x26x16xf32>
    %50 = arith.mulf %49, %48 : vector<4x26x16xf32>
    %51 = arith.addf %47, %50 : vector<4x26x16xf32>
    %52 = vector.extract_strided_slice %8 {offsets = [0, 0, 10], sizes = [4, 26, 16], strides = [1, 1, 1]} : vector<4x26x26xf32> to vector<4x26x16xf32>
    %cst_33 = arith.constant 7.8346227E-12 : f32
    %53 = vector.broadcast %cst_33 : f32 to vector<4x26x16xf32>
    %54 = arith.mulf %53, %52 : vector<4x26x16xf32>
    %55 = arith.addf %51, %54 : vector<4x26x16xf32>
    %56 = vector.extract_strided_slice %55 {offsets = [0, 0, 0], sizes = [4, 16, 16], strides = [1, 1, 1]} : vector<4x26x16xf32> to vector<4x16x16xf32>
    %cst_34 = arith.constant 7.8346227E-12 : f32
    %57 = vector.broadcast %cst_34 : f32 to vector<4x16x16xf32>
    %58 = arith.mulf %57, %56 : vector<4x16x16xf32>
    %59 = vector.extract_strided_slice %55 {offsets = [0, 1, 0], sizes = [4, 16, 16], strides = [1, 1, 1]} : vector<4x26x16xf32> to vector<4x16x16xf32>
    %cst_35 = arith.constant 6.3484606E-8 : f32
    %60 = vector.broadcast %cst_35 : f32 to vector<4x16x16xf32>
    %61 = arith.mulf %60, %59 : vector<4x16x16xf32>
    %62 = arith.addf %58, %61 : vector<4x16x16xf32>
    %63 = vector.extract_strided_slice %55 {offsets = [0, 2, 0], sizes = [4, 16, 16], strides = [1, 1, 1]} : vector<4x26x16xf32> to vector<4x16x16xf32>
    %cst_36 = arith.constant 6.96193237E-5 : f32
    %64 = vector.broadcast %cst_36 : f32 to vector<4x16x16xf32>
    %65 = arith.mulf %64, %63 : vector<4x16x16xf32>
    %66 = arith.addf %62, %65 : vector<4x16x16xf32>
    %67 = vector.extract_strided_slice %55 {offsets = [0, 3, 0], sizes = [4, 16, 16], strides = [1, 1, 1]} : vector<4x26x16xf32> to vector<4x16x16xf32>
    %cst_37 = arith.constant 0.0103324242 : f32
    %68 = vector.broadcast %cst_37 : f32 to vector<4x16x16xf32>
    %69 = arith.mulf %68, %67 : vector<4x16x16xf32>
    %70 = arith.addf %66, %69 : vector<4x16x16xf32>
    %71 = vector.extract_strided_slice %55 {offsets = [0, 4, 0], sizes = [4, 16, 16], strides = [1, 1, 1]} : vector<4x26x16xf32> to vector<4x16x16xf32>
    %cst_38 = arith.constant 0.207532287 : f32
    %72 = vector.broadcast %cst_38 : f32 to vector<4x16x16xf32>
    %73 = arith.mulf %72, %71 : vector<4x16x16xf32>
    %74 = arith.addf %70, %73 : vector<4x16x16xf32>
    %75 = vector.extract_strided_slice %55 {offsets = [0, 5, 0], sizes = [4, 16, 16], strides = [1, 1, 1]} : vector<4x26x16xf32> to vector<4x16x16xf32>
    %cst_39 = arith.constant 0.5641312 : f32
    %76 = vector.broadcast %cst_39 : f32 to vector<4x16x16xf32>
    %77 = arith.mulf %76, %75 : vector<4x16x16xf32>
    %78 = arith.addf %74, %77 : vector<4x16x16xf32>
    %79 = vector.extract_strided_slice %55 {offsets = [0, 6, 0], sizes = [4, 16, 16], strides = [1, 1, 1]} : vector<4x26x16xf32> to vector<4x16x16xf32>
    %cst_40 = arith.constant 0.207532287 : f32
    %80 = vector.broadcast %cst_40 : f32 to vector<4x16x16xf32>
    %81 = arith.mulf %80, %79 : vector<4x16x16xf32>
    %82 = arith.addf %78, %81 : vector<4x16x16xf32>
    %83 = vector.extract_strided_slice %55 {offsets = [0, 7, 0], sizes = [4, 16, 16], strides = [1, 1, 1]} : vector<4x26x16xf32> to vector<4x16x16xf32>
    %cst_41 = arith.constant 0.0103324242 : f32
    %84 = vector.broadcast %cst_41 : f32 to vector<4x16x16xf32>
    %85 = arith.mulf %84, %83 : vector<4x16x16xf32>
    %86 = arith.addf %82, %85 : vector<4x16x16xf32>
    %87 = vector.extract_strided_slice %55 {offsets = [0, 8, 0], sizes = [4, 16, 16], strides = [1, 1, 1]} : vector<4x26x16xf32> to vector<4x16x16xf32>
    %cst_42 = arith.constant 6.96193237E-5 : f32
    %88 = vector.broadcast %cst_42 : f32 to vector<4x16x16xf32>
    %89 = arith.mulf %88, %87 : vector<4x16x16xf32>
    %90 = arith.addf %86, %89 : vector<4x16x16xf32>
    %91 = vector.extract_strided_slice %55 {offsets = [0, 9, 0], sizes = [4, 16, 16], strides = [1, 1, 1]} : vector<4x26x16xf32> to vector<4x16x16xf32>
    %cst_43 = arith.constant 6.3484606E-8 : f32
    %92 = vector.broadcast %cst_43 : f32 to vector<4x16x16xf32>
    %93 = arith.mulf %92, %91 : vector<4x16x16xf32>
    %94 = arith.addf %90, %93 : vector<4x16x16xf32>
    %95 = vector.extract_strided_slice %55 {offsets = [0, 10, 0], sizes = [4, 16, 16], strides = [1, 1, 1]} : vector<4x26x16xf32> to vector<4x16x16xf32>
    %cst_44 = arith.constant 7.8346227E-12 : f32
    %96 = vector.broadcast %cst_44 : f32 to vector<4x16x16xf32>
    %97 = arith.mulf %96, %95 : vector<4x16x16xf32>
    %98 = arith.addf %94, %97 : vector<4x16x16xf32>
    %99 = vector.extract_strided_slice %9 {offsets = [0, 0, 0], sizes = [4, 26, 16], strides = [1, 1, 1]} : vector<4x26x26xf32> to vector<4x26x16xf32>
    %cst_45 = arith.constant 7.8346227E-12 : f32
    %100 = vector.broadcast %cst_45 : f32 to vector<4x26x16xf32>
    %101 = arith.mulf %100, %99 : vector<4x26x16xf32>
    %102 = vector.extract_strided_slice %9 {offsets = [0, 0, 1], sizes = [4, 26, 16], strides = [1, 1, 1]} : vector<4x26x26xf32> to vector<4x26x16xf32>
    %cst_46 = arith.constant 6.3484606E-8 : f32
    %103 = vector.broadcast %cst_46 : f32 to vector<4x26x16xf32>
    %104 = arith.mulf %103, %102 : vector<4x26x16xf32>
    %105 = arith.addf %101, %104 : vector<4x26x16xf32>
    %106 = vector.extract_strided_slice %9 {offsets = [0, 0, 2], sizes = [4, 26, 16], strides = [1, 1, 1]} : vector<4x26x26xf32> to vector<4x26x16xf32>
    %cst_47 = arith.constant 6.96193237E-5 : f32
    %107 = vector.broadcast %cst_47 : f32 to vector<4x26x16xf32>
    %108 = arith.mulf %107, %106 : vector<4x26x16xf32>
    %109 = arith.addf %105, %108 : vector<4x26x16xf32>
    %110 = vector.extract_strided_slice %9 {offsets = [0, 0, 3], sizes = [4, 26, 16], strides = [1, 1, 1]} : vector<4x26x26xf32> to vector<4x26x16xf32>
    %cst_48 = arith.constant 0.0103324242 : f32
    %111 = vector.broadcast %cst_48 : f32 to vector<4x26x16xf32>
    %112 = arith.mulf %111, %110 : vector<4x26x16xf32>
    %113 = arith.addf %109, %112 : vector<4x26x16xf32>
    %114 = vector.extract_strided_slice %9 {offsets = [0, 0, 4], sizes = [4, 26, 16], strides = [1, 1, 1]} : vector<4x26x26xf32> to vector<4x26x16xf32>
    %cst_49 = arith.constant 0.207532287 : f32
    %115 = vector.broadcast %cst_49 : f32 to vector<4x26x16xf32>
    %116 = arith.mulf %115, %114 : vector<4x26x16xf32>
    %117 = arith.addf %113, %116 : vector<4x26x16xf32>
    %118 = vector.extract_strided_slice %9 {offsets = [0, 0, 5], sizes = [4, 26, 16], strides = [1, 1, 1]} : vector<4x26x26xf32> to vector<4x26x16xf32>
    %cst_50 = arith.constant 0.5641312 : f32
    %119 = vector.broadcast %cst_50 : f32 to vector<4x26x16xf32>
    %120 = arith.mulf %119, %118 : vector<4x26x16xf32>
    %121 = arith.addf %117, %120 : vector<4x26x16xf32>
    %122 = vector.extract_strided_slice %9 {offsets = [0, 0, 6], sizes = [4, 26, 16], strides = [1, 1, 1]} : vector<4x26x26xf32> to vector<4x26x16xf32>
    %cst_51 = arith.constant 0.207532287 : f32
    %123 = vector.broadcast %cst_51 : f32 to vector<4x26x16xf32>
    %124 = arith.mulf %123, %122 : vector<4x26x16xf32>
    %125 = arith.addf %121, %124 : vector<4x26x16xf32>
    %126 = vector.extract_strided_slice %9 {offsets = [0, 0, 7], sizes = [4, 26, 16], strides = [1, 1, 1]} : vector<4x26x26xf32> to vector<4x26x16xf32>
    %cst_52 = arith.constant 0.0103324242 : f32
    %127 = vector.broadcast %cst_52 : f32 to vector<4x26x16xf32>
    %128 = arith.mulf %127, %126 : vector<4x26x16xf32>
    %129 = arith.addf %125, %128 : vector<4x26x16xf32>
    %130 = vector.extract_strided_slice %9 {offsets = [0, 0, 8], sizes = [4, 26, 16], strides = [1, 1, 1]} : vector<4x26x26xf32> to vector<4x26x16xf32>
    %cst_53 = arith.constant 6.96193237E-5 : f32
    %131 = vector.broadcast %cst_53 : f32 to vector<4x26x16xf32>
    %132 = arith.mulf %131, %130 : vector<4x26x16xf32>
    %133 = arith.addf %129, %132 : vector<4x26x16xf32>
    %134 = vector.extract_strided_slice %9 {offsets = [0, 0, 9], sizes = [4, 26, 16], strides = [1, 1, 1]} : vector<4x26x26xf32> to vector<4x26x16xf32>
    %cst_54 = arith.constant 6.3484606E-8 : f32
    %135 = vector.broadcast %cst_54 : f32 to vector<4x26x16xf32>
    %136 = arith.mulf %135, %134 : vector<4x26x16xf32>
    %137 = arith.addf %133, %136 : vector<4x26x16xf32>
    %138 = vector.extract_strided_slice %9 {offsets = [0, 0, 10], sizes = [4, 26, 16], strides = [1, 1, 1]} : vector<4x26x26xf32> to vector<4x26x16xf32>
    %cst_55 = arith.constant 7.8346227E-12 : f32
    %139 = vector.broadcast %cst_55 : f32 to vector<4x26x16xf32>
    %140 = arith.mulf %139, %138 : vector<4x26x16xf32>
    %141 = arith.addf %137, %140 : vector<4x26x16xf32>
    %142 = vector.extract_strided_slice %141 {offsets = [0, 0, 0], sizes = [4, 16, 16], strides = [1, 1, 1]} : vector<4x26x16xf32> to vector<4x16x16xf32>
    %cst_56 = arith.constant 7.8346227E-12 : f32
    %143 = vector.broadcast %cst_56 : f32 to vector<4x16x16xf32>
    %144 = arith.mulf %143, %142 : vector<4x16x16xf32>
    %145 = vector.extract_strided_slice %141 {offsets = [0, 1, 0], sizes = [4, 16, 16], strides = [1, 1, 1]} : vector<4x26x16xf32> to vector<4x16x16xf32>
    %cst_57 = arith.constant 6.3484606E-8 : f32
    %146 = vector.broadcast %cst_57 : f32 to vector<4x16x16xf32>
    %147 = arith.mulf %146, %145 : vector<4x16x16xf32>
    %148 = arith.addf %144, %147 : vector<4x16x16xf32>
    %149 = vector.extract_strided_slice %141 {offsets = [0, 2, 0], sizes = [4, 16, 16], strides = [1, 1, 1]} : vector<4x26x16xf32> to vector<4x16x16xf32>
    %cst_58 = arith.constant 6.96193237E-5 : f32
    %150 = vector.broadcast %cst_58 : f32 to vector<4x16x16xf32>
    %151 = arith.mulf %150, %149 : vector<4x16x16xf32>
    %152 = arith.addf %148, %151 : vector<4x16x16xf32>
    %153 = vector.extract_strided_slice %141 {offsets = [0, 3, 0], sizes = [4, 16, 16], strides = [1, 1, 1]} : vector<4x26x16xf32> to vector<4x16x16xf32>
    %cst_59 = arith.constant 0.0103324242 : f32
    %154 = vector.broadcast %cst_59 : f32 to vector<4x16x16xf32>
    %155 = arith.mulf %154, %153 : vector<4x16x16xf32>
    %156 = arith.addf %152, %155 : vector<4x16x16xf32>
    %157 = vector.extract_strided_slice %141 {offsets = [0, 4, 0], sizes = [4, 16, 16], strides = [1, 1, 1]} : vector<4x26x16xf32> to vector<4x16x16xf32>
    %cst_60 = arith.constant 0.207532287 : f32
    %158 = vector.broadcast %cst_60 : f32 to vector<4x16x16xf32>
    %159 = arith.mulf %158, %157 : vector<4x16x16xf32>
    %160 = arith.addf %156, %159 : vector<4x16x16xf32>
    %161 = vector.extract_strided_slice %141 {offsets = [0, 5, 0], sizes = [4, 16, 16], strides = [1, 1, 1]} : vector<4x26x16xf32> to vector<4x16x16xf32>
    %cst_61 = arith.constant 0.5641312 : f32
    %162 = vector.broadcast %cst_61 : f32 to vector<4x16x16xf32>
    %163 = arith.mulf %162, %161 : vector<4x16x16xf32>
    %164 = arith.addf %160, %163 : vector<4x16x16xf32>
    %165 = vector.extract_strided_slice %141 {offsets = [0, 6, 0], sizes = [4, 16, 16], strides = [1, 1, 1]} : vector<4x26x16xf32> to vector<4x16x16xf32>
    %cst_62 = arith.constant 0.207532287 : f32
    %166 = vector.broadcast %cst_62 : f32 to vector<4x16x16xf32>
    %167 = arith.mulf %166, %165 : vector<4x16x16xf32>
    %168 = arith.addf %164, %167 : vector<4x16x16xf32>
    %169 = vector.extract_strided_slice %141 {offsets = [0, 7, 0], sizes = [4, 16, 16], strides = [1, 1, 1]} : vector<4x26x16xf32> to vector<4x16x16xf32>
    %cst_63 = arith.constant 0.0103324242 : f32
    %170 = vector.broadcast %cst_63 : f32 to vector<4x16x16xf32>
    %171 = arith.mulf %170, %169 : vector<4x16x16xf32>
    %172 = arith.addf %168, %171 : vector<4x16x16xf32>
    %173 = vector.extract_strided_slice %141 {offsets = [0, 8, 0], sizes = [4, 16, 16], strides = [1, 1, 1]} : vector<4x26x16xf32> to vector<4x16x16xf32>
    %cst_64 = arith.constant 6.96193237E-5 : f32
    %174 = vector.broadcast %cst_64 : f32 to vector<4x16x16xf32>
    %175 = arith.mulf %174, %173 : vector<4x16x16xf32>
    %176 = arith.addf %172, %175 : vector<4x16x16xf32>
    %177 = vector.extract_strided_slice %141 {offsets = [0, 9, 0], sizes = [4, 16, 16], strides = [1, 1, 1]} : vector<4x26x16xf32> to vector<4x16x16xf32>
    %cst_65 = arith.constant 6.3484606E-8 : f32
    %178 = vector.broadcast %cst_65 : f32 to vector<4x16x16xf32>
    %179 = arith.mulf %178, %177 : vector<4x16x16xf32>
    %180 = arith.addf %176, %179 : vector<4x16x16xf32>
    %181 = vector.extract_strided_slice %141 {offsets = [0, 10, 0], sizes = [4, 16, 16], strides = [1, 1, 1]} : vector<4x26x16xf32> to vector<4x16x16xf32>
    %cst_66 = arith.constant 7.8346227E-12 : f32
    %182 = vector.broadcast %cst_66 : f32 to vector<4x16x16xf32>
    %183 = arith.mulf %182, %181 : vector<4x16x16xf32>
    %184 = arith.addf %180, %183 : vector<4x16x16xf32>
    %185 = vector.extract_strided_slice %10 {offsets = [0, 0, 0], sizes = [4, 26, 16], strides = [1, 1, 1]} : vector<4x26x26xf32> to vector<4x26x16xf32>
    %cst_67 = arith.constant 7.8346227E-12 : f32
    %186 = vector.broadcast %cst_67 : f32 to vector<4x26x16xf32>
    %187 = arith.mulf %186, %185 : vector<4x26x16xf32>
    %188 = vector.extract_strided_slice %10 {offsets = [0, 0, 1], sizes = [4, 26, 16], strides = [1, 1, 1]} : vector<4x26x26xf32> to vector<4x26x16xf32>
    %cst_68 = arith.constant 6.3484606E-8 : f32
    %189 = vector.broadcast %cst_68 : f32 to vector<4x26x16xf32>
    %190 = arith.mulf %189, %188 : vector<4x26x16xf32>
    %191 = arith.addf %187, %190 : vector<4x26x16xf32>
    %192 = vector.extract_strided_slice %10 {offsets = [0, 0, 2], sizes = [4, 26, 16], strides = [1, 1, 1]} : vector<4x26x26xf32> to vector<4x26x16xf32>
    %cst_69 = arith.constant 6.96193237E-5 : f32
    %193 = vector.broadcast %cst_69 : f32 to vector<4x26x16xf32>
    %194 = arith.mulf %193, %192 : vector<4x26x16xf32>
    %195 = arith.addf %191, %194 : vector<4x26x16xf32>
    %196 = vector.extract_strided_slice %10 {offsets = [0, 0, 3], sizes = [4, 26, 16], strides = [1, 1, 1]} : vector<4x26x26xf32> to vector<4x26x16xf32>
    %cst_70 = arith.constant 0.0103324242 : f32
    %197 = vector.broadcast %cst_70 : f32 to vector<4x26x16xf32>
    %198 = arith.mulf %197, %196 : vector<4x26x16xf32>
    %199 = arith.addf %195, %198 : vector<4x26x16xf32>
    %200 = vector.extract_strided_slice %10 {offsets = [0, 0, 4], sizes = [4, 26, 16], strides = [1, 1, 1]} : vector<4x26x26xf32> to vector<4x26x16xf32>
    %cst_71 = arith.constant 0.207532287 : f32
    %201 = vector.broadcast %cst_71 : f32 to vector<4x26x16xf32>
    %202 = arith.mulf %201, %200 : vector<4x26x16xf32>
    %203 = arith.addf %199, %202 : vector<4x26x16xf32>
    %204 = vector.extract_strided_slice %10 {offsets = [0, 0, 5], sizes = [4, 26, 16], strides = [1, 1, 1]} : vector<4x26x26xf32> to vector<4x26x16xf32>
    %cst_72 = arith.constant 0.5641312 : f32
    %205 = vector.broadcast %cst_72 : f32 to vector<4x26x16xf32>
    %206 = arith.mulf %205, %204 : vector<4x26x16xf32>
    %207 = arith.addf %203, %206 : vector<4x26x16xf32>
    %208 = vector.extract_strided_slice %10 {offsets = [0, 0, 6], sizes = [4, 26, 16], strides = [1, 1, 1]} : vector<4x26x26xf32> to vector<4x26x16xf32>
    %cst_73 = arith.constant 0.207532287 : f32
    %209 = vector.broadcast %cst_73 : f32 to vector<4x26x16xf32>
    %210 = arith.mulf %209, %208 : vector<4x26x16xf32>
    %211 = arith.addf %207, %210 : vector<4x26x16xf32>
    %212 = vector.extract_strided_slice %10 {offsets = [0, 0, 7], sizes = [4, 26, 16], strides = [1, 1, 1]} : vector<4x26x26xf32> to vector<4x26x16xf32>
    %cst_74 = arith.constant 0.0103324242 : f32
    %213 = vector.broadcast %cst_74 : f32 to vector<4x26x16xf32>
    %214 = arith.mulf %213, %212 : vector<4x26x16xf32>
    %215 = arith.addf %211, %214 : vector<4x26x16xf32>
    %216 = vector.extract_strided_slice %10 {offsets = [0, 0, 8], sizes = [4, 26, 16], strides = [1, 1, 1]} : vector<4x26x26xf32> to vector<4x26x16xf32>
    %cst_75 = arith.constant 6.96193237E-5 : f32
    %217 = vector.broadcast %cst_75 : f32 to vector<4x26x16xf32>
    %218 = arith.mulf %217, %216 : vector<4x26x16xf32>
    %219 = arith.addf %215, %218 : vector<4x26x16xf32>
    %220 = vector.extract_strided_slice %10 {offsets = [0, 0, 9], sizes = [4, 26, 16], strides = [1, 1, 1]} : vector<4x26x26xf32> to vector<4x26x16xf32>
    %cst_76 = arith.constant 6.3484606E-8 : f32
    %221 = vector.broadcast %cst_76 : f32 to vector<4x26x16xf32>
    %222 = arith.mulf %221, %220 : vector<4x26x16xf32>
    %223 = arith.addf %219, %222 : vector<4x26x16xf32>
    %224 = vector.extract_strided_slice %10 {offsets = [0, 0, 10], sizes = [4, 26, 16], strides = [1, 1, 1]} : vector<4x26x26xf32> to vector<4x26x16xf32>
    %cst_77 = arith.constant 7.8346227E-12 : f32
    %225 = vector.broadcast %cst_77 : f32 to vector<4x26x16xf32>
    %226 = arith.mulf %225, %224 : vector<4x26x16xf32>
    %227 = arith.addf %223, %226 : vector<4x26x16xf32>
    %228 = vector.extract_strided_slice %227 {offsets = [0, 0, 0], sizes = [4, 16, 16], strides = [1, 1, 1]} : vector<4x26x16xf32> to vector<4x16x16xf32>
    %cst_78 = arith.constant 7.8346227E-12 : f32
    %229 = vector.broadcast %cst_78 : f32 to vector<4x16x16xf32>
    %230 = arith.mulf %229, %228 : vector<4x16x16xf32>
    %231 = vector.extract_strided_slice %227 {offsets = [0, 1, 0], sizes = [4, 16, 16], strides = [1, 1, 1]} : vector<4x26x16xf32> to vector<4x16x16xf32>
    %cst_79 = arith.constant 6.3484606E-8 : f32
    %232 = vector.broadcast %cst_79 : f32 to vector<4x16x16xf32>
    %233 = arith.mulf %232, %231 : vector<4x16x16xf32>
    %234 = arith.addf %230, %233 : vector<4x16x16xf32>
    %235 = vector.extract_strided_slice %227 {offsets = [0, 2, 0], sizes = [4, 16, 16], strides = [1, 1, 1]} : vector<4x26x16xf32> to vector<4x16x16xf32>
    %cst_80 = arith.constant 6.96193237E-5 : f32
    %236 = vector.broadcast %cst_80 : f32 to vector<4x16x16xf32>
    %237 = arith.mulf %236, %235 : vector<4x16x16xf32>
    %238 = arith.addf %234, %237 : vector<4x16x16xf32>
    %239 = vector.extract_strided_slice %227 {offsets = [0, 3, 0], sizes = [4, 16, 16], strides = [1, 1, 1]} : vector<4x26x16xf32> to vector<4x16x16xf32>
    %cst_81 = arith.constant 0.0103324242 : f32
    %240 = vector.broadcast %cst_81 : f32 to vector<4x16x16xf32>
    %241 = arith.mulf %240, %239 : vector<4x16x16xf32>
    %242 = arith.addf %238, %241 : vector<4x16x16xf32>
    %243 = vector.extract_strided_slice %227 {offsets = [0, 4, 0], sizes = [4, 16, 16], strides = [1, 1, 1]} : vector<4x26x16xf32> to vector<4x16x16xf32>
    %cst_82 = arith.constant 0.207532287 : f32
    %244 = vector.broadcast %cst_82 : f32 to vector<4x16x16xf32>
    %245 = arith.mulf %244, %243 : vector<4x16x16xf32>
    %246 = arith.addf %242, %245 : vector<4x16x16xf32>
    %247 = vector.extract_strided_slice %227 {offsets = [0, 5, 0], sizes = [4, 16, 16], strides = [1, 1, 1]} : vector<4x26x16xf32> to vector<4x16x16xf32>
    %cst_83 = arith.constant 0.5641312 : f32
    %248 = vector.broadcast %cst_83 : f32 to vector<4x16x16xf32>
    %249 = arith.mulf %248, %247 : vector<4x16x16xf32>
    %250 = arith.addf %246, %249 : vector<4x16x16xf32>
    %251 = vector.extract_strided_slice %227 {offsets = [0, 6, 0], sizes = [4, 16, 16], strides = [1, 1, 1]} : vector<4x26x16xf32> to vector<4x16x16xf32>
    %cst_84 = arith.constant 0.207532287 : f32
    %252 = vector.broadcast %cst_84 : f32 to vector<4x16x16xf32>
    %253 = arith.mulf %252, %251 : vector<4x16x16xf32>
    %254 = arith.addf %250, %253 : vector<4x16x16xf32>
    %255 = vector.extract_strided_slice %227 {offsets = [0, 7, 0], sizes = [4, 16, 16], strides = [1, 1, 1]} : vector<4x26x16xf32> to vector<4x16x16xf32>
    %cst_85 = arith.constant 0.0103324242 : f32
    %256 = vector.broadcast %cst_85 : f32 to vector<4x16x16xf32>
    %257 = arith.mulf %256, %255 : vector<4x16x16xf32>
    %258 = arith.addf %254, %257 : vector<4x16x16xf32>
    %259 = vector.extract_strided_slice %227 {offsets = [0, 8, 0], sizes = [4, 16, 16], strides = [1, 1, 1]} : vector<4x26x16xf32> to vector<4x16x16xf32>
    %cst_86 = arith.constant 6.96193237E-5 : f32
    %260 = vector.broadcast %cst_86 : f32 to vector<4x16x16xf32>
    %261 = arith.mulf %260, %259 : vector<4x16x16xf32>
    %262 = arith.addf %258, %261 : vector<4x16x16xf32>
    %263 = vector.extract_strided_slice %227 {offsets = [0, 9, 0], sizes = [4, 16, 16], strides = [1, 1, 1]} : vector<4x26x16xf32> to vector<4x16x16xf32>
    %cst_87 = arith.constant 6.3484606E-8 : f32
    %264 = vector.broadcast %cst_87 : f32 to vector<4x16x16xf32>
    %265 = arith.mulf %264, %263 : vector<4x16x16xf32>
    %266 = arith.addf %262, %265 : vector<4x16x16xf32>
    %267 = vector.extract_strided_slice %227 {offsets = [0, 10, 0], sizes = [4, 16, 16], strides = [1, 1, 1]} : vector<4x26x16xf32> to vector<4x16x16xf32>
    %cst_88 = arith.constant 7.8346227E-12 : f32
    %268 = vector.broadcast %cst_88 : f32 to vector<4x16x16xf32>
    %269 = arith.mulf %268, %267 : vector<4x16x16xf32>
    %270 = arith.addf %266, %269 : vector<4x16x16xf32>
    %271 = vector.extract_strided_slice %11 {offsets = [0, 0, 0], sizes = [4, 26, 16], strides = [1, 1, 1]} : vector<4x26x26xf32> to vector<4x26x16xf32>
    %cst_89 = arith.constant 7.8346227E-12 : f32
    %272 = vector.broadcast %cst_89 : f32 to vector<4x26x16xf32>
    %273 = arith.mulf %272, %271 : vector<4x26x16xf32>
    %274 = vector.extract_strided_slice %11 {offsets = [0, 0, 1], sizes = [4, 26, 16], strides = [1, 1, 1]} : vector<4x26x26xf32> to vector<4x26x16xf32>
    %cst_90 = arith.constant 6.3484606E-8 : f32
    %275 = vector.broadcast %cst_90 : f32 to vector<4x26x16xf32>
    %276 = arith.mulf %275, %274 : vector<4x26x16xf32>
    %277 = arith.addf %273, %276 : vector<4x26x16xf32>
    %278 = vector.extract_strided_slice %11 {offsets = [0, 0, 2], sizes = [4, 26, 16], strides = [1, 1, 1]} : vector<4x26x26xf32> to vector<4x26x16xf32>
    %cst_91 = arith.constant 6.96193237E-5 : f32
    %279 = vector.broadcast %cst_91 : f32 to vector<4x26x16xf32>
    %280 = arith.mulf %279, %278 : vector<4x26x16xf32>
    %281 = arith.addf %277, %280 : vector<4x26x16xf32>
    %282 = vector.extract_strided_slice %11 {offsets = [0, 0, 3], sizes = [4, 26, 16], strides = [1, 1, 1]} : vector<4x26x26xf32> to vector<4x26x16xf32>
    %cst_92 = arith.constant 0.0103324242 : f32
    %283 = vector.broadcast %cst_92 : f32 to vector<4x26x16xf32>
    %284 = arith.mulf %283, %282 : vector<4x26x16xf32>
    %285 = arith.addf %281, %284 : vector<4x26x16xf32>
    %286 = vector.extract_strided_slice %11 {offsets = [0, 0, 4], sizes = [4, 26, 16], strides = [1, 1, 1]} : vector<4x26x26xf32> to vector<4x26x16xf32>
    %cst_93 = arith.constant 0.207532287 : f32
    %287 = vector.broadcast %cst_93 : f32 to vector<4x26x16xf32>
    %288 = arith.mulf %287, %286 : vector<4x26x16xf32>
    %289 = arith.addf %285, %288 : vector<4x26x16xf32>
    %290 = vector.extract_strided_slice %11 {offsets = [0, 0, 5], sizes = [4, 26, 16], strides = [1, 1, 1]} : vector<4x26x26xf32> to vector<4x26x16xf32>
    %cst_94 = arith.constant 0.5641312 : f32
    %291 = vector.broadcast %cst_94 : f32 to vector<4x26x16xf32>
    %292 = arith.mulf %291, %290 : vector<4x26x16xf32>
    %293 = arith.addf %289, %292 : vector<4x26x16xf32>
    %294 = vector.extract_strided_slice %11 {offsets = [0, 0, 6], sizes = [4, 26, 16], strides = [1, 1, 1]} : vector<4x26x26xf32> to vector<4x26x16xf32>
    %cst_95 = arith.constant 0.207532287 : f32
    %295 = vector.broadcast %cst_95 : f32 to vector<4x26x16xf32>
    %296 = arith.mulf %295, %294 : vector<4x26x16xf32>
    %297 = arith.addf %293, %296 : vector<4x26x16xf32>
    %298 = vector.extract_strided_slice %11 {offsets = [0, 0, 7], sizes = [4, 26, 16], strides = [1, 1, 1]} : vector<4x26x26xf32> to vector<4x26x16xf32>
    %cst_96 = arith.constant 0.0103324242 : f32
    %299 = vector.broadcast %cst_96 : f32 to vector<4x26x16xf32>
    %300 = arith.mulf %299, %298 : vector<4x26x16xf32>
    %301 = arith.addf %297, %300 : vector<4x26x16xf32>
    %302 = vector.extract_strided_slice %11 {offsets = [0, 0, 8], sizes = [4, 26, 16], strides = [1, 1, 1]} : vector<4x26x26xf32> to vector<4x26x16xf32>
    %cst_97 = arith.constant 6.96193237E-5 : f32
    %303 = vector.broadcast %cst_97 : f32 to vector<4x26x16xf32>
    %304 = arith.mulf %303, %302 : vector<4x26x16xf32>
    %305 = arith.addf %301, %304 : vector<4x26x16xf32>
    %306 = vector.extract_strided_slice %11 {offsets = [0, 0, 9], sizes = [4, 26, 16], strides = [1, 1, 1]} : vector<4x26x26xf32> to vector<4x26x16xf32>
    %cst_98 = arith.constant 6.3484606E-8 : f32
    %307 = vector.broadcast %cst_98 : f32 to vector<4x26x16xf32>
    %308 = arith.mulf %307, %306 : vector<4x26x16xf32>
    %309 = arith.addf %305, %308 : vector<4x26x16xf32>
    %310 = vector.extract_strided_slice %11 {offsets = [0, 0, 10], sizes = [4, 26, 16], strides = [1, 1, 1]} : vector<4x26x26xf32> to vector<4x26x16xf32>
    %cst_99 = arith.constant 7.8346227E-12 : f32
    %311 = vector.broadcast %cst_99 : f32 to vector<4x26x16xf32>
    %312 = arith.mulf %311, %310 : vector<4x26x16xf32>
    %313 = arith.addf %309, %312 : vector<4x26x16xf32>
    %314 = vector.extract_strided_slice %313 {offsets = [0, 0, 0], sizes = [4, 16, 16], strides = [1, 1, 1]} : vector<4x26x16xf32> to vector<4x16x16xf32>
    %cst_100 = arith.constant 7.8346227E-12 : f32
    %315 = vector.broadcast %cst_100 : f32 to vector<4x16x16xf32>
    %316 = arith.mulf %315, %314 : vector<4x16x16xf32>
    %317 = vector.extract_strided_slice %313 {offsets = [0, 1, 0], sizes = [4, 16, 16], strides = [1, 1, 1]} : vector<4x26x16xf32> to vector<4x16x16xf32>
    %cst_101 = arith.constant 6.3484606E-8 : f32
    %318 = vector.broadcast %cst_101 : f32 to vector<4x16x16xf32>
    %319 = arith.mulf %318, %317 : vector<4x16x16xf32>
    %320 = arith.addf %316, %319 : vector<4x16x16xf32>
    %321 = vector.extract_strided_slice %313 {offsets = [0, 2, 0], sizes = [4, 16, 16], strides = [1, 1, 1]} : vector<4x26x16xf32> to vector<4x16x16xf32>
    %cst_102 = arith.constant 6.96193237E-5 : f32
    %322 = vector.broadcast %cst_102 : f32 to vector<4x16x16xf32>
    %323 = arith.mulf %322, %321 : vector<4x16x16xf32>
    %324 = arith.addf %320, %323 : vector<4x16x16xf32>
    %325 = vector.extract_strided_slice %313 {offsets = [0, 3, 0], sizes = [4, 16, 16], strides = [1, 1, 1]} : vector<4x26x16xf32> to vector<4x16x16xf32>
    %cst_103 = arith.constant 0.0103324242 : f32
    %326 = vector.broadcast %cst_103 : f32 to vector<4x16x16xf32>
    %327 = arith.mulf %326, %325 : vector<4x16x16xf32>
    %328 = arith.addf %324, %327 : vector<4x16x16xf32>
    %329 = vector.extract_strided_slice %313 {offsets = [0, 4, 0], sizes = [4, 16, 16], strides = [1, 1, 1]} : vector<4x26x16xf32> to vector<4x16x16xf32>
    %cst_104 = arith.constant 0.207532287 : f32
    %330 = vector.broadcast %cst_104 : f32 to vector<4x16x16xf32>
    %331 = arith.mulf %330, %329 : vector<4x16x16xf32>
    %332 = arith.addf %328, %331 : vector<4x16x16xf32>
    %333 = vector.extract_strided_slice %313 {offsets = [0, 5, 0], sizes = [4, 16, 16], strides = [1, 1, 1]} : vector<4x26x16xf32> to vector<4x16x16xf32>
    %cst_105 = arith.constant 0.5641312 : f32
    %334 = vector.broadcast %cst_105 : f32 to vector<4x16x16xf32>
    %335 = arith.mulf %334, %333 : vector<4x16x16xf32>
    %336 = arith.addf %332, %335 : vector<4x16x16xf32>
    %337 = vector.extract_strided_slice %313 {offsets = [0, 6, 0], sizes = [4, 16, 16], strides = [1, 1, 1]} : vector<4x26x16xf32> to vector<4x16x16xf32>
    %cst_106 = arith.constant 0.207532287 : f32
    %338 = vector.broadcast %cst_106 : f32 to vector<4x16x16xf32>
    %339 = arith.mulf %338, %337 : vector<4x16x16xf32>
    %340 = arith.addf %336, %339 : vector<4x16x16xf32>
    %341 = vector.extract_strided_slice %313 {offsets = [0, 7, 0], sizes = [4, 16, 16], strides = [1, 1, 1]} : vector<4x26x16xf32> to vector<4x16x16xf32>
    %cst_107 = arith.constant 0.0103324242 : f32
    %342 = vector.broadcast %cst_107 : f32 to vector<4x16x16xf32>
    %343 = arith.mulf %342, %341 : vector<4x16x16xf32>
    %344 = arith.addf %340, %343 : vector<4x16x16xf32>
    %345 = vector.extract_strided_slice %313 {offsets = [0, 8, 0], sizes = [4, 16, 16], strides = [1, 1, 1]} : vector<4x26x16xf32> to vector<4x16x16xf32>
    %cst_108 = arith.constant 6.96193237E-5 : f32
    %346 = vector.broadcast %cst_108 : f32 to vector<4x16x16xf32>
    %347 = arith.mulf %346, %345 : vector<4x16x16xf32>
    %348 = arith.addf %344, %347 : vector<4x16x16xf32>
    %349 = vector.extract_strided_slice %313 {offsets = [0, 9, 0], sizes = [4, 16, 16], strides = [1, 1, 1]} : vector<4x26x16xf32> to vector<4x16x16xf32>
    %cst_109 = arith.constant 6.3484606E-8 : f32
    %350 = vector.broadcast %cst_109 : f32 to vector<4x16x16xf32>
    %351 = arith.mulf %350, %349 : vector<4x16x16xf32>
    %352 = arith.addf %348, %351 : vector<4x16x16xf32>
    %353 = vector.extract_strided_slice %313 {offsets = [0, 10, 0], sizes = [4, 16, 16], strides = [1, 1, 1]} : vector<4x26x16xf32> to vector<4x16x16xf32>
    %cst_110 = arith.constant 7.8346227E-12 : f32
    %354 = vector.broadcast %cst_110 : f32 to vector<4x16x16xf32>
    %355 = arith.mulf %354, %353 : vector<4x16x16xf32>
    %356 = arith.addf %352, %355 : vector<4x16x16xf32>
    %357 = vector.extract_strided_slice %12 {offsets = [0, 0, 0], sizes = [4, 26, 16], strides = [1, 1, 1]} : vector<4x26x26xf32> to vector<4x26x16xf32>
    %cst_111 = arith.constant 7.8346227E-12 : f32
    %358 = vector.broadcast %cst_111 : f32 to vector<4x26x16xf32>
    %359 = arith.mulf %358, %357 : vector<4x26x16xf32>
    %360 = vector.extract_strided_slice %12 {offsets = [0, 0, 1], sizes = [4, 26, 16], strides = [1, 1, 1]} : vector<4x26x26xf32> to vector<4x26x16xf32>
    %cst_112 = arith.constant 6.3484606E-8 : f32
    %361 = vector.broadcast %cst_112 : f32 to vector<4x26x16xf32>
    %362 = arith.mulf %361, %360 : vector<4x26x16xf32>
    %363 = arith.addf %359, %362 : vector<4x26x16xf32>
    %364 = vector.extract_strided_slice %12 {offsets = [0, 0, 2], sizes = [4, 26, 16], strides = [1, 1, 1]} : vector<4x26x26xf32> to vector<4x26x16xf32>
    %cst_113 = arith.constant 6.96193237E-5 : f32
    %365 = vector.broadcast %cst_113 : f32 to vector<4x26x16xf32>
    %366 = arith.mulf %365, %364 : vector<4x26x16xf32>
    %367 = arith.addf %363, %366 : vector<4x26x16xf32>
    %368 = vector.extract_strided_slice %12 {offsets = [0, 0, 3], sizes = [4, 26, 16], strides = [1, 1, 1]} : vector<4x26x26xf32> to vector<4x26x16xf32>
    %cst_114 = arith.constant 0.0103324242 : f32
    %369 = vector.broadcast %cst_114 : f32 to vector<4x26x16xf32>
    %370 = arith.mulf %369, %368 : vector<4x26x16xf32>
    %371 = arith.addf %367, %370 : vector<4x26x16xf32>
    %372 = vector.extract_strided_slice %12 {offsets = [0, 0, 4], sizes = [4, 26, 16], strides = [1, 1, 1]} : vector<4x26x26xf32> to vector<4x26x16xf32>
    %cst_115 = arith.constant 0.207532287 : f32
    %373 = vector.broadcast %cst_115 : f32 to vector<4x26x16xf32>
    %374 = arith.mulf %373, %372 : vector<4x26x16xf32>
    %375 = arith.addf %371, %374 : vector<4x26x16xf32>
    %376 = vector.extract_strided_slice %12 {offsets = [0, 0, 5], sizes = [4, 26, 16], strides = [1, 1, 1]} : vector<4x26x26xf32> to vector<4x26x16xf32>
    %cst_116 = arith.constant 0.5641312 : f32
    %377 = vector.broadcast %cst_116 : f32 to vector<4x26x16xf32>
    %378 = arith.mulf %377, %376 : vector<4x26x16xf32>
    %379 = arith.addf %375, %378 : vector<4x26x16xf32>
    %380 = vector.extract_strided_slice %12 {offsets = [0, 0, 6], sizes = [4, 26, 16], strides = [1, 1, 1]} : vector<4x26x26xf32> to vector<4x26x16xf32>
    %cst_117 = arith.constant 0.207532287 : f32
    %381 = vector.broadcast %cst_117 : f32 to vector<4x26x16xf32>
    %382 = arith.mulf %381, %380 : vector<4x26x16xf32>
    %383 = arith.addf %379, %382 : vector<4x26x16xf32>
    %384 = vector.extract_strided_slice %12 {offsets = [0, 0, 7], sizes = [4, 26, 16], strides = [1, 1, 1]} : vector<4x26x26xf32> to vector<4x26x16xf32>
    %cst_118 = arith.constant 0.0103324242 : f32
    %385 = vector.broadcast %cst_118 : f32 to vector<4x26x16xf32>
    %386 = arith.mulf %385, %384 : vector<4x26x16xf32>
    %387 = arith.addf %383, %386 : vector<4x26x16xf32>
    %388 = vector.extract_strided_slice %12 {offsets = [0, 0, 8], sizes = [4, 26, 16], strides = [1, 1, 1]} : vector<4x26x26xf32> to vector<4x26x16xf32>
    %cst_119 = arith.constant 6.96193237E-5 : f32
    %389 = vector.broadcast %cst_119 : f32 to vector<4x26x16xf32>
    %390 = arith.mulf %389, %388 : vector<4x26x16xf32>
    %391 = arith.addf %387, %390 : vector<4x26x16xf32>
    %392 = vector.extract_strided_slice %12 {offsets = [0, 0, 9], sizes = [4, 26, 16], strides = [1, 1, 1]} : vector<4x26x26xf32> to vector<4x26x16xf32>
    %cst_120 = arith.constant 6.3484606E-8 : f32
    %393 = vector.broadcast %cst_120 : f32 to vector<4x26x16xf32>
    %394 = arith.mulf %393, %392 : vector<4x26x16xf32>
    %395 = arith.addf %391, %394 : vector<4x26x16xf32>
    %396 = vector.extract_strided_slice %12 {offsets = [0, 0, 10], sizes = [4, 26, 16], strides = [1, 1, 1]} : vector<4x26x26xf32> to vector<4x26x16xf32>
    %cst_121 = arith.constant 7.8346227E-12 : f32
    %397 = vector.broadcast %cst_121 : f32 to vector<4x26x16xf32>
    %398 = arith.mulf %397, %396 : vector<4x26x16xf32>
    %399 = arith.addf %395, %398 : vector<4x26x16xf32>
    %400 = vector.extract_strided_slice %399 {offsets = [0, 0, 0], sizes = [4, 16, 16], strides = [1, 1, 1]} : vector<4x26x16xf32> to vector<4x16x16xf32>
    %cst_122 = arith.constant 7.8346227E-12 : f32
    %401 = vector.broadcast %cst_122 : f32 to vector<4x16x16xf32>
    %402 = arith.mulf %401, %400 : vector<4x16x16xf32>
    %403 = vector.extract_strided_slice %399 {offsets = [0, 1, 0], sizes = [4, 16, 16], strides = [1, 1, 1]} : vector<4x26x16xf32> to vector<4x16x16xf32>
    %cst_123 = arith.constant 6.3484606E-8 : f32
    %404 = vector.broadcast %cst_123 : f32 to vector<4x16x16xf32>
    %405 = arith.mulf %404, %403 : vector<4x16x16xf32>
    %406 = arith.addf %402, %405 : vector<4x16x16xf32>
    %407 = vector.extract_strided_slice %399 {offsets = [0, 2, 0], sizes = [4, 16, 16], strides = [1, 1, 1]} : vector<4x26x16xf32> to vector<4x16x16xf32>
    %cst_124 = arith.constant 6.96193237E-5 : f32
    %408 = vector.broadcast %cst_124 : f32 to vector<4x16x16xf32>
    %409 = arith.mulf %408, %407 : vector<4x16x16xf32>
    %410 = arith.addf %406, %409 : vector<4x16x16xf32>
    %411 = vector.extract_strided_slice %399 {offsets = [0, 3, 0], sizes = [4, 16, 16], strides = [1, 1, 1]} : vector<4x26x16xf32> to vector<4x16x16xf32>
    %cst_125 = arith.constant 0.0103324242 : f32
    %412 = vector.broadcast %cst_125 : f32 to vector<4x16x16xf32>
    %413 = arith.mulf %412, %411 : vector<4x16x16xf32>
    %414 = arith.addf %410, %413 : vector<4x16x16xf32>
    %415 = vector.extract_strided_slice %399 {offsets = [0, 4, 0], sizes = [4, 16, 16], strides = [1, 1, 1]} : vector<4x26x16xf32> to vector<4x16x16xf32>
    %cst_126 = arith.constant 0.207532287 : f32
    %416 = vector.broadcast %cst_126 : f32 to vector<4x16x16xf32>
    %417 = arith.mulf %416, %415 : vector<4x16x16xf32>
    %418 = arith.addf %414, %417 : vector<4x16x16xf32>
    %419 = vector.extract_strided_slice %399 {offsets = [0, 5, 0], sizes = [4, 16, 16], strides = [1, 1, 1]} : vector<4x26x16xf32> to vector<4x16x16xf32>
    %cst_127 = arith.constant 0.5641312 : f32
    %420 = vector.broadcast %cst_127 : f32 to vector<4x16x16xf32>
    %421 = arith.mulf %420, %419 : vector<4x16x16xf32>
    %422 = arith.addf %418, %421 : vector<4x16x16xf32>
    %423 = vector.extract_strided_slice %399 {offsets = [0, 6, 0], sizes = [4, 16, 16], strides = [1, 1, 1]} : vector<4x26x16xf32> to vector<4x16x16xf32>
    %cst_128 = arith.constant 0.207532287 : f32
    %424 = vector.broadcast %cst_128 : f32 to vector<4x16x16xf32>
    %425 = arith.mulf %424, %423 : vector<4x16x16xf32>
    %426 = arith.addf %422, %425 : vector<4x16x16xf32>
    %427 = vector.extract_strided_slice %399 {offsets = [0, 7, 0], sizes = [4, 16, 16], strides = [1, 1, 1]} : vector<4x26x16xf32> to vector<4x16x16xf32>
    %cst_129 = arith.constant 0.0103324242 : f32
    %428 = vector.broadcast %cst_129 : f32 to vector<4x16x16xf32>
    %429 = arith.mulf %428, %427 : vector<4x16x16xf32>
    %430 = arith.addf %426, %429 : vector<4x16x16xf32>
    %431 = vector.extract_strided_slice %399 {offsets = [0, 8, 0], sizes = [4, 16, 16], strides = [1, 1, 1]} : vector<4x26x16xf32> to vector<4x16x16xf32>
    %cst_130 = arith.constant 6.96193237E-5 : f32
    %432 = vector.broadcast %cst_130 : f32 to vector<4x16x16xf32>
    %433 = arith.mulf %432, %431 : vector<4x16x16xf32>
    %434 = arith.addf %430, %433 : vector<4x16x16xf32>
    %435 = vector.extract_strided_slice %399 {offsets = [0, 9, 0], sizes = [4, 16, 16], strides = [1, 1, 1]} : vector<4x26x16xf32> to vector<4x16x16xf32>
    %cst_131 = arith.constant 6.3484606E-8 : f32
    %436 = vector.broadcast %cst_131 : f32 to vector<4x16x16xf32>
    %437 = arith.mulf %436, %435 : vector<4x16x16xf32>
    %438 = arith.addf %434, %437 : vector<4x16x16xf32>
    %439 = vector.extract_strided_slice %399 {offsets = [0, 10, 0], sizes = [4, 16, 16], strides = [1, 1, 1]} : vector<4x26x16xf32> to vector<4x16x16xf32>
    %cst_132 = arith.constant 7.8346227E-12 : f32
    %440 = vector.broadcast %cst_132 : f32 to vector<4x16x16xf32>
    %441 = arith.mulf %440, %439 : vector<4x16x16xf32>
    %442 = arith.addf %438, %441 : vector<4x16x16xf32>
    %443 = arith.mulf %98, %98 : vector<4x16x16xf32>
    %444 = arith.mulf %184, %184 : vector<4x16x16xf32>
    %445 = arith.mulf %98, %184 : vector<4x16x16xf32>
    %446 = arith.subf %270, %443 : vector<4x16x16xf32>
    %447 = arith.subf %356, %444 : vector<4x16x16xf32>
    %448 = arith.subf %442, %445 : vector<4x16x16xf32>
    %cst_133 = arith.constant 2.000000e+00 : f32
    %449 = vector.broadcast %cst_133 : f32 to vector<4x16x16xf32>
    %450 = arith.mulf %449, %445 : vector<4x16x16xf32>
    %cst_134 = arith.constant 9.99999974E-5 : f32
    %451 = vector.broadcast %cst_134 : f32 to vector<4x16x16xf32>
    %452 = arith.addf %450, %451 : vector<4x16x16xf32>
    %cst_135 = arith.constant 2.000000e+00 : f32
    %453 = vector.broadcast %cst_135 : f32 to vector<4x16x16xf32>
    %454 = arith.mulf %453, %448 : vector<4x16x16xf32>
    %cst_136 = arith.constant 8.99999984E-4 : f32
    %455 = vector.broadcast %cst_136 : f32 to vector<4x16x16xf32>
    %456 = arith.addf %454, %455 : vector<4x16x16xf32>
    %457 = arith.mulf %452, %456 : vector<4x16x16xf32>
    %458 = arith.addf %443, %444 : vector<4x16x16xf32>
    %cst_137 = arith.constant 9.99999974E-5 : f32
    %459 = vector.broadcast %cst_137 : f32 to vector<4x16x16xf32>
    %460 = arith.addf %458, %459 : vector<4x16x16xf32>
    %461 = arith.addf %446, %447 : vector<4x16x16xf32>
    %cst_138 = arith.constant 8.99999984E-4 : f32
    %462 = vector.broadcast %cst_138 : f32 to vector<4x16x16xf32>
    %463 = arith.addf %461, %462 : vector<4x16x16xf32>
    %464 = arith.mulf %460, %463 : vector<4x16x16xf32>
    %465 = arith.divf %457, %464 : vector<4x16x16xf32>
    %cst_139 = arith.constant dense<0.000000e+00> : vector<4x16xf32>
    %466 = vector.multi_reduction <add>, %465, %cst_139 [2] : vector<4x16x16xf32> to vector<4x16xf32>
    %467 = vector.shape_cast %466 : vector<4x16xf32> to vector<4x16x1xf32>
    %cst_140 = arith.constant dense<0.000000e+00> : vector<4x1xf32>
    %468 = vector.multi_reduction <add>, %467, %cst_140 [1] : vector<4x16x1xf32> to vector<4x1xf32>
    %469 = vector.shape_cast %468 : vector<4x1xf32> to vector<4x1x1xf32>
    %470 = vector.shape_cast %469 : vector<4x1x1xf32> to vector<4x1x1xf32>
    %471 = vector.broadcast %470 : vector<4x1x1xf32> to vector<4x1x128xf32>
    %c0_141 = arith.constant 0 : index
    %c0_142 = arith.constant 0 : index
    %c0_143 = arith.constant 0 : index
    %472 = vector.load %arg3[%c0_141, %c0_142, %c0_143] : memref<4x1x128xf32, #tpu.memory_space<vmem>>, vector<4x1x128xf32>
    tpu.vector_store %arg3[%c0_141, %c0_142, %c0_143], %471 {strides = array<i32>} : memref<4x1x128xf32, #tpu.memory_space<vmem>>, vector<4x1x128xf32>,
    return
  }
  func.func @transform_0(%arg0: i32) -> (i32, i32, i32) {
    %c0_i32 = arith.constant 0 : i32
    %c0_i32_0 = arith.constant 0 : i32
    %c0_i32_1 = arith.constant 0 : i32
    return %arg0, %c0_i32, %c0_i32_0 : i32, i32, i32
  }
  func.func @transform_1(%arg0: i32) -> (i32, i32, i32) {
    %c0_i32 = arith.constant 0 : i32
    %c0_i32_0 = arith.constant 0 : i32
    %c0_i32_1 = arith.constant 0 : i32
    return %arg0, %c0_i32, %c0_i32_0 : i32, i32, i32
  }
  func.func @transform_2(%arg0: i32) -> (i32, i32, i32) {
    %c0_i32 = arith.constant 0 : i32
    %c0_i32_0 = arith.constant 0 : i32
    %c0_i32_1 = arith.constant 0 : i32
    return %arg0, %c0_i32, %c0_i32_0 : i32, i32, i32
  }
}

</mosaic_0001>

<llo_original>
// kernel: tpu_custom_call.1
$region0: #{tpu_custom_call.1}
  #allocation0 [shape = 'u32[]', space=smem, size = 0x4, offset = 0x4, fixed_abs, tag = 'smem constant byte address 0x4 - core index']
  #allocation1 [shape = 'u32[72,128]{1,0:T(1,128)}', space=vmem, size = 0x9000, scoped, tag = 'internal scratch']
  #allocation2 [shape = 'f32[4,26,26]{2,1,0:T(8,128)}', space=vmem, size = 0x10000, scoped, tag = 'scratch operand']
  #allocation3 [shape = 'f32[4,26,26]{2,1,0:T(8,128)}', space=vmem, size = 0x10000, scoped, tag = 'scratch operand']
  %s0 = inlined_call_operand.hbm [shape: f32[8,16,16], index: 0, kind: input, shape index: {}]
  %s1 = inlined_call_operand.hbm [shape: f32[8,16,16], index: 1, kind: input, shape index: {}]
  %s2 = inlined_call_operand.hbm [shape: f32[8,1,128], index: 2, kind: output, shape index: {}]
  %s3 = sld [smem:[#allocation0]]
  $region49: #{tpu_custom_call.1} parent=0
    _
  %s5 = ssub.s32 1, %s3
  %s6 = scalar_select 0, %s5, %s3
  $region1: #{tpu_custom_call.1} parent=0
    #allocation4 [shape = 'u8[65536]{0}', space=vmem, size = 0x10000, scoped, tag = 'input window, operand 0']
    #allocation5 [shape = 's32[2]{0}', space=sflag, size = 0x8, scoped, tag = 'scoped memory for tpu_custom_call.1']
    #allocation6 [shape = 's32[2]{0}', space=sflag, size = 0x8, scoped, tag = 'scoped memory for tpu_custom_call.1']
    #allocation7 [shape = 'u8[65536]{0}', space=vmem, size = 0x10000, scoped, tag = 'input window, operand 1']
    #allocation8 [shape = 's32[2]{0}', space=sflag, size = 0x8, scoped, tag = 'scoped memory for tpu_custom_call.1']
    #allocation9 [shape = 'u8[4096]{0}', space=vmem, size = 0x1000, scoped, tag = 'output window, operand 0']
    %7 = vsyncpa [#allocation5], 0
    %s8 = scalar_lea.sflag [#allocation5], 1
    %9 = vsyncpa %s8, 0
    %10 = vsyncpa [#allocation8], 0
    %s11 = scalar_lea.sflag [#allocation8], 1
    %12 = vsyncpa %s11, 0
    %13 = vsyncpa [#allocation6], 0
    %s14 = scalar_lea.sflag [#allocation6], 1
    %15 = vsyncpa %s14, 0
    loop: start=0, step=1, limit=4
    $region2: #{tpu_custom_call.1} parent=1 // loop_pre_header
      _
    $region3: #{tpu_custom_call.1} parent=1 // loop_header
      %s17 = sphi 0, %s21
      %p18 = scmp.ge.s32.totalorder %s17, 4
      %s27 = sphi 0, %s29
      %s30 = sphi 0, %s27
      %s31 = sphi 0, %s30
      %s47 = sphi 0, %s31
      %s53 = sphi 0, %s55
      %s56 = sphi 0, %s53
      %s57 = sphi 0, %s56
      %s73 = sphi 0, %s57
      %s79 = sphi 0, %s81
      %s82 = sphi 0, %s79
      %s83 = sphi 0, %s82
      %s99 = sphi 0, %s83
    $region4: #{tpu_custom_call.1} parent=1 // loop_header_branch
      %20 = sbr.rel (%p18) target = $region8
    $region5: #{tpu_custom_call.1} parent=1 // loop_body
      %s22 = ssub.s32 %s17, 1
      %s23 = ssub.s32 %s17, 2
      %s24 = sadd.s32 %s17, 1
      %s25 = ssub.s32 %s17, %s24
      %p26 = scmp.eq.s32.totalorder %s25, 0
      %s28 = sadd.s32 %s27, 1
      %s29 = scalar_select %p26, %s27, %s28
      %p32 = pneg %p26
      %p33 = scmp.eq.s32.totalorder %s17, 1
      %p34 = por %p32, %p33
      %p35 = scmp.ne.s32.totalorder %s27, %s30
      %p36 = scmp.eq.s32.totalorder %s17, 0
      %p37 = por %p35, %p36
      %p38 = scmp.ne.s32.totalorder %s27, %s30
      %p39 = scmp.eq.s32.totalorder %s22, 1
      %p40 = por %p38, %p39
      %p41 = scmp.ne.s32.totalorder %s30, %s31
      %p42 = scmp.eq.s32.totalorder %s22, 0
      %p43 = por %p41, %p42
      %p44 = scmp.ne.s32.totalorder %s30, %s31
      %p45 = scmp.eq.s32.totalorder %s23, 1
      %p46 = por %p44, %p45
      %p48 = scmp.ne.s32.totalorder %s31, %s47
      %p49 = scmp.eq.s32.totalorder %s23, 0
      %p50 = por %p48, %p49
      %s51 = ssub.s32 %s17, %s24
      %p52 = scmp.eq.s32.totalorder %s51, 0
      %s54 = sadd.s32 %s53, 1
      %s55 = scalar_select %p52, %s53, %s54
      %p58 = pneg %p52
      %p59 = scmp.eq.s32.totalorder %s17, 1
      %p60 = por %p58, %p59
      %p61 = scmp.ne.s32.totalorder %s53, %s56
      %p62 = scmp.eq.s32.totalorder %s17, 0
      %p63 = por %p61, %p62
      %p64 = scmp.ne.s32.totalorder %s53, %s56
      %p65 = scmp.eq.s32.totalorder %s22, 1
      %p66 = por %p64, %p65
      %p67 = scmp.ne.s32.totalorder %s56, %s57
      %p68 = scmp.eq.s32.totalorder %s22, 0
      %p69 = por %p67, %p68
      %p70 = scmp.ne.s32.totalorder %s56, %s57
      %p71 = scmp.eq.s32.totalorder %s23, 1
      %p72 = por %p70, %p71
      %p74 = scmp.ne.s32.totalorder %s57, %s73
      %p75 = scmp.eq.s32.totalorder %s23, 0
      %p76 = por %p74, %p75
      %s77 = ssub.s32 %s17, %s24
      %p78 = scmp.eq.s32.totalorder %s77, 0
      %s80 = sadd.s32 %s79, 1
      %s81 = scalar_select %p78, %s79, %s80
      %p84 = pneg %p78
      %p85 = scmp.eq.s32.totalorder %s17, 1
      %p86 = por %p84, %p85
      %p87 = scmp.ne.s32.totalorder %s79, %s82
      %p88 = scmp.eq.s32.totalorder %s17, 0
      %p89 = por %p87, %p88
      %p90 = scmp.ne.s32.totalorder %s79, %s82
      %p91 = scmp.eq.s32.totalorder %s22, 1
      %p92 = por %p90, %p91
      %p93 = scmp.ne.s32.totalorder %s82, %s83
      %p94 = scmp.eq.s32.totalorder %s22, 0
      %p95 = por %p93, %p94
      %p96 = scmp.ne.s32.totalorder %s82, %s83
      %p97 = scmp.eq.s32.totalorder %s23, 1
      %p98 = por %p96, %p97
      %p100 = scmp.ne.s32.totalorder %s83, %s99
      %p101 = scmp.eq.s32.totalorder %s23, 0
      %p102 = por %p100, %p101
      %p103 = scmp.le.s32.totalorder 1, %s17
      %p104 = scmp.lt.s32.totalorder %s17, 3
      %p105 = pnand %p103, %p104
      %p106 = pneg %p105
      // Predicated region
      $region9: #{tpu_custom_call.1} parent=5 // pred_check
        _
      $region10: #{tpu_custom_call.1} parent=5 // pred_check_branch
        %108 = sbr.rel (%p105) target = $region12
      $region11: #{tpu_custom_call.1} parent=5 // pred_region
        %s109 = ssub.s32 %s17, 1
      $region12: #{tpu_custom_call.1} parent=5 // pred_fallthru
        _
      %p110 = scmp.lt.s32.totalorder %s17, 2
      // Predicated region
      $region13: #{tpu_custom_call.1} parent=5 // pred_check
        %p111 = pneg %p110
      $region14: #{tpu_custom_call.1} parent=5 // pred_check_branch
        %113 = sbr.rel (%p111) target = $region16
      $region15: #{tpu_custom_call.1} parent=5 // pred_region
        // Predicated region
        $region17: #{tpu_custom_call.1} parent=15 // pred_check
          %p114 = pneg %p37
        $region18: #{tpu_custom_call.1} parent=15 // pred_check_branch
          %116 = sbr.rel (%p114) target = $region20
        $region19: #{tpu_custom_call.1} parent=15 // pred_region
          %s117 = sand.u32 %s27, 1
          %s118 = scalar_lea.sflag [#allocation5], %s117
          %s119 = sand.u32 %s27, 1
          %s120 = smul.addr %s119, 64
          %s121 = scalar_lea.vmem [#allocation4], %s120
          %s122 = smul.u32 4, %s17
          %124 = vsyncadd %s118, 0
          %s125 = smul.addr %s122, 2
          %s126 = smul.addr %s125, 8
          %s127 = scalar_lea.hbm %s0, %s126
          %s128 = sshll.u32 %s127, 4
          %s129 = int_to_ptr.hbm [resolvable:$true] %s128
          %s130 = sshll.u32 %s121, 4
          %s131 = int_to_ptr.vmem [resolvable:$true] %s130
          %136 = dma.hbm_to_vmem [thread:$0]  %s129, 1024, %s131, %s118, 128, 128, 8
        $region20: #{tpu_custom_call.1} parent=15 // pred_fallthru
          _
        // Predicated region
        $region21: #{tpu_custom_call.1} parent=15 // pred_check
          %p137 = pneg %p63
        $region22: #{tpu_custom_call.1} parent=15 // pred_check_branch
          %139 = sbr.rel (%p137) target = $region24
        $region23: #{tpu_custom_call.1} parent=15 // pred_region
          %s140 = sand.u32 %s53, 1
          %s141 = scalar_lea.sflag [#allocation8], %s140
          %s142 = sand.u32 %s53, 1
          %s143 = smul.addr %s142, 64
          %s144 = scalar_lea.vmem [#allocation7], %s143
          %s145 = smul.u32 4, %s17
          %147 = vsyncadd %s141, 0
          %s148 = smul.addr %s145, 2
          %s149 = smul.addr %s148, 8
          %s150 = scalar_lea.hbm %s1, %s149
          %s151 = sshll.u32 %s150, 4
          %s152 = int_to_ptr.hbm [resolvable:$true] %s151
          %s153 = sshll.u32 %s144, 4
          %s154 = int_to_ptr.vmem [resolvable:$true] %s153
          %159 = dma.hbm_to_vmem [thread:$0]  %s152, 1024, %s154, %s141, 128, 128, 8
        $region24: #{tpu_custom_call.1} parent=15 // pred_fallthru
          _
      $region16: #{tpu_custom_call.1} parent=5 // pred_fallthru
        _
      %p160 = scmp.le.s32.totalorder 1, %s17
      %p161 = scmp.lt.s32.totalorder %s17, 3
      %p162 = pnand %p160, %p161
      %p163 = pneg %p162
      // Predicated region
      $region25: #{tpu_custom_call.1} parent=5 // pred_check
        _
      $region26: #{tpu_custom_call.1} parent=5 // pred_check_branch
        %165 = sbr.rel (%p162) target = $region28
      $region27: #{tpu_custom_call.1} parent=5 // pred_region
        %s166 = ssub.s32 %s17, 1
        %s167 = sand.u32 %s30, 1
        %s168 = scalar_lea.sflag [#allocation5], %s167
        %s169 = sand.u32 %s30, 1
        %s170 = smul.addr %s169, 64
        %s171 = scalar_lea.vmem [#allocation4], %s170
        // Predicated region
        $region29: #{tpu_custom_call.1} parent=27 // pred_check
          %p172 = pneg %p43
        $region30: #{tpu_custom_call.1} parent=27 // pred_check_branch
          %174 = sbr.rel (%p172) target = $region32
        $region31: #{tpu_custom_call.1} parent=27 // pred_region
          %176 = dma.done %s168, 1024
        $region32: #{tpu_custom_call.1} parent=27 // pred_fallthru
          _
        %s177 = sand.u32 %s56, 1
        %s178 = scalar_lea.sflag [#allocation8], %s177
        %s179 = sand.u32 %s56, 1
        %s180 = smul.addr %s179, 64
        %s181 = scalar_lea.vmem [#allocation7], %s180
        // Predicated region
        $region33: #{tpu_custom_call.1} parent=27 // pred_check
          %p182 = pneg %p69
        $region34: #{tpu_custom_call.1} parent=27 // pred_check_branch
          %184 = sbr.rel (%p182) target = $region36
        $region35: #{tpu_custom_call.1} parent=27 // pred_region
          %186 = dma.done %s178, 1024
        $region36: #{tpu_custom_call.1} parent=27 // pred_fallthru
          _
        %s187 = sand.u32 %s30, 1
        %s188 = scalar_lea.sflag [#allocation5], %s187
        %s189 = sand.u32 %s30, 1
        %s190 = smul.addr %s189, 64
        %s191 = scalar_lea.vmem [#allocation4], %s190
        %p192 = pneg %p43
        %p193 = pneg %p40
        %s194 = sand.u32 %s56, 1
        %s195 = scalar_lea.sflag [#allocation8], %s194
        %s196 = sand.u32 %s56, 1
        %s197 = smul.addr %s196, 64
        %s198 = scalar_lea.vmem [#allocation7], %s197
        %p199 = pneg %p69
        %p200 = pneg %p66
        %p201 = pneg %p95
        %p202 = pneg %p92
        %s203 = sand.u32 %s82, 1
        %s204 = scalar_lea.sflag [#allocation6], %s203
        %s205 = sand.u32 %s82, 1
        %s206 = smul.addr %s205, 4
        %s207 = scalar_lea.vmem [#allocation9], %s206
        %s208 = smul.u32 4, %s22
        %s209 = smul.u32 4, %s22
        %s210 = smul.u32 4, %s22
        %vm211 = vcmask 211968
        %212 = vst.msk [vmem:[#allocation2] sm:$0xff] %vm211, 0.0
        %213 = vst.msk [vmem:[#allocation2 + $0x8] sm:$0xff] %vm211, 0.0
        %214 = vst.msk [vmem:[#allocation2 + $0x10] sm:$0xff] %vm211, 0.0
        %vm215 = vcmask 205824
        %216 = vst.msk [vmem:[#allocation2 + $0x18] sm:$0x3] %vm215, 0.0
        %217 = vst.msk [vmem:[#allocation2 + $0x20] sm:$0xff] %vm211, 0.0
        %218 = vst.msk [vmem:[#allocation2 + $0x28] sm:$0xff] %vm211, 0.0
        %219 = vst.msk [vmem:[#allocation2 + $0x30] sm:$0xff] %vm211, 0.0
        %220 = vst.msk [vmem:[#allocation2 + $0x38] sm:$0x3] %vm215, 0.0
        %221 = vst.msk [vmem:[#allocation2 + $0x40] sm:$0xff] %vm211, 0.0
        %222 = vst.msk [vmem:[#allocation2 + $0x48] sm:$0xff] %vm211, 0.0
        %223 = vst.msk [vmem:[#allocation2 + $0x50] sm:$0xff] %vm211, 0.0
        %224 = vst.msk [vmem:[#allocation2 + $0x58] sm:$0x3] %vm215, 0.0
        %225 = vst.msk [vmem:[#allocation2 + $0x60] sm:$0xff] %vm211, 0.0
        %226 = vst.msk [vmem:[#allocation2 + $0x68] sm:$0xff] %vm211, 0.0
        %227 = vst.msk [vmem:[#allocation2 + $0x70] sm:$0xff] %vm211, 0.0
        %228 = vst.msk [vmem:[#allocation2 + $0x78] sm:$0x3] %vm215, 0.0
        %229 = vst.msk [vmem:[#allocation3] sm:$0xff] %vm211, 0.0
        %230 = vst.msk [vmem:[#allocation3 + $0x8] sm:$0xff] %vm211, 0.0
        %231 = vst.msk [vmem:[#allocation3 + $0x10] sm:$0xff] %vm211, 0.0
        %232 = vst.msk [vmem:[#allocation3 + $0x18] sm:$0x3] %vm215, 0.0
        %233 = vst.msk [vmem:[#allocation3 + $0x20] sm:$0xff] %vm211, 0.0
        %234 = vst.msk [vmem:[#allocation3 + $0x28] sm:$0xff] %vm211, 0.0
        %235 = vst.msk [vmem:[#allocation3 + $0x30] sm:$0xff] %vm211, 0.0
        %236 = vst.msk [vmem:[#allocation3 + $0x38] sm:$0x3] %vm215, 0.0
        %237 = vst.msk [vmem:[#allocation3 + $0x40] sm:$0xff] %vm211, 0.0
        %238 = vst.msk [vmem:[#allocation3 + $0x48] sm:$0xff] %vm211, 0.0
        %239 = vst.msk [vmem:[#allocation3 + $0x50] sm:$0xff] %vm211, 0.0
        %240 = vst.msk [vmem:[#allocation3 + $0x58] sm:$0x3] %vm215, 0.0
        %241 = vst.msk [vmem:[#allocation3 + $0x60] sm:$0xff] %vm211, 0.0
        %242 = vst.msk [vmem:[#allocation3 + $0x68] sm:$0xff] %vm211, 0.0
        %243 = vst.msk [vmem:[#allocation3 + $0x70] sm:$0xff] %vm211, 0.0
        %244 = vst.msk [vmem:[#allocation3 + $0x78] sm:$0x3] %vm215, 0.0
        %v245 = vld [vmem:[%s171] sm:$0xff]
        %v246 = vld [vmem:[%s171 + $0x8] sm:$0xff]
        %v247 = vld [vmem:[%s171 + $0x10] sm:$0xff]
        %v248 = vld [vmem:[%s171 + $0x18] sm:$0xff]
        %v249 = vld [vmem:[%s171 + $0x20] sm:$0xff]
        %v250 = vld [vmem:[%s171 + $0x28] sm:$0xff]
        %v251 = vld [vmem:[%s171 + $0x30] sm:$0xff]
        %v252 = vld [vmem:[%s171 + $0x38] sm:$0xff]
        %261 = vrot.lane.b32.xlu0 %v245, 5
        %v262 = vpop.permute.xlu0 %261
        %263 = vrot.lane.b32.xlu0 %v246, 5
        %v264 = vpop.permute.xlu0 %263
        %265 = vrot.lane.b32.xlu0 %v247, 5
        %v266 = vpop.permute.xlu0 %265
        %267 = vrot.lane.b32.xlu0 %v248, 5
        %v268 = vpop.permute.xlu0 %267
        %269 = vrot.lane.b32.xlu0 %v249, 5
        %v270 = vpop.permute.xlu0 %269
        %271 = vrot.lane.b32.xlu0 %v250, 5
        %v272 = vpop.permute.xlu0 %271
        %273 = vrot.lane.b32.xlu0 %v251, 5
        %v274 = vpop.permute.xlu0 %273
        %275 = vrot.lane.b32.xlu0 %v252, 5
        %v276 = vpop.permute.xlu0 %275
        %vm285 = vcmask 171048
        %286 = vst.msk [vmem:[#allocation2 + $0x5] sm:$0xff] %vm285, %v262
        %287 = vst.msk [vmem:[#allocation2 + $0xd] sm:$0xff] %vm285, %v264
        %288 = vst.msk [vmem:[#allocation2 + $0x25] sm:$0xff] %vm285, %v266
        %289 = vst.msk [vmem:[#allocation2 + $0x2d] sm:$0xff] %vm285, %v268
        %290 = vst.msk [vmem:[#allocation2 + $0x45] sm:$0xff] %vm285, %v270
        %291 = vst.msk [vmem:[#allocation2 + $0x4d] sm:$0xff] %vm285, %v272
        %292 = vst.msk [vmem:[#allocation2 + $0x65] sm:$0xff] %vm285, %v274
        %293 = vst.msk [vmem:[#allocation2 + $0x6d] sm:$0xff] %vm285, %v276
        %v294 = vld [vmem:[%s181] sm:$0xff]
        %v295 = vld [vmem:[%s181 + $0x8] sm:$0xff]
        %v296 = vld [vmem:[%s181 + $0x10] sm:$0xff]
        %v297 = vld [vmem:[%s181 + $0x18] sm:$0xff]
        %v298 = vld [vmem:[%s181 + $0x20] sm:$0xff]
        %v299 = vld [vmem:[%s181 + $0x28] sm:$0xff]
        %v300 = vld [vmem:[%s181 + $0x30] sm:$0xff]
        %v301 = vld [vmem:[%s181 + $0x38] sm:$0xff]
        %310 = vrot.lane.b32.xlu0 %v294, 5
        %v311 = vpop.permute.xlu0 %310
        %312 = vrot.lane.b32.xlu0 %v295, 5
        %v313 = vpop.permute.xlu0 %312
        %314 = vrot.lane.b32.xlu0 %v296, 5
        %v315 = vpop.permute.xlu0 %314
        %316 = vrot.lane.b32.xlu0 %v297, 5
        %v317 = vpop.permute.xlu0 %316
        %318 = vrot.lane.b32.xlu0 %v298, 5
        %v319 = vpop.permute.xlu0 %318
        %320 = vrot.lane.b32.xlu0 %v299, 5
        %v321 = vpop.permute.xlu0 %320
        %322 = vrot.lane.b32.xlu0 %v300, 5
        %v323 = vpop.permute.xlu0 %322
        %324 = vrot.lane.b32.xlu0 %v301, 5
        %v325 = vpop.permute.xlu0 %324
        %334 = vst.msk [vmem:[#allocation3 + $0x5] sm:$0xff] %vm285, %v311
        %335 = vst.msk [vmem:[#allocation3 + $0xd] sm:$0xff] %vm285, %v313
        %336 = vst.msk [vmem:[#allocation3 + $0x25] sm:$0xff] %vm285, %v315
        %337 = vst.msk [vmem:[#allocation3 + $0x2d] sm:$0xff] %vm285, %v317
        %338 = vst.msk [vmem:[#allocation3 + $0x45] sm:$0xff] %vm285, %v319
        %339 = vst.msk [vmem:[#allocation3 + $0x4d] sm:$0xff] %vm285, %v321
        %340 = vst.msk [vmem:[#allocation3 + $0x65] sm:$0xff] %vm285, %v323
        %341 = vst.msk [vmem:[#allocation3 + $0x6d] sm:$0xff] %vm285, %v325
        %v342 = vld [vmem:[#allocation2] sm:$0xff]
        %v343 = vld [vmem:[#allocation2 + $0x8] sm:$0xff]
        %v344 = vld [vmem:[#allocation2 + $0x10] sm:$0xff]
        %v345 = vld [vmem:[#allocation2 + $0x18] sm:$0x3]
        %v346 = vld [vmem:[#allocation2 + $0x20] sm:$0xff]
        %v347 = vld [vmem:[#allocation2 + $0x28] sm:$0xff]
        %v348 = vld [vmem:[#allocation2 + $0x30] sm:$0xff]
        %v349 = vld [vmem:[#allocation2 + $0x38] sm:$0x3]
        %v350 = vld [vmem:[#allocation2 + $0x40] sm:$0xff]
        %v351 = vld [vmem:[#allocation2 + $0x48] sm:$0xff]
        %v352 = vld [vmem:[#allocation2 + $0x50] sm:$0xff]
        %v353 = vld [vmem:[#allocation2 + $0x58] sm:$0x3]
        %v354 = vld [vmem:[#allocation2 + $0x60] sm:$0xff]
        %v355 = vld [vmem:[#allocation2 + $0x68] sm:$0xff]
        %v356 = vld [vmem:[#allocation2 + $0x70] sm:$0xff]
        %v357 = vld [vmem:[#allocation2 + $0x78] sm:$0x3]
        %v358 = vld [vmem:[#allocation3] sm:$0xff]
        %v359 = vld [vmem:[#allocation3 + $0x8] sm:$0xff]
        %v360 = vld [vmem:[#allocation3 + $0x10] sm:$0xff]
        %v361 = vld [vmem:[#allocation3 + $0x18] sm:$0x3]
        %v362 = vld [vmem:[#allocation3 + $0x20] sm:$0xff]
        %v363 = vld [vmem:[#allocation3 + $0x28] sm:$0xff]
        %v364 = vld [vmem:[#allocation3 + $0x30] sm:$0xff]
        %v365 = vld [vmem:[#allocation3 + $0x38] sm:$0x3]
        %v366 = vld [vmem:[#allocation3 + $0x40] sm:$0xff]
        %v367 = vld [vmem:[#allocation3 + $0x48] sm:$0xff]
        %v368 = vld [vmem:[#allocation3 + $0x50] sm:$0xff]
        %v369 = vld [vmem:[#allocation3 + $0x58] sm:$0x3]
        %v370 = vld [vmem:[#allocation3 + $0x60] sm:$0xff]
        %v371 = vld [vmem:[#allocation3 + $0x68] sm:$0xff]
        %v372 = vld [vmem:[#allocation3 + $0x70] sm:$0xff]
        %v373 = vld [vmem:[#allocation3 + $0x78] sm:$0x3]
        %v374 = vmul.f32 %v342, %v342
        %v375 = vmul.f32 %v343, %v343
        %v376 = vmul.f32 %v344, %v344
        %v377 = vmul.f32 %v345, %v345
        %v378 = vmul.f32 %v346, %v346
        %v379 = vmul.f32 %v347, %v347
        %v380 = vmul.f32 %v348, %v348
        %v381 = vmul.f32 %v349, %v349
        %v382 = vmul.f32 %v350, %v350
        %v383 = vmul.f32 %v351, %v351
        %v384 = vmul.f32 %v352, %v352
        %v385 = vmul.f32 %v353, %v353
        %v386 = vmul.f32 %v354, %v354
        %v387 = vmul.f32 %v355, %v355
        %v388 = vmul.f32 %v356, %v356
        %v389 = vmul.f32 %v357, %v357
        %v390 = vmul.f32 %v358, %v358
        %v391 = vmul.f32 %v359, %v359
        %v392 = vmul.f32 %v360, %v360
        %v393 = vmul.f32 %v361, %v361
        %v394 = vmul.f32 %v362, %v362
        %v395 = vmul.f32 %v363, %v363
        %v396 = vmul.f32 %v364, %v364
        %v397 = vmul.f32 %v365, %v365
        %v398 = vmul.f32 %v366, %v366
        %v399 = vmul.f32 %v367, %v367
        %v400 = vmul.f32 %v368, %v368
        %v401 = vmul.f32 %v369, %v369
        %v402 = vmul.f32 %v370, %v370
        %v403 = vmul.f32 %v371, %v371
        %v404 = vmul.f32 %v372, %v372
        %v405 = vmul.f32 %v373, %v373
        %v406 = vmul.f32 %v342, %v358
        %v407 = vmul.f32 %v343, %v359
        %v408 = vmul.f32 %v344, %v360
        %v409 = vmul.f32 %v345, %v361
        %v410 = vmul.f32 %v346, %v362
        %v411 = vmul.f32 %v347, %v363
        %v412 = vmul.f32 %v348, %v364
        %v413 = vmul.f32 %v349, %v365
        %v414 = vmul.f32 %v350, %v366
        %v415 = vmul.f32 %v351, %v367
        %v416 = vmul.f32 %v352, %v368
        %v417 = vmul.f32 %v353, %v369
        %v418 = vmul.f32 %v354, %v370
        %v419 = vmul.f32 %v355, %v371
        %v420 = vmul.f32 %v356, %v372
        %v421 = vmul.f32 %v357, %v373
        %v422 = vmul.f32 %v342, 7.834623e-12
        %v423 = vmul.f32 %v343, 7.834623e-12
        %v424 = vmul.f32 %v344, 7.834623e-12
        %v425 = vmul.f32 %v345, 7.834623e-12
        %v426 = vmul.f32 %v346, 7.834623e-12
        %v427 = vmul.f32 %v347, 7.834623e-12
        %v428 = vmul.f32 %v348, 7.834623e-12
        %v429 = vmul.f32 %v349, 7.834623e-12
        %v430 = vmul.f32 %v350, 7.834623e-12
        %v431 = vmul.f32 %v351, 7.834623e-12
        %v432 = vmul.f32 %v352, 7.834623e-12
        %v433 = vmul.f32 %v353, 7.834623e-12
        %v434 = vmul.f32 %v354, 7.834623e-12
        %v435 = vmul.f32 %v355, 7.834623e-12
        %v436 = vmul.f32 %v356, 7.834623e-12
        %v437 = vmul.f32 %v357, 7.834623e-12
        %v438 = vmul.f32 %v342, 6.3484606e-08
        %v439 = vmul.f32 %v343, 6.3484606e-08
        %v440 = vmul.f32 %v344, 6.3484606e-08
        %v441 = vmul.f32 %v345, 6.3484606e-08
        %v442 = vmul.f32 %v346, 6.3484606e-08
        %v443 = vmul.f32 %v347, 6.3484606e-08
        %v444 = vmul.f32 %v348, 6.3484606e-08
        %v445 = vmul.f32 %v349, 6.3484606e-08
        %v446 = vmul.f32 %v350, 6.3484606e-08
        %v447 = vmul.f32 %v351, 6.3484606e-08
        %v448 = vmul.f32 %v352, 6.3484606e-08
        %v449 = vmul.f32 %v353, 6.3484606e-08
        %v450 = vmul.f32 %v354, 6.3484606e-08
        %v451 = vmul.f32 %v355, 6.3484606e-08
        %v452 = vmul.f32 %v356, 6.3484606e-08
        %v453 = vmul.f32 %v357, 6.3484606e-08
        %470 = vrot.lane.b32.xlu0 %v438, 127
        %v471 = vpop.permute.xlu0 %470
        %472 = vrot.lane.b32.xlu0 %v439, 127
        %v473 = vpop.permute.xlu0 %472
        %474 = vrot.lane.b32.xlu0 %v440, 127
        %v475 = vpop.permute.xlu0 %474
        %476 = vrot.lane.b32.xlu0 %v441, 127
        %v477 = vpop.permute.xlu0 %476
        %478 = vrot.lane.b32.xlu0 %v442, 127
        %v479 = vpop.permute.xlu0 %478
        %480 = vrot.lane.b32.xlu0 %v443, 127
        %v481 = vpop.permute.xlu0 %480
        %482 = vrot.lane.b32.xlu0 %v444, 127
        %v483 = vpop.permute.xlu0 %482
        %484 = vrot.lane.b32.xlu0 %v445, 127
        %v485 = vpop.permute.xlu0 %484
        %486 = vrot.lane.b32.xlu0 %v446, 127
        %v487 = vpop.permute.xlu0 %486
        %488 = vrot.lane.b32.xlu0 %v447, 127
        %v489 = vpop.permute.xlu0 %488
        %490 = vrot.lane.b32.xlu0 %v448, 127
        %v491 = vpop.permute.xlu0 %490
        %492 = vrot.lane.b32.xlu0 %v449, 127
        %v493 = vpop.permute.xlu0 %492
        %494 = vrot.lane.b32.xlu0 %v450, 127
        %v495 = vpop.permute.xlu0 %494
        %496 = vrot.lane.b32.xlu0 %v451, 127
        %v497 = vpop.permute.xlu0 %496
        %498 = vrot.lane.b32.xlu0 %v452, 127
        %v499 = vpop.permute.xlu0 %498
        %500 = vrot.lane.b32.xlu0 %v453, 127
        %v501 = vpop.permute.xlu0 %500
        %v518 = vadd.f32 %v422, %v471
        %v519 = vadd.f32 %v423, %v473
        %v520 = vadd.f32 %v424, %v475
        %v521 = vadd.f32 %v425, %v477
        %v522 = vadd.f32 %v426, %v479
        %v523 = vadd.f32 %v427, %v481
        %v524 = vadd.f32 %v428, %v483
        %v525 = vadd.f32 %v429, %v485
        %v526 = vadd.f32 %v430, %v487
        %v527 = vadd.f32 %v431, %v489
        %v528 = vadd.f32 %v432, %v491
        %v529 = vadd.f32 %v433, %v493
        %v530 = vadd.f32 %v434, %v495
        %v531 = vadd.f32 %v435, %v497
        %v532 = vadd.f32 %v436, %v499
        %v533 = vadd.f32 %v437, %v501
        %v534 = vmul.f32 %v342, 6.9619324e-05
        %v535 = vmul.f32 %v343, 6.9619324e-05
        %v536 = vmul.f32 %v344, 6.9619324e-05
        %v537 = vmul.f32 %v345, 6.9619324e-05
        %v538 = vmul.f32 %v346, 6.9619324e-05
        %v539 = vmul.f32 %v347, 6.9619324e-05
        %v540 = vmul.f32 %v348, 6.9619324e-05
        %v541 = vmul.f32 %v349, 6.9619324e-05
        %v542 = vmul.f32 %v350, 6.9619324e-05
        %v543 = vmul.f32 %v351, 6.9619324e-05
        %v544 = vmul.f32 %v352, 6.9619324e-05
        %v545 = vmul.f32 %v353, 6.9619324e-05
        %v546 = vmul.f32 %v354, 6.9619324e-05
        %v547 = vmul.f32 %v355, 6.9619324e-05
        %v548 = vmul.f32 %v356, 6.9619324e-05
        %v549 = vmul.f32 %v357, 6.9619324e-05
        %566 = vrot.lane.b32.xlu0 %v534, 126
        %v567 = vpop.permute.xlu0 %566
        %568 = vrot.lane.b32.xlu0 %v535, 126
        %v569 = vpop.permute.xlu0 %568
        %570 = vrot.lane.b32.xlu0 %v536, 126
        %v571 = vpop.permute.xlu0 %570
        %572 = vrot.lane.b32.xlu0 %v537, 126
        %v573 = vpop.permute.xlu0 %572
        %574 = vrot.lane.b32.xlu0 %v538, 126
        %v575 = vpop.permute.xlu0 %574
        %576 = vrot.lane.b32.xlu0 %v539, 126
        %v577 = vpop.permute.xlu0 %576
        %578 = vrot.lane.b32.xlu0 %v540, 126
        %v579 = vpop.permute.xlu0 %578
        %580 = vrot.lane.b32.xlu0 %v541, 126
        %v581 = vpop.permute.xlu0 %580
        %582 = vrot.lane.b32.xlu0 %v542, 126
        %v583 = vpop.permute.xlu0 %582
        %584 = vrot.lane.b32.xlu0 %v543, 126
        %v585 = vpop.permute.xlu0 %584
        %586 = vrot.lane.b32.xlu0 %v544, 126
        %v587 = vpop.permute.xlu0 %586
        %588 = vrot.lane.b32.xlu0 %v545, 126
        %v589 = vpop.permute.xlu0 %588
        %590 = vrot.lane.b32.xlu0 %v546, 126
        %v591 = vpop.permute.xlu0 %590
        %592 = vrot.lane.b32.xlu0 %v547, 126
        %v593 = vpop.permute.xlu0 %592
        %594 = vrot.lane.b32.xlu0 %v548, 126
        %v595 = vpop.permute.xlu0 %594
        %596 = vrot.lane.b32.xlu0 %v549, 126
        %v597 = vpop.permute.xlu0 %596
        %v614 = vadd.f32 %v518, %v567
        %v615 = vadd.f32 %v519, %v569
        %v616 = vadd.f32 %v520, %v571
        %v617 = vadd.f32 %v521, %v573
        %v618 = vadd.f32 %v522, %v575
        %v619 = vadd.f32 %v523, %v577
        %v620 = vadd.f32 %v524, %v579
        %v621 = vadd.f32 %v525, %v581
        %v622 = vadd.f32 %v526, %v583
        %v623 = vadd.f32 %v527, %v585
        %v624 = vadd.f32 %v528, %v587
        %v625 = vadd.f32 %v529, %v589
        %v626 = vadd.f32 %v530, %v591
        %v627 = vadd.f32 %v531, %v593
        %v628 = vadd.f32 %v532, %v595
        %v629 = vadd.f32 %v533, %v597
        %v630 = vmul.f32 %v342, 0.010332424
        %v631 = vmul.f32 %v343, 0.010332424
        %v632 = vmul.f32 %v344, 0.010332424
        %v633 = vmul.f32 %v345, 0.010332424
        %v634 = vmul.f32 %v346, 0.010332424
        %v635 = vmul.f32 %v347, 0.010332424
        %v636 = vmul.f32 %v348, 0.010332424
        %v637 = vmul.f32 %v349, 0.010332424
        %v638 = vmul.f32 %v350, 0.010332424
        %v639 = vmul.f32 %v351, 0.010332424
        %v640 = vmul.f32 %v352, 0.010332424
        %v641 = vmul.f32 %v353, 0.010332424
        %v642 = vmul.f32 %v354, 0.010332424
        %v643 = vmul.f32 %v355, 0.010332424
        %v644 = vmul.f32 %v356, 0.010332424
        %v645 = vmul.f32 %v357, 0.010332424
        %662 = vrot.lane.b32.xlu0 %v630, 125
        %v663 = vpop.permute.xlu0 %662
        %664 = vrot.lane.b32.xlu0 %v631, 125
        %v665 = vpop.permute.xlu0 %664
        %666 = vrot.lane.b32.xlu0 %v632, 125
        %v667 = vpop.permute.xlu0 %666
        %668 = vrot.lane.b32.xlu0 %v633, 125
        %v669 = vpop.permute.xlu0 %668
        %670 = vrot.lane.b32.xlu0 %v634, 125
        %v671 = vpop.permute.xlu0 %670
        %672 = vrot.lane.b32.xlu0 %v635, 125
        %v673 = vpop.permute.xlu0 %672
        %674 = vrot.lane.b32.xlu0 %v636, 125
        %v675 = vpop.permute.xlu0 %674
        %676 = vrot.lane.b32.xlu0 %v637, 125
        %v677 = vpop.permute.xlu0 %676
        %678 = vrot.lane.b32.xlu0 %v638, 125
        %v679 = vpop.permute.xlu0 %678
        %680 = vrot.lane.b32.xlu0 %v639, 125
        %v681 = vpop.permute.xlu0 %680
        %682 = vrot.lane.b32.xlu0 %v640, 125
        %v683 = vpop.permute.xlu0 %682
        %684 = vrot.lane.b32.xlu0 %v641, 125
        %v685 = vpop.permute.xlu0 %684
        %686 = vrot.lane.b32.xlu0 %v642, 125
        %v687 = vpop.permute.xlu0 %686
        %688 = vrot.lane.b32.xlu0 %v643, 125
        %v689 = vpop.permute.xlu0 %688
        %690 = vrot.lane.b32.xlu0 %v644, 125
        %v691 = vpop.permute.xlu0 %690
        %692 = vrot.lane.b32.xlu0 %v645, 125
        %v693 = vpop.permute.xlu0 %692
        %v710 = vadd.f32 %v614, %v663
        %v711 = vadd.f32 %v615, %v665
        %v712 = vadd.f32 %v616, %v667
        %v713 = vadd.f32 %v617, %v669
        %v714 = vadd.f32 %v618, %v671
        %v715 = vadd.f32 %v619, %v673
        %v716 = vadd.f32 %v620, %v675
        %v717 = vadd.f32 %v621, %v677
        %v718 = vadd.f32 %v622, %v679
        %v719 = vadd.f32 %v623, %v681
        %v720 = vadd.f32 %v624, %v683
        %v721 = vadd.f32 %v625, %v685
        %v722 = vadd.f32 %v626, %v687
        %v723 = vadd.f32 %v627, %v689
        %v724 = vadd.f32 %v628, %v691
        %v725 = vadd.f32 %v629, %v693
        %v726 = vmul.f32 %v342, 0.20753229
        %v727 = vmul.f32 %v343, 0.20753229
        %v728 = vmul.f32 %v344, 0.20753229
        %v729 = vmul.f32 %v345, 0.20753229
        %v730 = vmul.f32 %v346, 0.20753229
        %v731 = vmul.f32 %v347, 0.20753229
        %v732 = vmul.f32 %v348, 0.20753229
        %v733 = vmul.f32 %v349, 0.20753229
        %v734 = vmul.f32 %v350, 0.20753229
        %v735 = vmul.f32 %v351, 0.20753229
        %v736 = vmul.f32 %v352, 0.20753229
        %v737 = vmul.f32 %v353, 0.20753229
        %v738 = vmul.f32 %v354, 0.20753229
        %v739 = vmul.f32 %v355, 0.20753229
        %v740 = vmul.f32 %v356, 0.20753229
        %v741 = vmul.f32 %v357, 0.20753229
        %758 = vrot.lane.b32.xlu0 %v726, 124
        %v759 = vpop.permute.xlu0 %758
        %760 = vrot.lane.b32.xlu0 %v727, 124
        %v761 = vpop.permute.xlu0 %760
        %762 = vrot.lane.b32.xlu0 %v728, 124
        %v763 = vpop.permute.xlu0 %762
        %764 = vrot.lane.b32.xlu0 %v729, 124
        %v765 = vpop.permute.xlu0 %764
        %766 = vrot.lane.b32.xlu0 %v730, 124
        %v767 = vpop.permute.xlu0 %766
        %768 = vrot.lane.b32.xlu0 %v731, 124
        %v769 = vpop.permute.xlu0 %768
        %770 = vrot.lane.b32.xlu0 %v732, 124
        %v771 = vpop.permute.xlu0 %770
        %772 = vrot.lane.b32.xlu0 %v733, 124
        %v773 = vpop.permute.xlu0 %772
        %774 = vrot.lane.b32.xlu0 %v734, 124
        %v775 = vpop.permute.xlu0 %774
        %776 = vrot.lane.b32.xlu0 %v735, 124
        %v777 = vpop.permute.xlu0 %776
        %778 = vrot.lane.b32.xlu0 %v736, 124
        %v779 = vpop.permute.xlu0 %778
        %780 = vrot.lane.b32.xlu0 %v737, 124
        %v781 = vpop.permute.xlu0 %780
        %782 = vrot.lane.b32.xlu0 %v738, 124
        %v783 = vpop.permute.xlu0 %782
        %784 = vrot.lane.b32.xlu0 %v739, 124
        %v785 = vpop.permute.xlu0 %784
        %786 = vrot.lane.b32.xlu0 %v740, 124
        %v787 = vpop.permute.xlu0 %786
        %788 = vrot.lane.b32.xlu0 %v741, 124
        %v789 = vpop.permute.xlu0 %788
        %v806 = vadd.f32 %v710, %v759
        %v807 = vadd.f32 %v711, %v761
        %v808 = vadd.f32 %v712, %v763
        %v809 = vadd.f32 %v713, %v765
        %v810 = vadd.f32 %v714, %v767
        %v811 = vadd.f32 %v715, %v769
        %v812 = vadd.f32 %v716, %v771
        %v813 = vadd.f32 %v717, %v773
        %v814 = vadd.f32 %v718, %v775
        %v815 = vadd.f32 %v719, %v777
        %v816 = vadd.f32 %v720, %v779
        %v817 = vadd.f32 %v721, %v781
        %v818 = vadd.f32 %v722, %v783
        %v819 = vadd.f32 %v723, %v785
        %v820 = vadd.f32 %v724, %v787
        %v821 = vadd.f32 %v725, %v789
        %v822 = vmul.f32 %v342, 0.5641312
        %v823 = vmul.f32 %v343, 0.5641312
        %v824 = vmul.f32 %v344, 0.5641312
        %v825 = vmul.f32 %v345, 0.5641312
        %v826 = vmul.f32 %v346, 0.5641312
        %v827 = vmul.f32 %v347, 0.5641312
        %v828 = vmul.f32 %v348, 0.5641312
        %v829 = vmul.f32 %v349, 0.5641312
        %v830 = vmul.f32 %v350, 0.5641312
        %v831 = vmul.f32 %v351, 0.5641312
        %v832 = vmul.f32 %v352, 0.5641312
        %v833 = vmul.f32 %v353, 0.5641312
        %v834 = vmul.f32 %v354, 0.5641312
        %v835 = vmul.f32 %v355, 0.5641312
        %v836 = vmul.f32 %v356, 0.5641312
        %v837 = vmul.f32 %v357, 0.5641312
        %854 = vrot.lane.b32.xlu0 %v822, 123
        %v855 = vpop.permute.xlu0 %854
        %856 = vrot.lane.b32.xlu0 %v823, 123
        %v857 = vpop.permute.xlu0 %856
        %858 = vrot.lane.b32.xlu0 %v824, 123
        %v859 = vpop.permute.xlu0 %858
        %860 = vrot.lane.b32.xlu0 %v825, 123
        %v861 = vpop.permute.xlu0 %860
        %862 = vrot.lane.b32.xlu0 %v826, 123
        %v863 = vpop.permute.xlu0 %862
        %864 = vrot.lane.b32.xlu0 %v827, 123
        %v865 = vpop.permute.xlu0 %864
        %866 = vrot.lane.b32.xlu0 %v828, 123
        %v867 = vpop.permute.xlu0 %866
        %868 = vrot.lane.b32.xlu0 %v829, 123
        %v869 = vpop.permute.xlu0 %868
        %870 = vrot.lane.b32.xlu0 %v830, 123
        %v871 = vpop.permute.xlu0 %870
        %872 = vrot.lane.b32.xlu0 %v831, 123
        %v873 = vpop.permute.xlu0 %872
        %874 = vrot.lane.b32.xlu0 %v832, 123
        %v875 = vpop.permute.xlu0 %874
        %876 = vrot.lane.b32.xlu0 %v833, 123
        %v877 = vpop.permute.xlu0 %876
        %878 = vrot.lane.b32.xlu0 %v834, 123
        %v879 = vpop.permute.xlu0 %878
        %880 = vrot.lane.b32.xlu0 %v835, 123
        %v881 = vpop.permute.xlu0 %880
        %882 = vrot.lane.b32.xlu0 %v836, 123
        %v883 = vpop.permute.xlu0 %882
        %884 = vrot.lane.b32.xlu0 %v837, 123
        %v885 = vpop.permute.xlu0 %884
        %v902 = vadd.f32 %v806, %v855
        %v903 = vadd.f32 %v807, %v857
        %v904 = vadd.f32 %v808, %v859
        %v905 = vadd.f32 %v809, %v861
        %v906 = vadd.f32 %v810, %v863
        %v907 = vadd.f32 %v811, %v865
        %v908 = vadd.f32 %v812, %v867
        %v909 = vadd.f32 %v813, %v869
        %v910 = vadd.f32 %v814, %v871
        %v911 = vadd.f32 %v815, %v873
        %v912 = vadd.f32 %v816, %v875
        %v913 = vadd.f32 %v817, %v877
        %v914 = vadd.f32 %v818, %v879
        %v915 = vadd.f32 %v819, %v881
        %v916 = vadd.f32 %v820, %v883
        %v917 = vadd.f32 %v821, %v885
        %918 = vrot.lane.b32.xlu0 %v726, 122
        %v919 = vpop.permute.xlu0 %918
        %920 = vrot.lane.b32.xlu0 %v727, 122
        %v921 = vpop.permute.xlu0 %920
        %922 = vrot.lane.b32.xlu0 %v728, 122
        %v923 = vpop.permute.xlu0 %922
        %924 = vrot.lane.b32.xlu0 %v729, 122
        %v925 = vpop.permute.xlu0 %924
        %926 = vrot.lane.b32.xlu0 %v730, 122
        %v927 = vpop.permute.xlu0 %926
        %928 = vrot.lane.b32.xlu0 %v731, 122
        %v929 = vpop.permute.xlu0 %928
        %930 = vrot.lane.b32.xlu0 %v732, 122
        %v931 = vpop.permute.xlu0 %930
        %932 = vrot.lane.b32.xlu0 %v733, 122
        %v933 = vpop.permute.xlu0 %932
        %934 = vrot.lane.b32.xlu0 %v734, 122
        %v935 = vpop.permute.xlu0 %934
        %936 = vrot.lane.b32.xlu0 %v735, 122
        %v937 = vpop.permute.xlu0 %936
        %938 = vrot.lane.b32.xlu0 %v736, 122
        %v939 = vpop.permute.xlu0 %938
        %940 = vrot.lane.b32.xlu0 %v737, 122
        %v941 = vpop.permute.xlu0 %940
        %942 = vrot.lane.b32.xlu0 %v738, 122
        %v943 = vpop.permute.xlu0 %942
        %944 = vrot.lane.b32.xlu0 %v739, 122
        %v945 = vpop.permute.xlu0 %944
        %946 = vrot.lane.b32.xlu0 %v740, 122
        %v947 = vpop.permute.xlu0 %946
        %948 = vrot.lane.b32.xlu0 %v741, 122
        %v949 = vpop.permute.xlu0 %948
        %v966 = vadd.f32 %v902, %v919
        %v967 = vadd.f32 %v903, %v921
        %v968 = vadd.f32 %v904, %v923
        %v969 = vadd.f32 %v905, %v925
        %v970 = vadd.f32 %v906, %v927
        %v971 = vadd.f32 %v907, %v929
        %v972 = vadd.f32 %v908, %v931
        %v973 = vadd.f32 %v909, %v933
        %v974 = vadd.f32 %v910, %v935
        %v975 = vadd.f32 %v911, %v937
        %v976 = vadd.f32 %v912, %v939
        %v977 = vadd.f32 %v913, %v941
        %v978 = vadd.f32 %v914, %v943
        %v979 = vadd.f32 %v915, %v945
        %v980 = vadd.f32 %v916, %v947
        %v981 = vadd.f32 %v917, %v949
        %982 = vrot.lane.b32.xlu0 %v630, 121
        %v983 = vpop.permute.xlu0 %982
        %984 = vrot.lane.b32.xlu0 %v631, 121
        %v985 = vpop.permute.xlu0 %984
        %986 = vrot.lane.b32.xlu0 %v632, 121
        %v987 = vpop.permute.xlu0 %986
        %988 = vrot.lane.b32.xlu0 %v633, 121
        %v989 = vpop.permute.xlu0 %988
        %990 = vrot.lane.b32.xlu0 %v634, 121
        %v991 = vpop.permute.xlu0 %990
        %992 = vrot.lane.b32.xlu0 %v635, 121
        %v993 = vpop.permute.xlu0 %992
        %994 = vrot.lane.b32.xlu0 %v636, 121
        %v995 = vpop.permute.xlu0 %994
        %996 = vrot.lane.b32.xlu0 %v637, 121
        %v997 = vpop.permute.xlu0 %996
        %998 = vrot.lane.b32.xlu0 %v638, 121
        %v999 = vpop.permute.xlu0 %998
        %1000 = vrot.lane.b32.xlu0 %v639, 121
        %v1001 = vpop.permute.xlu0 %1000
        %1002 = vrot.lane.b32.xlu0 %v640, 121
        %v1003 = vpop.permute.xlu0 %1002
        %1004 = vrot.lane.b32.xlu0 %v641, 121
        %v1005 = vpop.permute.xlu0 %1004
        %1006 = vrot.lane.b32.xlu0 %v642, 121
        %v1007 = vpop.permute.xlu0 %1006
        %1008 = vrot.lane.b32.xlu0 %v643, 121
        %v1009 = vpop.permute.xlu0 %1008
        %1010 = vrot.lane.b32.xlu0 %v644, 121
        %v1011 = vpop.permute.xlu0 %1010
        %1012 = vrot.lane.b32.xlu0 %v645, 121
        %v1013 = vpop.permute.xlu0 %1012
        %v1030 = vadd.f32 %v966, %v983
        %v1031 = vadd.f32 %v967, %v985
        %v1032 = vadd.f32 %v968, %v987
        %v1033 = vadd.f32 %v969, %v989
        %v1034 = vadd.f32 %v970, %v991
        %v1035 = vadd.f32 %v971, %v993
        %v1036 = vadd.f32 %v972, %v995
        %v1037 = vadd.f32 %v973, %v997
        %v1038 = vadd.f32 %v974, %v999
        %v1039 = vadd.f32 %v975, %v1001
        %v1040 = vadd.f32 %v976, %v1003
        %v1041 = vadd.f32 %v977, %v1005
        %v1042 = vadd.f32 %v978, %v1007
        %v1043 = vadd.f32 %v979, %v1009
        %v1044 = vadd.f32 %v980, %v1011
        %v1045 = vadd.f32 %v981, %v1013
        %1046 = vrot.lane.b32.xlu0 %v534, 120
        %v1047 = vpop.permute.xlu0 %1046
        %1048 = vrot.lane.b32.xlu0 %v535, 120
        %v1049 = vpop.permute.xlu0 %1048
        %1050 = vrot.lane.b32.xlu0 %v536, 120
        %v1051 = vpop.permute.xlu0 %1050
        %1052 = vrot.lane.b32.xlu0 %v537, 120
        %v1053 = vpop.permute.xlu0 %1052
        %1054 = vrot.lane.b32.xlu0 %v538, 120
        %v1055 = vpop.permute.xlu0 %1054
        %1056 = vrot.lane.b32.xlu0 %v539, 120
        %v1057 = vpop.permute.xlu0 %1056
        %1058 = vrot.lane.b32.xlu0 %v540, 120
        %v1059 = vpop.permute.xlu0 %1058
        %1060 = vrot.lane.b32.xlu0 %v541, 120
        %v1061 = vpop.permute.xlu0 %1060
        %1062 = vrot.lane.b32.xlu0 %v542, 120
        %v1063 = vpop.permute.xlu0 %1062
        %1064 = vrot.lane.b32.xlu0 %v543, 120
        %v1065 = vpop.permute.xlu0 %1064
        %1066 = vrot.lane.b32.xlu0 %v544, 120
        %v1067 = vpop.permute.xlu0 %1066
        %1068 = vrot.lane.b32.xlu0 %v545, 120
        %v1069 = vpop.permute.xlu0 %1068
        %1070 = vrot.lane.b32.xlu0 %v546, 120
        %v1071 = vpop.permute.xlu0 %1070
        %1072 = vrot.lane.b32.xlu0 %v547, 120
        %v1073 = vpop.permute.xlu0 %1072
        %1074 = vrot.lane.b32.xlu0 %v548, 120
        %v1075 = vpop.permute.xlu0 %1074
        %1076 = vrot.lane.b32.xlu0 %v549, 120
        %v1077 = vpop.permute.xlu0 %1076
        %v1094 = vadd.f32 %v1030, %v1047
        %v1095 = vadd.f32 %v1031, %v1049
        %v1096 = vadd.f32 %v1032, %v1051
        %v1097 = vadd.f32 %v1033, %v1053
        %v1098 = vadd.f32 %v1034, %v1055
        %v1099 = vadd.f32 %v1035, %v1057
        %v1100 = vadd.f32 %v1036, %v1059
        %v1101 = vadd.f32 %v1037, %v1061
        %v1102 = vadd.f32 %v1038, %v1063
        %v1103 = vadd.f32 %v1039, %v1065
        %v1104 = vadd.f32 %v1040, %v1067
        %v1105 = vadd.f32 %v1041, %v1069
        %v1106 = vadd.f32 %v1042, %v1071
        %v1107 = vadd.f32 %v1043, %v1073
        %v1108 = vadd.f32 %v1044, %v1075
        %v1109 = vadd.f32 %v1045, %v1077
        %1110 = vrot.lane.b32.xlu0 %v438, 119
        %v1111 = vpop.permute.xlu0 %1110
        %1112 = vrot.lane.b32.xlu0 %v439, 119
        %v1113 = vpop.permute.xlu0 %1112
        %1114 = vrot.lane.b32.xlu0 %v440, 119
        %v1115 = vpop.permute.xlu0 %1114
        %1116 = vrot.lane.b32.xlu0 %v441, 119
        %v1117 = vpop.permute.xlu0 %1116
        %1118 = vrot.lane.b32.xlu0 %v442, 119
        %v1119 = vpop.permute.xlu0 %1118
        %1120 = vrot.lane.b32.xlu0 %v443, 119
        %v1121 = vpop.permute.xlu0 %1120
        %1122 = vrot.lane.b32.xlu0 %v444, 119
        %v1123 = vpop.permute.xlu0 %1122
        %1124 = vrot.lane.b32.xlu0 %v445, 119
        %v1125 = vpop.permute.xlu0 %1124
        %1126 = vrot.lane.b32.xlu0 %v446, 119
        %v1127 = vpop.permute.xlu0 %1126
        %1128 = vrot.lane.b32.xlu0 %v447, 119
        %v1129 = vpop.permute.xlu0 %1128
        %1130 = vrot.lane.b32.xlu0 %v448, 119
        %v1131 = vpop.permute.xlu0 %1130
        %1132 = vrot.lane.b32.xlu0 %v449, 119
        %v1133 = vpop.permute.xlu0 %1132
        %1134 = vrot.lane.b32.xlu0 %v450, 119
        %v1135 = vpop.permute.xlu0 %1134
        %1136 = vrot.lane.b32.xlu0 %v451, 119
        %v1137 = vpop.permute.xlu0 %1136
        %1138 = vrot.lane.b32.xlu0 %v452, 119
        %v1139 = vpop.permute.xlu0 %1138
        %1140 = vrot.lane.b32.xlu0 %v453, 119
        %v1141 = vpop.permute.xlu0 %1140
        %v1158 = vadd.f32 %v1094, %v1111
        %v1159 = vadd.f32 %v1095, %v1113
        %v1160 = vadd.f32 %v1096, %v1115
        %v1161 = vadd.f32 %v1097, %v1117
        %v1162 = vadd.f32 %v1098, %v1119
        %v1163 = vadd.f32 %v1099, %v1121
        %v1164 = vadd.f32 %v1100, %v1123
        %v1165 = vadd.f32 %v1101, %v1125
        %v1166 = vadd.f32 %v1102, %v1127
        %v1167 = vadd.f32 %v1103, %v1129
        %v1168 = vadd.f32 %v1104, %v1131
        %v1169 = vadd.f32 %v1105, %v1133
        %v1170 = vadd.f32 %v1106, %v1135
        %v1171 = vadd.f32 %v1107, %v1137
        %v1172 = vadd.f32 %v1108, %v1139
        %v1173 = vadd.f32 %v1109, %v1141
        %1190 = vrot.lane.b32.xlu0 %v422, 118
        %v1191 = vpop.permute.xlu0 %1190
        %1192 = vrot.lane.b32.xlu0 %v423, 118
        %v1193 = vpop.permute.xlu0 %1192
        %1194 = vrot.lane.b32.xlu0 %v424, 118
        %v1195 = vpop.permute.xlu0 %1194
        %1196 = vrot.lane.b32.xlu0 %v425, 118
        %v1197 = vpop.permute.xlu0 %1196
        %1198 = vrot.lane.b32.xlu0 %v426, 118
        %v1199 = vpop.permute.xlu0 %1198
        %1200 = vrot.lane.b32.xlu0 %v427, 118
        %v1201 = vpop.permute.xlu0 %1200
        %1202 = vrot.lane.b32.xlu0 %v428, 118
        %v1203 = vpop.permute.xlu0 %1202
        %1204 = vrot.lane.b32.xlu0 %v429, 118
        %v1205 = vpop.permute.xlu0 %1204
        %1206 = vrot.lane.b32.xlu0 %v430, 118
        %v1207 = vpop.permute.xlu0 %1206
        %1208 = vrot.lane.b32.xlu0 %v431, 118
        %v1209 = vpop.permute.xlu0 %1208
        %1210 = vrot.lane.b32.xlu0 %v432, 118
        %v1211 = vpop.permute.xlu0 %1210
        %1212 = vrot.lane.b32.xlu0 %v433, 118
        %v1213 = vpop.permute.xlu0 %1212
        %1214 = vrot.lane.b32.xlu0 %v434, 118
        %v1215 = vpop.permute.xlu0 %1214
        %1216 = vrot.lane.b32.xlu0 %v435, 118
        %v1217 = vpop.permute.xlu0 %1216
        %1218 = vrot.lane.b32.xlu0 %v436, 118
        %v1219 = vpop.permute.xlu0 %1218
        %1220 = vrot.lane.b32.xlu0 %v437, 118
        %v1221 = vpop.permute.xlu0 %1220
        %v1238 = vadd.f32 %v1158, %v1191
        %v1239 = vadd.f32 %v1159, %v1193
        %v1240 = vadd.f32 %v1160, %v1195
        %v1241 = vadd.f32 %v1161, %v1197
        %v1242 = vadd.f32 %v1162, %v1199
        %v1243 = vadd.f32 %v1163, %v1201
        %v1244 = vadd.f32 %v1164, %v1203
        %v1245 = vadd.f32 %v1165, %v1205
        %v1246 = vadd.f32 %v1166, %v1207
        %v1247 = vadd.f32 %v1167, %v1209
        %v1248 = vadd.f32 %v1168, %v1211
        %v1249 = vadd.f32 %v1169, %v1213
        %v1250 = vadd.f32 %v1170, %v1215
        %v1251 = vadd.f32 %v1171, %v1217
        %v1252 = vadd.f32 %v1172, %v1219
        %v1253 = vadd.f32 %v1173, %v1221
        %v1254 = vmul.f32 %v1238, 7.834623e-12
        %v1255 = vmul.f32 %v1239, 7.834623e-12
        %v1256 = vmul.f32 %v1242, 7.834623e-12
        %v1257 = vmul.f32 %v1243, 7.834623e-12
        %v1258 = vmul.f32 %v1246, 7.834623e-12
        %v1259 = vmul.f32 %v1247, 7.834623e-12
        %v1260 = vmul.f32 %v1250, 7.834623e-12
        %v1261 = vmul.f32 %v1251, 7.834623e-12
        %v1262 = vmul.f32 %v1238, 6.3484606e-08
        %v1263 = vmul.f32 %v1239, 6.3484606e-08
        %v1264 = vmul.f32 %v1240, 6.3484606e-08
        %v1265 = vmul.f32 %v1242, 6.3484606e-08
        %v1266 = vmul.f32 %v1243, 6.3484606e-08
        %v1267 = vmul.f32 %v1244, 6.3484606e-08
        %v1268 = vmul.f32 %v1246, 6.3484606e-08
        %v1269 = vmul.f32 %v1247, 6.3484606e-08
        %v1270 = vmul.f32 %v1248, 6.3484606e-08
        %v1271 = vmul.f32 %v1250, 6.3484606e-08
        %v1272 = vmul.f32 %v1251, 6.3484606e-08
        %v1273 = vmul.f32 %v1252, 6.3484606e-08
        %vm1286 = vcmask 1046528
        %v1287 = vrot.slane %v1262, 1
        %v1288 = vrot.slane %v1263, 1
        %v1289 = vsel %vm1286, %v1287, %v1288
        %v1290 = vrot.slane %v1264, 1
        %v1291 = vsel %vm1286, %v1288, %v1290
        %v1292 = vrot.slane %v1265, 1
        %v1293 = vrot.slane %v1266, 1
        %v1294 = vsel %vm1286, %v1292, %v1293
        %v1295 = vrot.slane %v1267, 1
        %v1296 = vsel %vm1286, %v1293, %v1295
        %v1297 = vrot.slane %v1268, 1
        %v1298 = vrot.slane %v1269, 1
        %v1299 = vsel %vm1286, %v1297, %v1298
        %v1300 = vrot.slane %v1270, 1
        %v1301 = vsel %vm1286, %v1298, %v1300
        %v1302 = vrot.slane %v1271, 1
        %v1303 = vrot.slane %v1272, 1
        %v1304 = vsel %vm1286, %v1302, %v1303
        %v1305 = vrot.slane %v1273, 1
        %v1306 = vsel %vm1286, %v1303, %v1305
        %v1315 = vadd.f32 %v1254, %v1289
        %v1316 = vadd.f32 %v1255, %v1291
        %v1317 = vadd.f32 %v1256, %v1294
        %v1318 = vadd.f32 %v1257, %v1296
        %v1319 = vadd.f32 %v1258, %v1299
        %v1320 = vadd.f32 %v1259, %v1301
        %v1321 = vadd.f32 %v1260, %v1304
        %v1322 = vadd.f32 %v1261, %v1306
        %v1323 = vmul.f32 %v1238, 6.9619324e-05
        %v1324 = vmul.f32 %v1239, 6.9619324e-05
        %v1325 = vmul.f32 %v1240, 6.9619324e-05
        %v1326 = vmul.f32 %v1242, 6.9619324e-05
        %v1327 = vmul.f32 %v1243, 6.9619324e-05
        %v1328 = vmul.f32 %v1244, 6.9619324e-05
        %v1329 = vmul.f32 %v1246, 6.9619324e-05
        %v1330 = vmul.f32 %v1247, 6.9619324e-05
        %v1331 = vmul.f32 %v1248, 6.9619324e-05
        %v1332 = vmul.f32 %v1250, 6.9619324e-05
        %v1333 = vmul.f32 %v1251, 6.9619324e-05
        %v1334 = vmul.f32 %v1252, 6.9619324e-05
        %vm1347 = vcmask 1045504
        %v1348 = vrot.slane %v1323, 2
        %v1349 = vrot.slane %v1324, 2
        %v1350 = vsel %vm1347, %v1348, %v1349
        %v1351 = vrot.slane %v1325, 2
        %v1352 = vsel %vm1347, %v1349, %v1351
        %v1353 = vrot.slane %v1326, 2
        %v1354 = vrot.slane %v1327, 2
        %v1355 = vsel %vm1347, %v1353, %v1354
        %v1356 = vrot.slane %v1328, 2
        %v1357 = vsel %vm1347, %v1354, %v1356
        %v1358 = vrot.slane %v1329, 2
        %v1359 = vrot.slane %v1330, 2
        %v1360 = vsel %vm1347, %v1358, %v1359
        %v1361 = vrot.slane %v1331, 2
        %v1362 = vsel %vm1347, %v1359, %v1361
        %v1363 = vrot.slane %v1332, 2
        %v1364 = vrot.slane %v1333, 2
        %v1365 = vsel %vm1347, %v1363, %v1364
        %v1366 = vrot.slane %v1334, 2
        %v1367 = vsel %vm1347, %v1364, %v1366
        %v1376 = vadd.f32 %v1315, %v1350
        %v1377 = vadd.f32 %v1316, %v1352
        %v1378 = vadd.f32 %v1317, %v1355
        %v1379 = vadd.f32 %v1318, %v1357
        %v1380 = vadd.f32 %v1319, %v1360
        %v1381 = vadd.f32 %v1320, %v1362
        %v1382 = vadd.f32 %v1321, %v1365
        %v1383 = vadd.f32 %v1322, %v1367
        %v1384 = vmul.f32 %v1238, 0.010332424
        %v1385 = vmul.f32 %v1239, 0.010332424
        %v1386 = vmul.f32 %v1240, 0.010332424
        %v1387 = vmul.f32 %v1242, 0.010332424
        %v1388 = vmul.f32 %v1243, 0.010332424
        %v1389 = vmul.f32 %v1244, 0.010332424
        %v1390 = vmul.f32 %v1246, 0.010332424
        %v1391 = vmul.f32 %v1247, 0.010332424
        %v1392 = vmul.f32 %v1248, 0.010332424
        %v1393 = vmul.f32 %v1250, 0.010332424
        %v1394 = vmul.f32 %v1251, 0.010332424
        %v1395 = vmul.f32 %v1252, 0.010332424
        %vm1408 = vcmask 1044480
        %v1409 = vrot.slane %v1384, 3
        %v1410 = vrot.slane %v1385, 3
        %v1411 = vsel %vm1408, %v1409, %v1410
        %v1412 = vrot.slane %v1386, 3
        %v1413 = vsel %vm1408, %v1410, %v1412
        %v1414 = vrot.slane %v1387, 3
        %v1415 = vrot.slane %v1388, 3
        %v1416 = vsel %vm1408, %v1414, %v1415
        %v1417 = vrot.slane %v1389, 3
        %v1418 = vsel %vm1408, %v1415, %v1417
        %v1419 = vrot.slane %v1390, 3
        %v1420 = vrot.slane %v1391, 3
        %v1421 = vsel %vm1408, %v1419, %v1420
        %v1422 = vrot.slane %v1392, 3
        %v1423 = vsel %vm1408, %v1420, %v1422
        %v1424 = vrot.slane %v1393, 3
        %v1425 = vrot.slane %v1394, 3
        %v1426 = vsel %vm1408, %v1424, %v1425
        %v1427 = vrot.slane %v1395, 3
        %v1428 = vsel %vm1408, %v1425, %v1427
        %v1437 = vadd.f32 %v1376, %v1411
        %v1438 = vadd.f32 %v1377, %v1413
        %v1439 = vadd.f32 %v1378, %v1416
        %v1440 = vadd.f32 %v1379, %v1418
        %v1441 = vadd.f32 %v1380, %v1421
        %v1442 = vadd.f32 %v1381, %v1423
        %v1443 = vadd.f32 %v1382, %v1426
        %v1444 = vadd.f32 %v1383, %v1428
        %v1445 = vmul.f32 %v1238, 0.20753229
        %v1446 = vmul.f32 %v1239, 0.20753229
        %v1447 = vmul.f32 %v1240, 0.20753229
        %v1448 = vmul.f32 %v1242, 0.20753229
        %v1449 = vmul.f32 %v1243, 0.20753229
        %v1450 = vmul.f32 %v1244, 0.20753229
        %v1451 = vmul.f32 %v1246, 0.20753229
        %v1452 = vmul.f32 %v1247, 0.20753229
        %v1453 = vmul.f32 %v1248, 0.20753229
        %v1454 = vmul.f32 %v1250, 0.20753229
        %v1455 = vmul.f32 %v1251, 0.20753229
        %v1456 = vmul.f32 %v1252, 0.20753229
        %vm1469 = vcmask 1043456
        %v1470 = vrot.slane %v1445, 4
        %v1471 = vrot.slane %v1446, 4
        %v1472 = vsel %vm1469, %v1470, %v1471
        %v1473 = vrot.slane %v1447, 4
        %v1474 = vsel %vm1469, %v1471, %v1473
        %v1475 = vrot.slane %v1448, 4
        %v1476 = vrot.slane %v1449, 4
        %v1477 = vsel %vm1469, %v1475, %v1476
        %v1478 = vrot.slane %v1450, 4
        %v1479 = vsel %vm1469, %v1476, %v1478
        %v1480 = vrot.slane %v1451, 4
        %v1481 = vrot.slane %v1452, 4
        %v1482 = vsel %vm1469, %v1480, %v1481
        %v1483 = vrot.slane %v1453, 4
        %v1484 = vsel %vm1469, %v1481, %v1483
        %v1485 = vrot.slane %v1454, 4
        %v1486 = vrot.slane %v1455, 4
        %v1487 = vsel %vm1469, %v1485, %v1486
        %v1488 = vrot.slane %v1456, 4
        %v1489 = vsel %vm1469, %v1486, %v1488
        %v1498 = vadd.f32 %v1437, %v1472
        %v1499 = vadd.f32 %v1438, %v1474
        %v1500 = vadd.f32 %v1439, %v1477
        %v1501 = vadd.f32 %v1440, %v1479
        %v1502 = vadd.f32 %v1441, %v1482
        %v1503 = vadd.f32 %v1442, %v1484
        %v1504 = vadd.f32 %v1443, %v1487
        %v1505 = vadd.f32 %v1444, %v1489
        %v1506 = vmul.f32 %v1238, 0.5641312
        %v1507 = vmul.f32 %v1239, 0.5641312
        %v1508 = vmul.f32 %v1240, 0.5641312
        %v1509 = vmul.f32 %v1242, 0.5641312
        %v1510 = vmul.f32 %v1243, 0.5641312
        %v1511 = vmul.f32 %v1244, 0.5641312
        %v1512 = vmul.f32 %v1246, 0.5641312
        %v1513 = vmul.f32 %v1247, 0.5641312
        %v1514 = vmul.f32 %v1248, 0.5641312
        %v1515 = vmul.f32 %v1250, 0.5641312
        %v1516 = vmul.f32 %v1251, 0.5641312
        %v1517 = vmul.f32 %v1252, 0.5641312
        %vm1530 = vcmask 1042432
        %v1531 = vrot.slane %v1506, 5
        %v1532 = vrot.slane %v1507, 5
        %v1533 = vsel %vm1530, %v1531, %v1532
        %v1534 = vrot.slane %v1508, 5
        %v1535 = vsel %vm1530, %v1532, %v1534
        %v1536 = vrot.slane %v1509, 5
        %v1537 = vrot.slane %v1510, 5
        %v1538 = vsel %vm1530, %v1536, %v1537
        %v1539 = vrot.slane %v1511, 5
        %v1540 = vsel %vm1530, %v1537, %v1539
        %v1541 = vrot.slane %v1512, 5
        %v1542 = vrot.slane %v1513, 5
        %v1543 = vsel %vm1530, %v1541, %v1542
        %v1544 = vrot.slane %v1514, 5
        %v1545 = vsel %vm1530, %v1542, %v1544
        %v1546 = vrot.slane %v1515, 5
        %v1547 = vrot.slane %v1516, 5
        %v1548 = vsel %vm1530, %v1546, %v1547
        %v1549 = vrot.slane %v1517, 5
        %v1550 = vsel %vm1530, %v1547, %v1549
        %v1559 = vadd.f32 %v1498, %v1533
        %v1560 = vadd.f32 %v1499, %v1535
        %v1561 = vadd.f32 %v1500, %v1538
        %v1562 = vadd.f32 %v1501, %v1540
        %v1563 = vadd.f32 %v1502, %v1543
        %v1564 = vadd.f32 %v1503, %v1545
        %v1565 = vadd.f32 %v1504, %v1548
        %v1566 = vadd.f32 %v1505, %v1550
        %vm1567 = vcmask 1041408
        %v1568 = vrot.slane %v1445, 6
        %v1569 = vrot.slane %v1446, 6
        %v1570 = vsel %vm1567, %v1568, %v1569
        %v1571 = vrot.slane %v1447, 6
        %v1572 = vsel %vm1567, %v1569, %v1571
        %v1573 = vrot.slane %v1448, 6
        %v1574 = vrot.slane %v1449, 6
        %v1575 = vsel %vm1567, %v1573, %v1574
        %v1576 = vrot.slane %v1450, 6
        %v1577 = vsel %vm1567, %v1574, %v1576
        %v1578 = vrot.slane %v1451, 6
        %v1579 = vrot.slane %v1452, 6
        %v1580 = vsel %vm1567, %v1578, %v1579
        %v1581 = vrot.slane %v1453, 6
        %v1582 = vsel %vm1567, %v1579, %v1581
        %v1583 = vrot.slane %v1454, 6
        %v1584 = vrot.slane %v1455, 6
        %v1585 = vsel %vm1567, %v1583, %v1584
        %v1586 = vrot.slane %v1456, 6
        %v1587 = vsel %vm1567, %v1584, %v1586
        %v1596 = vadd.f32 %v1559, %v1570
        %v1597 = vadd.f32 %v1560, %v1572
        %v1598 = vadd.f32 %v1561, %v1575
        %v1599 = vadd.f32 %v1562, %v1577
        %v1600 = vadd.f32 %v1563, %v1580
        %v1601 = vadd.f32 %v1564, %v1582
        %v1602 = vadd.f32 %v1565, %v1585
        %v1603 = vadd.f32 %v1566, %v1587
        %vm1604 = vcmask 1040384
        %v1605 = vrot.slane %v1384, 7
        %v1606 = vrot.slane %v1385, 7
        %v1607 = vsel %vm1604, %v1605, %v1606
        %v1608 = vrot.slane %v1386, 7
        %v1609 = vsel %vm1604, %v1606, %v1608
        %v1610 = vrot.slane %v1387, 7
        %v1611 = vrot.slane %v1388, 7
        %v1612 = vsel %vm1604, %v1610, %v1611
        %v1613 = vrot.slane %v1389, 7
        %v1614 = vsel %vm1604, %v1611, %v1613
        %v1615 = vrot.slane %v1390, 7
        %v1616 = vrot.slane %v1391, 7
        %v1617 = vsel %vm1604, %v1615, %v1616
        %v1618 = vrot.slane %v1392, 7
        %v1619 = vsel %vm1604, %v1616, %v1618
        %v1620 = vrot.slane %v1393, 7
        %v1621 = vrot.slane %v1394, 7
        %v1622 = vsel %vm1604, %v1620, %v1621
        %v1623 = vrot.slane %v1395, 7
        %v1624 = vsel %vm1604, %v1621, %v1623
        %v1633 = vadd.f32 %v1596, %v1607
        %v1634 = vadd.f32 %v1597, %v1609
        %v1635 = vadd.f32 %v1598, %v1612
        %v1636 = vadd.f32 %v1599, %v1614
        %v1637 = vadd.f32 %v1600, %v1617
        %v1638 = vadd.f32 %v1601, %v1619
        %v1639 = vadd.f32 %v1602, %v1622
        %v1640 = vadd.f32 %v1603, %v1624
        %v1641 = vadd.f32 %v1633, %v1324
        %v1642 = vadd.f32 %v1634, %v1325
        %v1643 = vadd.f32 %v1635, %v1327
        %v1644 = vadd.f32 %v1636, %v1328
        %v1645 = vadd.f32 %v1637, %v1330
        %v1646 = vadd.f32 %v1638, %v1331
        %v1647 = vadd.f32 %v1639, %v1333
        %v1648 = vadd.f32 %v1640, %v1334
        %v1649 = vmul.f32 %v1241, 6.3484606e-08
        %v1650 = vmul.f32 %v1245, 6.3484606e-08
        %v1651 = vmul.f32 %v1249, 6.3484606e-08
        %v1652 = vmul.f32 %v1253, 6.3484606e-08
        %v1657 = vrot.slane %v1649, 1
        %v1658 = vsel %vm1286, %v1290, %v1657
        %v1659 = vrot.slane %v1650, 1
        %v1660 = vsel %vm1286, %v1295, %v1659
        %v1661 = vrot.slane %v1651, 1
        %v1662 = vsel %vm1286, %v1300, %v1661
        %v1663 = vrot.slane %v1652, 1
        %v1664 = vsel %vm1286, %v1305, %v1663
        %v1669 = vadd.f32 %v1641, %v1291
        %v1670 = vadd.f32 %v1642, %v1658
        %v1671 = vadd.f32 %v1643, %v1296
        %v1672 = vadd.f32 %v1644, %v1660
        %v1673 = vadd.f32 %v1645, %v1301
        %v1674 = vadd.f32 %v1646, %v1662
        %v1675 = vadd.f32 %v1647, %v1306
        %v1676 = vadd.f32 %v1648, %v1664
        %v1677 = vmul.f32 %v1240, 7.834623e-12
        %v1678 = vmul.f32 %v1241, 7.834623e-12
        %v1679 = vmul.f32 %v1244, 7.834623e-12
        %v1680 = vmul.f32 %v1245, 7.834623e-12
        %v1681 = vmul.f32 %v1248, 7.834623e-12
        %v1682 = vmul.f32 %v1249, 7.834623e-12
        %v1683 = vmul.f32 %v1252, 7.834623e-12
        %v1684 = vmul.f32 %v1253, 7.834623e-12
        %v1697 = vrot.slane %v1255, 2
        %v1698 = vrot.slane %v1677, 2
        %v1699 = vsel %vm1347, %v1697, %v1698
        %v1700 = vrot.slane %v1678, 2
        %v1701 = vsel %vm1347, %v1698, %v1700
        %v1702 = vrot.slane %v1257, 2
        %v1703 = vrot.slane %v1679, 2
        %v1704 = vsel %vm1347, %v1702, %v1703
        %v1705 = vrot.slane %v1680, 2
        %v1706 = vsel %vm1347, %v1703, %v1705
        %v1707 = vrot.slane %v1259, 2
        %v1708 = vrot.slane %v1681, 2
        %v1709 = vsel %vm1347, %v1707, %v1708
        %v1710 = vrot.slane %v1682, 2
        %v1711 = vsel %vm1347, %v1708, %v1710
        %v1712 = vrot.slane %v1261, 2
        %v1713 = vrot.slane %v1683, 2
        %v1714 = vsel %vm1347, %v1712, %v1713
        %v1715 = vrot.slane %v1684, 2
        %v1716 = vsel %vm1347, %v1713, %v1715
        %v1725 = vadd.f32 %v1669, %v1699
        %v1726 = vadd.f32 %v1670, %v1701
        %v1727 = vadd.f32 %v1671, %v1704
        %v1728 = vadd.f32 %v1672, %v1706
        %v1729 = vadd.f32 %v1673, %v1709
        %v1730 = vadd.f32 %v1674, %v1711
        %v1731 = vadd.f32 %v1675, %v1714
        %v1732 = vadd.f32 %v1676, %v1716
        %v1733 = vmul.f32 %v358, 7.834623e-12
        %v1734 = vmul.f32 %v359, 7.834623e-12
        %v1735 = vmul.f32 %v360, 7.834623e-12
        %v1736 = vmul.f32 %v361, 7.834623e-12
        %v1737 = vmul.f32 %v362, 7.834623e-12
        %v1738 = vmul.f32 %v363, 7.834623e-12
        %v1739 = vmul.f32 %v364, 7.834623e-12
        %v1740 = vmul.f32 %v365, 7.834623e-12
        %v1741 = vmul.f32 %v366, 7.834623e-12
        %v1742 = vmul.f32 %v367, 7.834623e-12
        %v1743 = vmul.f32 %v368, 7.834623e-12
        %v1744 = vmul.f32 %v369, 7.834623e-12
        %v1745 = vmul.f32 %v370, 7.834623e-12
        %v1746 = vmul.f32 %v371, 7.834623e-12
        %v1747 = vmul.f32 %v372, 7.834623e-12
        %v1748 = vmul.f32 %v373, 7.834623e-12
        %v1749 = vmul.f32 %v358, 6.3484606e-08
        %v1750 = vmul.f32 %v359, 6.3484606e-08
        %v1751 = vmul.f32 %v360, 6.3484606e-08
        %v1752 = vmul.f32 %v361, 6.3484606e-08
        %v1753 = vmul.f32 %v362, 6.3484606e-08
        %v1754 = vmul.f32 %v363, 6.3484606e-08
        %v1755 = vmul.f32 %v364, 6.3484606e-08
        %v1756 = vmul.f32 %v365, 6.3484606e-08
        %v1757 = vmul.f32 %v366, 6.3484606e-08
        %v1758 = vmul.f32 %v367, 6.3484606e-08
        %v1759 = vmul.f32 %v368, 6.3484606e-08
        %v1760 = vmul.f32 %v369, 6.3484606e-08
        %v1761 = vmul.f32 %v370, 6.3484606e-08
        %v1762 = vmul.f32 %v371, 6.3484606e-08
        %v1763 = vmul.f32 %v372, 6.3484606e-08
        %v1764 = vmul.f32 %v373, 6.3484606e-08
        %1781 = vrot.lane.b32.xlu0 %v1749, 127
        %v1782 = vpop.permute.xlu0 %1781
        %1783 = vrot.lane.b32.xlu0 %v1750, 127
        %v1784 = vpop.permute.xlu0 %1783
        %1785 = vrot.lane.b32.xlu0 %v1751, 127
        %v1786 = vpop.permute.xlu0 %1785
        %1787 = vrot.lane.b32.xlu0 %v1752, 127
        %v1788 = vpop.permute.xlu0 %1787
        %1789 = vrot.lane.b32.xlu0 %v1753, 127
        %v1790 = vpop.permute.xlu0 %1789
        %1791 = vrot.lane.b32.xlu0 %v1754, 127
        %v1792 = vpop.permute.xlu0 %1791
        %1793 = vrot.lane.b32.xlu0 %v1755, 127
        %v1794 = vpop.permute.xlu0 %1793
        %1795 = vrot.lane.b32.xlu0 %v1756, 127
        %v1796 = vpop.permute.xlu0 %1795
        %1797 = vrot.lane.b32.xlu0 %v1757, 127
        %v1798 = vpop.permute.xlu0 %1797
        %1799 = vrot.lane.b32.xlu0 %v1758, 127
        %v1800 = vpop.permute.xlu0 %1799
        %1801 = vrot.lane.b32.xlu0 %v1759, 127
        %v1802 = vpop.permute.xlu0 %1801
        %1803 = vrot.lane.b32.xlu0 %v1760, 127
        %v1804 = vpop.permute.xlu0 %1803
        %1805 = vrot.lane.b32.xlu0 %v1761, 127
        %v1806 = vpop.permute.xlu0 %1805
        %1807 = vrot.lane.b32.xlu0 %v1762, 127
        %v1808 = vpop.permute.xlu0 %1807
        %1809 = vrot.lane.b32.xlu0 %v1763, 127
        %v1810 = vpop.permute.xlu0 %1809
        %1811 = vrot.lane.b32.xlu0 %v1764, 127
        %v1812 = vpop.permute.xlu0 %1811
        %v1829 = vadd.f32 %v1733, %v1782
        %v1830 = vadd.f32 %v1734, %v1784
        %v1831 = vadd.f32 %v1735, %v1786
        %v1832 = vadd.f32 %v1736, %v1788
        %v1833 = vadd.f32 %v1737, %v1790
        %v1834 = vadd.f32 %v1738, %v1792
        %v1835 = vadd.f32 %v1739, %v1794
        %v1836 = vadd.f32 %v1740, %v1796
        %v1837 = vadd.f32 %v1741, %v1798
        %v1838 = vadd.f32 %v1742, %v1800
        %v1839 = vadd.f32 %v1743, %v1802
        %v1840 = vadd.f32 %v1744, %v1804
        %v1841 = vadd.f32 %v1745, %v1806
        %v1842 = vadd.f32 %v1746, %v1808
        %v1843 = vadd.f32 %v1747, %v1810
        %v1844 = vadd.f32 %v1748, %v1812
        %v1845 = vmul.f32 %v358, 6.9619324e-05
        %v1846 = vmul.f32 %v359, 6.9619324e-05
        %v1847 = vmul.f32 %v360, 6.9619324e-05
        %v1848 = vmul.f32 %v361, 6.9619324e-05
        %v1849 = vmul.f32 %v362, 6.9619324e-05
        %v1850 = vmul.f32 %v363, 6.9619324e-05
        %v1851 = vmul.f32 %v364, 6.9619324e-05
        %v1852 = vmul.f32 %v365, 6.9619324e-05
        %v1853 = vmul.f32 %v366, 6.9619324e-05
        %v1854 = vmul.f32 %v367, 6.9619324e-05
        %v1855 = vmul.f32 %v368, 6.9619324e-05
        %v1856 = vmul.f32 %v369, 6.9619324e-05
        %v1857 = vmul.f32 %v370, 6.9619324e-05
        %v1858 = vmul.f32 %v371, 6.9619324e-05
        %v1859 = vmul.f32 %v372, 6.9619324e-05
        %v1860 = vmul.f32 %v373, 6.9619324e-05
        %1877 = vrot.lane.b32.xlu0 %v1845, 126
        %v1878 = vpop.permute.xlu0 %1877
        %1879 = vrot.lane.b32.xlu0 %v1846, 126
        %v1880 = vpop.permute.xlu0 %1879
        %1881 = vrot.lane.b32.xlu0 %v1847, 126
        %v1882 = vpop.permute.xlu0 %1881
        %1883 = vrot.lane.b32.xlu0 %v1848, 126
        %v1884 = vpop.permute.xlu0 %1883
        %1885 = vrot.lane.b32.xlu0 %v1849, 126
        %v1886 = vpop.permute.xlu0 %1885
        %1887 = vrot.lane.b32.xlu0 %v1850, 126
        %v1888 = vpop.permute.xlu0 %1887
        %1889 = vrot.lane.b32.xlu0 %v1851, 126
        %v1890 = vpop.permute.xlu0 %1889
        %1891 = vrot.lane.b32.xlu0 %v1852, 126
        %v1892 = vpop.permute.xlu0 %1891
        %1893 = vrot.lane.b32.xlu0 %v1853, 126
        %v1894 = vpop.permute.xlu0 %1893
        %1895 = vrot.lane.b32.xlu0 %v1854, 126
        %v1896 = vpop.permute.xlu0 %1895
        %1897 = vrot.lane.b32.xlu0 %v1855, 126
        %v1898 = vpop.permute.xlu0 %1897
        %1899 = vrot.lane.b32.xlu0 %v1856, 126
        %v1900 = vpop.permute.xlu0 %1899
        %1901 = vrot.lane.b32.xlu0 %v1857, 126
        %v1902 = vpop.permute.xlu0 %1901
        %1903 = vrot.lane.b32.xlu0 %v1858, 126
        %v1904 = vpop.permute.xlu0 %1903
        %1905 = vrot.lane.b32.xlu0 %v1859, 126
        %v1906 = vpop.permute.xlu0 %1905
        %1907 = vrot.lane.b32.xlu0 %v1860, 126
        %v1908 = vpop.permute.xlu0 %1907
        %v1925 = vadd.f32 %v1829, %v1878
        %v1926 = vadd.f32 %v1830, %v1880
        %v1927 = vadd.f32 %v1831, %v1882
        %v1928 = vadd.f32 %v1832, %v1884
        %v1929 = vadd.f32 %v1833, %v1886
        %v1930 = vadd.f32 %v1834, %v1888
        %v1931 = vadd.f32 %v1835, %v1890
        %v1932 = vadd.f32 %v1836, %v1892
        %v1933 = vadd.f32 %v1837, %v1894
        %v1934 = vadd.f32 %v1838, %v1896
        %v1935 = vadd.f32 %v1839, %v1898
        %v1936 = vadd.f32 %v1840, %v1900
        %v1937 = vadd.f32 %v1841, %v1902
        %v1938 = vadd.f32 %v1842, %v1904
        %v1939 = vadd.f32 %v1843, %v1906
        %v1940 = vadd.f32 %v1844, %v1908
        %v1941 = vmul.f32 %v358, 0.010332424
        %v1942 = vmul.f32 %v359, 0.010332424
        %v1943 = vmul.f32 %v360, 0.010332424
        %v1944 = vmul.f32 %v361, 0.010332424
        %v1945 = vmul.f32 %v362, 0.010332424
        %v1946 = vmul.f32 %v363, 0.010332424
        %v1947 = vmul.f32 %v364, 0.010332424
        %v1948 = vmul.f32 %v365, 0.010332424
        %v1949 = vmul.f32 %v366, 0.010332424
        %v1950 = vmul.f32 %v367, 0.010332424
        %v1951 = vmul.f32 %v368, 0.010332424
        %v1952 = vmul.f32 %v369, 0.010332424
        %v1953 = vmul.f32 %v370, 0.010332424
        %v1954 = vmul.f32 %v371, 0.010332424
        %v1955 = vmul.f32 %v372, 0.010332424
        %v1956 = vmul.f32 %v373, 0.010332424
        %1973 = vrot.lane.b32.xlu0 %v1941, 125
        %v1974 = vpop.permute.xlu0 %1973
        %1975 = vrot.lane.b32.xlu0 %v1942, 125
        %v1976 = vpop.permute.xlu0 %1975
        %1977 = vrot.lane.b32.xlu0 %v1943, 125
        %v1978 = vpop.permute.xlu0 %1977
        %1979 = vrot.lane.b32.xlu0 %v1944, 125
        %v1980 = vpop.permute.xlu0 %1979
        %1981 = vrot.lane.b32.xlu0 %v1945, 125
        %v1982 = vpop.permute.xlu0 %1981
        %1983 = vrot.lane.b32.xlu0 %v1946, 125
        %v1984 = vpop.permute.xlu0 %1983
        %1985 = vrot.lane.b32.xlu0 %v1947, 125
        %v1986 = vpop.permute.xlu0 %1985
        %1987 = vrot.lane.b32.xlu0 %v1948, 125
        %v1988 = vpop.permute.xlu0 %1987
        %1989 = vrot.lane.b32.xlu0 %v1949, 125
        %v1990 = vpop.permute.xlu0 %1989
        %1991 = vrot.lane.b32.xlu0 %v1950, 125
        %v1992 = vpop.permute.xlu0 %1991
        %1993 = vrot.lane.b32.xlu0 %v1951, 125
        %v1994 = vpop.permute.xlu0 %1993
        %1995 = vrot.lane.b32.xlu0 %v1952, 125
        %v1996 = vpop.permute.xlu0 %1995
        %1997 = vrot.lane.b32.xlu0 %v1953, 125
        %v1998 = vpop.permute.xlu0 %1997
        %1999 = vrot.lane.b32.xlu0 %v1954, 125
        %v2000 = vpop.permute.xlu0 %1999
        %2001 = vrot.lane.b32.xlu0 %v1955, 125
        %v2002 = vpop.permute.xlu0 %2001
        %2003 = vrot.lane.b32.xlu0 %v1956, 125
        %v2004 = vpop.permute.xlu0 %2003
        %v2021 = vadd.f32 %v1925, %v1974
        %v2022 = vadd.f32 %v1926, %v1976
        %v2023 = vadd.f32 %v1927, %v1978
        %v2024 = vadd.f32 %v1928, %v1980
        %v2025 = vadd.f32 %v1929, %v1982
        %v2026 = vadd.f32 %v1930, %v1984
        %v2027 = vadd.f32 %v1931, %v1986
        %v2028 = vadd.f32 %v1932, %v1988
        %v2029 = vadd.f32 %v1933, %v1990
        %v2030 = vadd.f32 %v1934, %v1992
        %v2031 = vadd.f32 %v1935, %v1994
        %v2032 = vadd.f32 %v1936, %v1996
        %v2033 = vadd.f32 %v1937, %v1998
        %v2034 = vadd.f32 %v1938, %v2000
        %v2035 = vadd.f32 %v1939, %v2002
        %v2036 = vadd.f32 %v1940, %v2004
        %v2037 = vmul.f32 %v358, 0.20753229
        %v2038 = vmul.f32 %v359, 0.20753229
        %v2039 = vmul.f32 %v360, 0.20753229
        %v2040 = vmul.f32 %v361, 0.20753229
        %v2041 = vmul.f32 %v362, 0.20753229
        %v2042 = vmul.f32 %v363, 0.20753229
        %v2043 = vmul.f32 %v364, 0.20753229
        %v2044 = vmul.f32 %v365, 0.20753229
        %v2045 = vmul.f32 %v366, 0.20753229
        %v2046 = vmul.f32 %v367, 0.20753229
        %v2047 = vmul.f32 %v368, 0.20753229
        %v2048 = vmul.f32 %v369, 0.20753229
        %v2049 = vmul.f32 %v370, 0.20753229
        %v2050 = vmul.f32 %v371, 0.20753229
        %v2051 = vmul.f32 %v372, 0.20753229
        %v2052 = vmul.f32 %v373, 0.20753229
        %2069 = vrot.lane.b32.xlu0 %v2037, 124
        %v2070 = vpop.permute.xlu0 %2069
        %2071 = vrot.lane.b32.xlu0 %v2038, 124
        %v2072 = vpop.permute.xlu0 %2071
        %2073 = vrot.lane.b32.xlu0 %v2039, 124
        %v2074 = vpop.permute.xlu0 %2073
        %2075 = vrot.lane.b32.xlu0 %v2040, 124
        %v2076 = vpop.permute.xlu0 %2075
        %2077 = vrot.lane.b32.xlu0 %v2041, 124
        %v2078 = vpop.permute.xlu0 %2077
        %2079 = vrot.lane.b32.xlu0 %v2042, 124
        %v2080 = vpop.permute.xlu0 %2079
        %2081 = vrot.lane.b32.xlu0 %v2043, 124
        %v2082 = vpop.permute.xlu0 %2081
        %2083 = vrot.lane.b32.xlu0 %v2044, 124
        %v2084 = vpop.permute.xlu0 %2083
        %2085 = vrot.lane.b32.xlu0 %v2045, 124
        %v2086 = vpop.permute.xlu0 %2085
        %2087 = vrot.lane.b32.xlu0 %v2046, 124
        %v2088 = vpop.permute.xlu0 %2087
        %2089 = vrot.lane.b32.xlu0 %v2047, 124
        %v2090 = vpop.permute.xlu0 %2089
        %2091 = vrot.lane.b32.xlu0 %v2048, 124
        %v2092 = vpop.permute.xlu0 %2091
        %2093 = vrot.lane.b32.xlu0 %v2049, 124
        %v2094 = vpop.permute.xlu0 %2093
        %2095 = vrot.lane.b32.xlu0 %v2050, 124
        %v2096 = vpop.permute.xlu0 %2095
        %2097 = vrot.lane.b32.xlu0 %v2051, 124
        %v2098 = vpop.permute.xlu0 %2097
        %2099 = vrot.lane.b32.xlu0 %v2052, 124
        %v2100 = vpop.permute.xlu0 %2099
        %v2117 = vadd.f32 %v2021, %v2070
        %v2118 = vadd.f32 %v2022, %v2072
        %v2119 = vadd.f32 %v2023, %v2074
        %v2120 = vadd.f32 %v2024, %v2076
        %v2121 = vadd.f32 %v2025, %v2078
        %v2122 = vadd.f32 %v2026, %v2080
        %v2123 = vadd.f32 %v2027, %v2082
        %v2124 = vadd.f32 %v2028, %v2084
        %v2125 = vadd.f32 %v2029, %v2086
        %v2126 = vadd.f32 %v2030, %v2088
        %v2127 = vadd.f32 %v2031, %v2090
        %v2128 = vadd.f32 %v2032, %v2092
        %v2129 = vadd.f32 %v2033, %v2094
        %v2130 = vadd.f32 %v2034, %v2096
        %v2131 = vadd.f32 %v2035, %v2098
        %v2132 = vadd.f32 %v2036, %v2100
        %v2133 = vmul.f32 %v358, 0.5641312
        %v2134 = vmul.f32 %v359, 0.5641312
        %v2135 = vmul.f32 %v360, 0.5641312
        %v2136 = vmul.f32 %v361, 0.5641312
        %v2137 = vmul.f32 %v362, 0.5641312
        %v2138 = vmul.f32 %v363, 0.5641312
        %v2139 = vmul.f32 %v364, 0.5641312
        %v2140 = vmul.f32 %v365, 0.5641312
        %v2141 = vmul.f32 %v366, 0.5641312
        %v2142 = vmul.f32 %v367, 0.5641312
        %v2143 = vmul.f32 %v368, 0.5641312
        %v2144 = vmul.f32 %v369, 0.5641312
        %v2145 = vmul.f32 %v370, 0.5641312
        %v2146 = vmul.f32 %v371, 0.5641312
        %v2147 = vmul.f32 %v372, 0.5641312
        %v2148 = vmul.f32 %v373, 0.5641312
        %2165 = vrot.lane.b32.xlu0 %v2133, 123
        %v2166 = vpop.permute.xlu0 %2165
        %2167 = vrot.lane.b32.xlu0 %v2134, 123
        %v2168 = vpop.permute.xlu0 %2167
        %2169 = vrot.lane.b32.xlu0 %v2135, 123
        %v2170 = vpop.permute.xlu0 %2169
        %2171 = vrot.lane.b32.xlu0 %v2136, 123
        %v2172 = vpop.permute.xlu0 %2171
        %2173 = vrot.lane.b32.xlu0 %v2137, 123
        %v2174 = vpop.permute.xlu0 %2173
        %2175 = vrot.lane.b32.xlu0 %v2138, 123
        %v2176 = vpop.permute.xlu0 %2175
        %2177 = vrot.lane.b32.xlu0 %v2139, 123
        %v2178 = vpop.permute.xlu0 %2177
        %2179 = vrot.lane.b32.xlu0 %v2140, 123
        %v2180 = vpop.permute.xlu0 %2179
        %2181 = vrot.lane.b32.xlu0 %v2141, 123
        %v2182 = vpop.permute.xlu0 %2181
        %2183 = vrot.lane.b32.xlu0 %v2142, 123
        %v2184 = vpop.permute.xlu0 %2183
        %2185 = vrot.lane.b32.xlu0 %v2143, 123
        %v2186 = vpop.permute.xlu0 %2185
        %2187 = vrot.lane.b32.xlu0 %v2144, 123
        %v2188 = vpop.permute.xlu0 %2187
        %2189 = vrot.lane.b32.xlu0 %v2145, 123
        %v2190 = vpop.permute.xlu0 %2189
        %2191 = vrot.lane.b32.xlu0 %v2146, 123
        %v2192 = vpop.permute.xlu0 %2191
        %2193 = vrot.lane.b32.xlu0 %v2147, 123
        %v2194 = vpop.permute.xlu0 %2193
        %2195 = vrot.lane.b32.xlu0 %v2148, 123
        %v2196 = vpop.permute.xlu0 %2195
        %v2213 = vadd.f32 %v2117, %v2166
        %v2214 = vadd.f32 %v2118, %v2168
        %v2215 = vadd.f32 %v2119, %v2170
        %v2216 = vadd.f32 %v2120, %v2172
        %v2217 = vadd.f32 %v2121, %v2174
        %v2218 = vadd.f32 %v2122, %v2176
        %v2219 = vadd.f32 %v2123, %v2178
        %v2220 = vadd.f32 %v2124, %v2180
        %v2221 = vadd.f32 %v2125, %v2182
        %v2222 = vadd.f32 %v2126, %v2184
        %v2223 = vadd.f32 %v2127, %v2186
        %v2224 = vadd.f32 %v2128, %v2188
        %v2225 = vadd.f32 %v2129, %v2190
        %v2226 = vadd.f32 %v2130, %v2192
        %v2227 = vadd.f32 %v2131, %v2194
        %v2228 = vadd.f32 %v2132, %v2196
        %2229 = vrot.lane.b32.xlu0 %v2037, 122
        %v2230 = vpop.permute.xlu0 %2229
        %2231 = vrot.lane.b32.xlu0 %v2038, 122
        %v2232 = vpop.permute.xlu0 %2231
        %2233 = vrot.lane.b32.xlu0 %v2039, 122
        %v2234 = vpop.permute.xlu0 %2233
        %2235 = vrot.lane.b32.xlu0 %v2040, 122
        %v2236 = vpop.permute.xlu0 %2235
        %2237 = vrot.lane.b32.xlu0 %v2041, 122
        %v2238 = vpop.permute.xlu0 %2237
        %2239 = vrot.lane.b32.xlu0 %v2042, 122
        %v2240 = vpop.permute.xlu0 %2239
        %2241 = vrot.lane.b32.xlu0 %v2043, 122
        %v2242 = vpop.permute.xlu0 %2241
        %2243 = vrot.lane.b32.xlu0 %v2044, 122
        %v2244 = vpop.permute.xlu0 %2243
        %2245 = vrot.lane.b32.xlu0 %v2045, 122
        %v2246 = vpop.permute.xlu0 %2245
        %2247 = vrot.lane.b32.xlu0 %v2046, 122
        %v2248 = vpop.permute.xlu0 %2247
        %2249 = vrot.lane.b32.xlu0 %v2047, 122
        %v2250 = vpop.permute.xlu0 %2249
        %2251 = vrot.lane.b32.xlu0 %v2048, 122
        %v2252 = vpop.permute.xlu0 %2251
        %2253 = vrot.lane.b32.xlu0 %v2049, 122
        %v2254 = vpop.permute.xlu0 %2253
        %2255 = vrot.lane.b32.xlu0 %v2050, 122
        %v2256 = vpop.permute.xlu0 %2255
        %2257 = vrot.lane.b32.xlu0 %v2051, 122
        %v2258 = vpop.permute.xlu0 %2257
        %2259 = vrot.lane.b32.xlu0 %v2052, 122
        %v2260 = vpop.permute.xlu0 %2259
        %v2277 = vadd.f32 %v2213, %v2230
        %v2278 = vadd.f32 %v2214, %v2232
        %v2279 = vadd.f32 %v2215, %v2234
        %v2280 = vadd.f32 %v2216, %v2236
        %v2281 = vadd.f32 %v2217, %v2238
        %v2282 = vadd.f32 %v2218, %v2240
        %v2283 = vadd.f32 %v2219, %v2242
        %v2284 = vadd.f32 %v2220, %v2244
        %v2285 = vadd.f32 %v2221, %v2246
        %v2286 = vadd.f32 %v2222, %v2248
        %v2287 = vadd.f32 %v2223, %v2250
        %v2288 = vadd.f32 %v2224, %v2252
        %v2289 = vadd.f32 %v2225, %v2254
        %v2290 = vadd.f32 %v2226, %v2256
        %v2291 = vadd.f32 %v2227, %v2258
        %v2292 = vadd.f32 %v2228, %v2260
        %2293 = vrot.lane.b32.xlu0 %v1941, 121
        %v2294 = vpop.permute.xlu0 %2293
        %2295 = vrot.lane.b32.xlu0 %v1942, 121
        %v2296 = vpop.permute.xlu0 %2295
        %2297 = vrot.lane.b32.xlu0 %v1943, 121
        %v2298 = vpop.permute.xlu0 %2297
        %2299 = vrot.lane.b32.xlu0 %v1944, 121
        %v2300 = vpop.permute.xlu0 %2299
        %2301 = vrot.lane.b32.xlu0 %v1945, 121
        %v2302 = vpop.permute.xlu0 %2301
        %2303 = vrot.lane.b32.xlu0 %v1946, 121
        %v2304 = vpop.permute.xlu0 %2303
        %2305 = vrot.lane.b32.xlu0 %v1947, 121
        %v2306 = vpop.permute.xlu0 %2305
        %2307 = vrot.lane.b32.xlu0 %v1948, 121
        %v2308 = vpop.permute.xlu0 %2307
        %2309 = vrot.lane.b32.xlu0 %v1949, 121
        %v2310 = vpop.permute.xlu0 %2309
        %2311 = vrot.lane.b32.xlu0 %v1950, 121
        %v2312 = vpop.permute.xlu0 %2311
        %2313 = vrot.lane.b32.xlu0 %v1951, 121
        %v2314 = vpop.permute.xlu0 %2313
        %2315 = vrot.lane.b32.xlu0 %v1952, 121
        %v2316 = vpop.permute.xlu0 %2315
        %2317 = vrot.lane.b32.xlu0 %v1953, 121
        %v2318 = vpop.permute.xlu0 %2317
        %2319 = vrot.lane.b32.xlu0 %v1954, 121
        %v2320 = vpop.permute.xlu0 %2319
        %2321 = vrot.lane.b32.xlu0 %v1955, 121
        %v2322 = vpop.permute.xlu0 %2321
        %2323 = vrot.lane.b32.xlu0 %v1956, 121
        %v2324 = vpop.permute.xlu0 %2323
        %v2341 = vadd.f32 %v2277, %v2294
        %v2342 = vadd.f32 %v2278, %v2296
        %v2343 = vadd.f32 %v2279, %v2298
        %v2344 = vadd.f32 %v2280, %v2300
        %v2345 = vadd.f32 %v2281, %v2302
        %v2346 = vadd.f32 %v2282, %v2304
        %v2347 = vadd.f32 %v2283, %v2306
        %v2348 = vadd.f32 %v2284, %v2308
        %v2349 = vadd.f32 %v2285, %v2310
        %v2350 = vadd.f32 %v2286, %v2312
        %v2351 = vadd.f32 %v2287, %v2314
        %v2352 = vadd.f32 %v2288, %v2316
        %v2353 = vadd.f32 %v2289, %v2318
        %v2354 = vadd.f32 %v2290, %v2320
        %v2355 = vadd.f32 %v2291, %v2322
        %v2356 = vadd.f32 %v2292, %v2324
        %2357 = vrot.lane.b32.xlu0 %v1845, 120
        %v2358 = vpop.permute.xlu0 %2357
        %2359 = vrot.lane.b32.xlu0 %v1846, 120
        %v2360 = vpop.permute.xlu0 %2359
        %2361 = vrot.lane.b32.xlu0 %v1847, 120
        %v2362 = vpop.permute.xlu0 %2361
        %2363 = vrot.lane.b32.xlu0 %v1848, 120
        %v2364 = vpop.permute.xlu0 %2363
        %2365 = vrot.lane.b32.xlu0 %v1849, 120
        %v2366 = vpop.permute.xlu0 %2365
        %2367 = vrot.lane.b32.xlu0 %v1850, 120
        %v2368 = vpop.permute.xlu0 %2367
        %2369 = vrot.lane.b32.xlu0 %v1851, 120
        %v2370 = vpop.permute.xlu0 %2369
        %2371 = vrot.lane.b32.xlu0 %v1852, 120
        %v2372 = vpop.permute.xlu0 %2371
        %2373 = vrot.lane.b32.xlu0 %v1853, 120
        %v2374 = vpop.permute.xlu0 %2373
        %2375 = vrot.lane.b32.xlu0 %v1854, 120
        %v2376 = vpop.permute.xlu0 %2375
        %2377 = vrot.lane.b32.xlu0 %v1855, 120
        %v2378 = vpop.permute.xlu0 %2377
        %2379 = vrot.lane.b32.xlu0 %v1856, 120
        %v2380 = vpop.permute.xlu0 %2379
        %2381 = vrot.lane.b32.xlu0 %v1857, 120
        %v2382 = vpop.permute.xlu0 %2381
        %2383 = vrot.lane.b32.xlu0 %v1858, 120
        %v2384 = vpop.permute.xlu0 %2383
        %2385 = vrot.lane.b32.xlu0 %v1859, 120
        %v2386 = vpop.permute.xlu0 %2385
        %2387 = vrot.lane.b32.xlu0 %v1860, 120
        %v2388 = vpop.permute.xlu0 %2387
        %v2405 = vadd.f32 %v2341, %v2358
        %v2406 = vadd.f32 %v2342, %v2360
        %v2407 = vadd.f32 %v2343, %v2362
        %v2408 = vadd.f32 %v2344, %v2364
        %v2409 = vadd.f32 %v2345, %v2366
        %v2410 = vadd.f32 %v2346, %v2368
        %v2411 = vadd.f32 %v2347, %v2370
        %v2412 = vadd.f32 %v2348, %v2372
        %v2413 = vadd.f32 %v2349, %v2374
        %v2414 = vadd.f32 %v2350, %v2376
        %v2415 = vadd.f32 %v2351, %v2378
        %v2416 = vadd.f32 %v2352, %v2380
        %v2417 = vadd.f32 %v2353, %v2382
        %v2418 = vadd.f32 %v2354, %v2384
        %v2419 = vadd.f32 %v2355, %v2386
        %v2420 = vadd.f32 %v2356, %v2388
        %2421 = vrot.lane.b32.xlu0 %v1749, 119
        %v2422 = vpop.permute.xlu0 %2421
        %2423 = vrot.lane.b32.xlu0 %v1750, 119
        %v2424 = vpop.permute.xlu0 %2423
        %2425 = vrot.lane.b32.xlu0 %v1751, 119
        %v2426 = vpop.permute.xlu0 %2425
        %2427 = vrot.lane.b32.xlu0 %v1752, 119
        %v2428 = vpop.permute.xlu0 %2427
        %2429 = vrot.lane.b32.xlu0 %v1753, 119
        %v2430 = vpop.permute.xlu0 %2429
        %2431 = vrot.lane.b32.xlu0 %v1754, 119
        %v2432 = vpop.permute.xlu0 %2431
        %2433 = vrot.lane.b32.xlu0 %v1755, 119
        %v2434 = vpop.permute.xlu0 %2433
        %2435 = vrot.lane.b32.xlu0 %v1756, 119
        %v2436 = vpop.permute.xlu0 %2435
        %2437 = vrot.lane.b32.xlu0 %v1757, 119
        %v2438 = vpop.permute.xlu0 %2437
        %2439 = vrot.lane.b32.xlu0 %v1758, 119
        %v2440 = vpop.permute.xlu0 %2439
        %2441 = vrot.lane.b32.xlu0 %v1759, 119
        %v2442 = vpop.permute.xlu0 %2441
        %2443 = vrot.lane.b32.xlu0 %v1760, 119
        %v2444 = vpop.permute.xlu0 %2443
        %2445 = vrot.lane.b32.xlu0 %v1761, 119
        %v2446 = vpop.permute.xlu0 %2445
        %2447 = vrot.lane.b32.xlu0 %v1762, 119
        %v2448 = vpop.permute.xlu0 %2447
        %2449 = vrot.lane.b32.xlu0 %v1763, 119
        %v2450 = vpop.permute.xlu0 %2449
        %2451 = vrot.lane.b32.xlu0 %v1764, 119
        %v2452 = vpop.permute.xlu0 %2451
        %v2469 = vadd.f32 %v2405, %v2422
        %v2470 = vadd.f32 %v2406, %v2424
        %v2471 = vadd.f32 %v2407, %v2426
        %v2472 = vadd.f32 %v2408, %v2428
        %v2473 = vadd.f32 %v2409, %v2430
        %v2474 = vadd.f32 %v2410, %v2432
        %v2475 = vadd.f32 %v2411, %v2434
        %v2476 = vadd.f32 %v2412, %v2436
        %v2477 = vadd.f32 %v2413, %v2438
        %v2478 = vadd.f32 %v2414, %v2440
        %v2479 = vadd.f32 %v2415, %v2442
        %v2480 = vadd.f32 %v2416, %v2444
        %v2481 = vadd.f32 %v2417, %v2446
        %v2482 = vadd.f32 %v2418, %v2448
        %v2483 = vadd.f32 %v2419, %v2450
        %v2484 = vadd.f32 %v2420, %v2452
        %2501 = vrot.lane.b32.xlu0 %v1733, 118
        %v2502 = vpop.permute.xlu0 %2501
        %2503 = vrot.lane.b32.xlu0 %v1734, 118
        %v2504 = vpop.permute.xlu0 %2503
        %2505 = vrot.lane.b32.xlu0 %v1735, 118
        %v2506 = vpop.permute.xlu0 %2505
        %2507 = vrot.lane.b32.xlu0 %v1736, 118
        %v2508 = vpop.permute.xlu0 %2507
        %2509 = vrot.lane.b32.xlu0 %v1737, 118
        %v2510 = vpop.permute.xlu0 %2509
        %2511 = vrot.lane.b32.xlu0 %v1738, 118
        %v2512 = vpop.permute.xlu0 %2511
        %2513 = vrot.lane.b32.xlu0 %v1739, 118
        %v2514 = vpop.permute.xlu0 %2513
        %2515 = vrot.lane.b32.xlu0 %v1740, 118
        %v2516 = vpop.permute.xlu0 %2515
        %2517 = vrot.lane.b32.xlu0 %v1741, 118
        %v2518 = vpop.permute.xlu0 %2517
        %2519 = vrot.lane.b32.xlu0 %v1742, 118
        %v2520 = vpop.permute.xlu0 %2519
        %2521 = vrot.lane.b32.xlu0 %v1743, 118
        %v2522 = vpop.permute.xlu0 %2521
        %2523 = vrot.lane.b32.xlu0 %v1744, 118
        %v2524 = vpop.permute.xlu0 %2523
        %2525 = vrot.lane.b32.xlu0 %v1745, 118
        %v2526 = vpop.permute.xlu0 %2525
        %2527 = vrot.lane.b32.xlu0 %v1746, 118
        %v2528 = vpop.permute.xlu0 %2527
        %2529 = vrot.lane.b32.xlu0 %v1747, 118
        %v2530 = vpop.permute.xlu0 %2529
        %2531 = vrot.lane.b32.xlu0 %v1748, 118
        %v2532 = vpop.permute.xlu0 %2531
        %v2549 = vadd.f32 %v2469, %v2502
        %v2550 = vadd.f32 %v2470, %v2504
        %v2551 = vadd.f32 %v2471, %v2506
        %v2552 = vadd.f32 %v2472, %v2508
        %v2553 = vadd.f32 %v2473, %v2510
        %v2554 = vadd.f32 %v2474, %v2512
        %v2555 = vadd.f32 %v2475, %v2514
        %v2556 = vadd.f32 %v2476, %v2516
        %v2557 = vadd.f32 %v2477, %v2518
        %v2558 = vadd.f32 %v2478, %v2520
        %v2559 = vadd.f32 %v2479, %v2522
        %v2560 = vadd.f32 %v2480, %v2524
        %v2561 = vadd.f32 %v2481, %v2526
        %v2562 = vadd.f32 %v2482, %v2528
        %v2563 = vadd.f32 %v2483, %v2530
        %v2564 = vadd.f32 %v2484, %v2532
        %v2565 = vmul.f32 %v2549, 7.834623e-12
        %v2566 = vmul.f32 %v2550, 7.834623e-12
        %v2567 = vmul.f32 %v2553, 7.834623e-12
        %v2568 = vmul.f32 %v2554, 7.834623e-12
        %v2569 = vmul.f32 %v2557, 7.834623e-12
        %v2570 = vmul.f32 %v2558, 7.834623e-12
        %v2571 = vmul.f32 %v2561, 7.834623e-12
        %v2572 = vmul.f32 %v2562, 7.834623e-12
        %v2573 = vmul.f32 %v2549, 6.3484606e-08
        %v2574 = vmul.f32 %v2550, 6.3484606e-08
        %v2575 = vmul.f32 %v2551, 6.3484606e-08
        %v2576 = vmul.f32 %v2553, 6.3484606e-08
        %v2577 = vmul.f32 %v2554, 6.3484606e-08
        %v2578 = vmul.f32 %v2555, 6.3484606e-08
        %v2579 = vmul.f32 %v2557, 6.3484606e-08
        %v2580 = vmul.f32 %v2558, 6.3484606e-08
        %v2581 = vmul.f32 %v2559, 6.3484606e-08
        %v2582 = vmul.f32 %v2561, 6.3484606e-08
        %v2583 = vmul.f32 %v2562, 6.3484606e-08
        %v2584 = vmul.f32 %v2563, 6.3484606e-08
        %v2597 = vrot.slane %v2573, 1
        %v2598 = vrot.slane %v2574, 1
        %v2599 = vsel %vm1286, %v2597, %v2598
        %v2600 = vrot.slane %v2575, 1
        %v2601 = vsel %vm1286, %v2598, %v2600
        %v2602 = vrot.slane %v2576, 1
        %v2603 = vrot.slane %v2577, 1
        %v2604 = vsel %vm1286, %v2602, %v2603
        %v2605 = vrot.slane %v2578, 1
        %v2606 = vsel %vm1286, %v2603, %v2605
        %v2607 = vrot.slane %v2579, 1
        %v2608 = vrot.slane %v2580, 1
        %v2609 = vsel %vm1286, %v2607, %v2608
        %v2610 = vrot.slane %v2581, 1
        %v2611 = vsel %vm1286, %v2608, %v2610
        %v2612 = vrot.slane %v2582, 1
        %v2613 = vrot.slane %v2583, 1
        %v2614 = vsel %vm1286, %v2612, %v2613
        %v2615 = vrot.slane %v2584, 1
        %v2616 = vsel %vm1286, %v2613, %v2615
        %v2625 = vadd.f32 %v2565, %v2599
        %v2626 = vadd.f32 %v2566, %v2601
        %v2627 = vadd.f32 %v2567, %v2604
        %v2628 = vadd.f32 %v2568, %v2606
        %v2629 = vadd.f32 %v2569, %v2609
        %v2630 = vadd.f32 %v2570, %v2611
        %v2631 = vadd.f32 %v2571, %v2614
        %v2632 = vadd.f32 %v2572, %v2616
        %v2633 = vmul.f32 %v2549, 6.9619324e-05
        %v2634 = vmul.f32 %v2550, 6.9619324e-05
        %v2635 = vmul.f32 %v2551, 6.9619324e-05
        %v2636 = vmul.f32 %v2553, 6.9619324e-05
        %v2637 = vmul.f32 %v2554, 6.9619324e-05
        %v2638 = vmul.f32 %v2555, 6.9619324e-05
        %v2639 = vmul.f32 %v2557, 6.9619324e-05
        %v2640 = vmul.f32 %v2558, 6.9619324e-05
        %v2641 = vmul.f32 %v2559, 6.9619324e-05
        %v2642 = vmul.f32 %v2561, 6.9619324e-05
        %v2643 = vmul.f32 %v2562, 6.9619324e-05
        %v2644 = vmul.f32 %v2563, 6.9619324e-05
        %v2657 = vrot.slane %v2633, 2
        %v2658 = vrot.slane %v2634, 2
        %v2659 = vsel %vm1347, %v2657, %v2658
        %v2660 = vrot.slane %v2635, 2
        %v2661 = vsel %vm1347, %v2658, %v2660
        %v2662 = vrot.slane %v2636, 2
        %v2663 = vrot.slane %v2637, 2
        %v2664 = vsel %vm1347, %v2662, %v2663
        %v2665 = vrot.slane %v2638, 2
        %v2666 = vsel %vm1347, %v2663, %v2665
        %v2667 = vrot.slane %v2639, 2
        %v2668 = vrot.slane %v2640, 2
        %v2669 = vsel %vm1347, %v2667, %v2668
        %v2670 = vrot.slane %v2641, 2
        %v2671 = vsel %vm1347, %v2668, %v2670
        %v2672 = vrot.slane %v2642, 2
        %v2673 = vrot.slane %v2643, 2
        %v2674 = vsel %vm1347, %v2672, %v2673
        %v2675 = vrot.slane %v2644, 2
        %v2676 = vsel %vm1347, %v2673, %v2675
        %v2685 = vadd.f32 %v2625, %v2659
        %v2686 = vadd.f32 %v2626, %v2661
        %v2687 = vadd.f32 %v2627, %v2664
        %v2688 = vadd.f32 %v2628, %v2666
        %v2689 = vadd.f32 %v2629, %v2669
        %v2690 = vadd.f32 %v2630, %v2671
        %v2691 = vadd.f32 %v2631, %v2674
        %v2692 = vadd.f32 %v2632, %v2676
        %v2693 = vmul.f32 %v2549, 0.010332424
        %v2694 = vmul.f32 %v2550, 0.010332424
        %v2695 = vmul.f32 %v2551, 0.010332424
        %v2696 = vmul.f32 %v2553, 0.010332424
        %v2697 = vmul.f32 %v2554, 0.010332424
        %v2698 = vmul.f32 %v2555, 0.010332424
        %v2699 = vmul.f32 %v2557, 0.010332424
        %v2700 = vmul.f32 %v2558, 0.010332424
        %v2701 = vmul.f32 %v2559, 0.010332424
        %v2702 = vmul.f32 %v2561, 0.010332424
        %v2703 = vmul.f32 %v2562, 0.010332424
        %v2704 = vmul.f32 %v2563, 0.010332424
        %v2717 = vrot.slane %v2693, 3
        %v2718 = vrot.slane %v2694, 3
        %v2719 = vsel %vm1408, %v2717, %v2718
        %v2720 = vrot.slane %v2695, 3
        %v2721 = vsel %vm1408, %v2718, %v2720
        %v2722 = vrot.slane %v2696, 3
        %v2723 = vrot.slane %v2697, 3
        %v2724 = vsel %vm1408, %v2722, %v2723
        %v2725 = vrot.slane %v2698, 3
        %v2726 = vsel %vm1408, %v2723, %v2725
        %v2727 = vrot.slane %v2699, 3
        %v2728 = vrot.slane %v2700, 3
        %v2729 = vsel %vm1408, %v2727, %v2728
        %v2730 = vrot.slane %v2701, 3
        %v2731 = vsel %vm1408, %v2728, %v2730
        %v2732 = vrot.slane %v2702, 3
        %v2733 = vrot.slane %v2703, 3
        %v2734 = vsel %vm1408, %v2732, %v2733
        %v2735 = vrot.slane %v2704, 3
        %v2736 = vsel %vm1408, %v2733, %v2735
        %v2745 = vadd.f32 %v2685, %v2719
        %v2746 = vadd.f32 %v2686, %v2721
        %v2747 = vadd.f32 %v2687, %v2724
        %v2748 = vadd.f32 %v2688, %v2726
        %v2749 = vadd.f32 %v2689, %v2729
        %v2750 = vadd.f32 %v2690, %v2731
        %v2751 = vadd.f32 %v2691, %v2734
        %v2752 = vadd.f32 %v2692, %v2736
        %v2753 = vmul.f32 %v2549, 0.20753229
        %v2754 = vmul.f32 %v2550, 0.20753229
        %v2755 = vmul.f32 %v2551, 0.20753229
        %v2756 = vmul.f32 %v2553, 0.20753229
        %v2757 = vmul.f32 %v2554, 0.20753229
        %v2758 = vmul.f32 %v2555, 0.20753229
        %v2759 = vmul.f32 %v2557, 0.20753229
        %v2760 = vmul.f32 %v2558, 0.20753229
        %v2761 = vmul.f32 %v2559, 0.20753229
        %v2762 = vmul.f32 %v2561, 0.20753229
        %v2763 = vmul.f32 %v2562, 0.20753229
        %v2764 = vmul.f32 %v2563, 0.20753229
        %v2777 = vrot.slane %v2753, 4
        %v2778 = vrot.slane %v2754, 4
        %v2779 = vsel %vm1469, %v2777, %v2778
        %v2780 = vrot.slane %v2755, 4
        %v2781 = vsel %vm1469, %v2778, %v2780
        %v2782 = vrot.slane %v2756, 4
        %v2783 = vrot.slane %v2757, 4
        %v2784 = vsel %vm1469, %v2782, %v2783
        %v2785 = vrot.slane %v2758, 4
        %v2786 = vsel %vm1469, %v2783, %v2785
        %v2787 = vrot.slane %v2759, 4
        %v2788 = vrot.slane %v2760, 4
        %v2789 = vsel %vm1469, %v2787, %v2788
        %v2790 = vrot.slane %v2761, 4
        %v2791 = vsel %vm1469, %v2788, %v2790
        %v2792 = vrot.slane %v2762, 4
        %v2793 = vrot.slane %v2763, 4
        %v2794 = vsel %vm1469, %v2792, %v2793
        %v2795 = vrot.slane %v2764, 4
        %v2796 = vsel %vm1469, %v2793, %v2795
        %v2805 = vadd.f32 %v2745, %v2779
        %v2806 = vadd.f32 %v2746, %v2781
        %v2807 = vadd.f32 %v2747, %v2784
        %v2808 = vadd.f32 %v2748, %v2786
        %v2809 = vadd.f32 %v2749, %v2789
        %v2810 = vadd.f32 %v2750, %v2791
        %v2811 = vadd.f32 %v2751, %v2794
        %v2812 = vadd.f32 %v2752, %v2796
        %v2813 = vmul.f32 %v2549, 0.5641312
        %v2814 = vmul.f32 %v2550, 0.5641312
        %v2815 = vmul.f32 %v2551, 0.5641312
        %v2816 = vmul.f32 %v2553, 0.5641312
        %v2817 = vmul.f32 %v2554, 0.5641312
        %v2818 = vmul.f32 %v2555, 0.5641312
        %v2819 = vmul.f32 %v2557, 0.5641312
        %v2820 = vmul.f32 %v2558, 0.5641312
        %v2821 = vmul.f32 %v2559, 0.5641312
        %v2822 = vmul.f32 %v2561, 0.5641312
        %v2823 = vmul.f32 %v2562, 0.5641312
        %v2824 = vmul.f32 %v2563, 0.5641312
        %v2837 = vrot.slane %v2813, 5
        %v2838 = vrot.slane %v2814, 5
        %v2839 = vsel %vm1530, %v2837, %v2838
        %v2840 = vrot.slane %v2815, 5
        %v2841 = vsel %vm1530, %v2838, %v2840
        %v2842 = vrot.slane %v2816, 5
        %v2843 = vrot.slane %v2817, 5
        %v2844 = vsel %vm1530, %v2842, %v2843
        %v2845 = vrot.slane %v2818, 5
        %v2846 = vsel %vm1530, %v2843, %v2845
        %v2847 = vrot.slane %v2819, 5
        %v2848 = vrot.slane %v2820, 5
        %v2849 = vsel %vm1530, %v2847, %v2848
        %v2850 = vrot.slane %v2821, 5
        %v2851 = vsel %vm1530, %v2848, %v2850
        %v2852 = vrot.slane %v2822, 5
        %v2853 = vrot.slane %v2823, 5
        %v2854 = vsel %vm1530, %v2852, %v2853
        %v2855 = vrot.slane %v2824, 5
        %v2856 = vsel %vm1530, %v2853, %v2855
        %v2865 = vadd.f32 %v2805, %v2839
        %v2866 = vadd.f32 %v2806, %v2841
        %v2867 = vadd.f32 %v2807, %v2844
        %v2868 = vadd.f32 %v2808, %v2846
        %v2869 = vadd.f32 %v2809, %v2849
        %v2870 = vadd.f32 %v2810, %v2851
        %v2871 = vadd.f32 %v2811, %v2854
        %v2872 = vadd.f32 %v2812, %v2856
        %v2873 = vrot.slane %v2753, 6
        %v2874 = vrot.slane %v2754, 6
        %v2875 = vsel %vm1567, %v2873, %v2874
        %v2876 = vrot.slane %v2755, 6
        %v2877 = vsel %vm1567, %v2874, %v2876
        %v2878 = vrot.slane %v2756, 6
        %v2879 = vrot.slane %v2757, 6
        %v2880 = vsel %vm1567, %v2878, %v2879
        %v2881 = vrot.slane %v2758, 6
        %v2882 = vsel %vm1567, %v2879, %v2881
        %v2883 = vrot.slane %v2759, 6
        %v2884 = vrot.slane %v2760, 6
        %v2885 = vsel %vm1567, %v2883, %v2884
        %v2886 = vrot.slane %v2761, 6
        %v2887 = vsel %vm1567, %v2884, %v2886
        %v2888 = vrot.slane %v2762, 6
        %v2889 = vrot.slane %v2763, 6
        %v2890 = vsel %vm1567, %v2888, %v2889
        %v2891 = vrot.slane %v2764, 6
        %v2892 = vsel %vm1567, %v2889, %v2891
        %v2901 = vadd.f32 %v2865, %v2875
        %v2902 = vadd.f32 %v2866, %v2877
        %v2903 = vadd.f32 %v2867, %v2880
        %v2904 = vadd.f32 %v2868, %v2882
        %v2905 = vadd.f32 %v2869, %v2885
        %v2906 = vadd.f32 %v2870, %v2887
        %v2907 = vadd.f32 %v2871, %v2890
        %v2908 = vadd.f32 %v2872, %v2892
        %v2909 = vrot.slane %v2693, 7
        %v2910 = vrot.slane %v2694, 7
        %v2911 = vsel %vm1604, %v2909, %v2910
        %v2912 = vrot.slane %v2695, 7
        %v2913 = vsel %vm1604, %v2910, %v2912
        %v2914 = vrot.slane %v2696, 7
        %v2915 = vrot.slane %v2697, 7
        %v2916 = vsel %vm1604, %v2914, %v2915
        %v2917 = vrot.slane %v2698, 7
        %v2918 = vsel %vm1604, %v2915, %v2917
        %v2919 = vrot.slane %v2699, 7
        %v2920 = vrot.slane %v2700, 7
        %v2921 = vsel %vm1604, %v2919, %v2920
        %v2922 = vrot.slane %v2701, 7
        %v2923 = vsel %vm1604, %v2920, %v2922
        %v2924 = vrot.slane %v2702, 7
        %v2925 = vrot.slane %v2703, 7
        %v2926 = vsel %vm1604, %v2924, %v2925
        %v2927 = vrot.slane %v2704, 7
        %v2928 = vsel %vm1604, %v2925, %v2927
        %v2937 = vadd.f32 %v2901, %v2911
        %v2938 = vadd.f32 %v2902, %v2913
        %v2939 = vadd.f32 %v2903, %v2916
        %v2940 = vadd.f32 %v2904, %v2918
        %v2941 = vadd.f32 %v2905, %v2921
        %v2942 = vadd.f32 %v2906, %v2923
        %v2943 = vadd.f32 %v2907, %v2926
        %v2944 = vadd.f32 %v2908, %v2928
        %v2945 = vadd.f32 %v2937, %v2634
        %v2946 = vadd.f32 %v2938, %v2635
        %v2947 = vadd.f32 %v2939, %v2637
        %v2948 = vadd.f32 %v2940, %v2638
        %v2949 = vadd.f32 %v2941, %v2640
        %v2950 = vadd.f32 %v2942, %v2641
        %v2951 = vadd.f32 %v2943, %v2643
        %v2952 = vadd.f32 %v2944, %v2644
        %v2953 = vmul.f32 %v2552, 6.3484606e-08
        %v2954 = vmul.f32 %v2556, 6.3484606e-08
        %v2955 = vmul.f32 %v2560, 6.3484606e-08
        %v2956 = vmul.f32 %v2564, 6.3484606e-08
        %v2961 = vrot.slane %v2953, 1
        %v2962 = vsel %vm1286, %v2600, %v2961
        %v2963 = vrot.slane %v2954, 1
        %v2964 = vsel %vm1286, %v2605, %v2963
        %v2965 = vrot.slane %v2955, 1
        %v2966 = vsel %vm1286, %v2610, %v2965
        %v2967 = vrot.slane %v2956, 1
        %v2968 = vsel %vm1286, %v2615, %v2967
        %v2973 = vadd.f32 %v2945, %v2601
        %v2974 = vadd.f32 %v2946, %v2962
        %v2975 = vadd.f32 %v2947, %v2606
        %v2976 = vadd.f32 %v2948, %v2964
        %v2977 = vadd.f32 %v2949, %v2611
        %v2978 = vadd.f32 %v2950, %v2966
        %v2979 = vadd.f32 %v2951, %v2616
        %v2980 = vadd.f32 %v2952, %v2968
        %v2981 = vmul.f32 %v2551, 7.834623e-12
        %v2982 = vmul.f32 %v2552, 7.834623e-12
        %v2983 = vmul.f32 %v2555, 7.834623e-12
        %v2984 = vmul.f32 %v2556, 7.834623e-12
        %v2985 = vmul.f32 %v2559, 7.834623e-12
        %v2986 = vmul.f32 %v2560, 7.834623e-12
        %v2987 = vmul.f32 %v2563, 7.834623e-12
        %v2988 = vmul.f32 %v2564, 7.834623e-12
        %v3001 = vrot.slane %v2566, 2
        %v3002 = vrot.slane %v2981, 2
        %v3003 = vsel %vm1347, %v3001, %v3002
        %v3004 = vrot.slane %v2982, 2
        %v3005 = vsel %vm1347, %v3002, %v3004
        %v3006 = vrot.slane %v2568, 2
        %v3007 = vrot.slane %v2983, 2
        %v3008 = vsel %vm1347, %v3006, %v3007
        %v3009 = vrot.slane %v2984, 2
        %v3010 = vsel %vm1347, %v3007, %v3009
        %v3011 = vrot.slane %v2570, 2
        %v3012 = vrot.slane %v2985, 2
        %v3013 = vsel %vm1347, %v3011, %v3012
        %v3014 = vrot.slane %v2986, 2
        %v3015 = vsel %vm1347, %v3012, %v3014
        %v3016 = vrot.slane %v2572, 2
        %v3017 = vrot.slane %v2987, 2
        %v3018 = vsel %vm1347, %v3016, %v3017
        %v3019 = vrot.slane %v2988, 2
        %v3020 = vsel %vm1347, %v3017, %v3019
        %v3029 = vadd.f32 %v2973, %v3003
        %v3030 = vadd.f32 %v2974, %v3005
        %v3031 = vadd.f32 %v2975, %v3008
        %v3032 = vadd.f32 %v2976, %v3010
        %v3033 = vadd.f32 %v2977, %v3013
        %v3034 = vadd.f32 %v2978, %v3015
        %v3035 = vadd.f32 %v2979, %v3018
        %v3036 = vadd.f32 %v2980, %v3020
        %v3037 = vmul.f32 %v374, 7.834623e-12
        %v3038 = vmul.f32 %v375, 7.834623e-12
        %v3039 = vmul.f32 %v376, 7.834623e-12
        %v3040 = vmul.f32 %v377, 7.834623e-12
        %v3041 = vmul.f32 %v378, 7.834623e-12
        %v3042 = vmul.f32 %v379, 7.834623e-12
        %v3043 = vmul.f32 %v380, 7.834623e-12
        %v3044 = vmul.f32 %v381, 7.834623e-12
        %v3045 = vmul.f32 %v382, 7.834623e-12
        %v3046 = vmul.f32 %v383, 7.834623e-12
        %v3047 = vmul.f32 %v384, 7.834623e-12
        %v3048 = vmul.f32 %v385, 7.834623e-12
        %v3049 = vmul.f32 %v386, 7.834623e-12
        %v3050 = vmul.f32 %v387, 7.834623e-12
        %v3051 = vmul.f32 %v388, 7.834623e-12
        %v3052 = vmul.f32 %v389, 7.834623e-12
        %v3053 = vmul.f32 %v374, 6.3484606e-08
        %v3054 = vmul.f32 %v375, 6.3484606e-08
        %v3055 = vmul.f32 %v376, 6.3484606e-08
        %v3056 = vmul.f32 %v377, 6.3484606e-08
        %v3057 = vmul.f32 %v378, 6.3484606e-08
        %v3058 = vmul.f32 %v379, 6.3484606e-08
        %v3059 = vmul.f32 %v380, 6.3484606e-08
        %v3060 = vmul.f32 %v381, 6.3484606e-08
        %v3061 = vmul.f32 %v382, 6.3484606e-08
        %v3062 = vmul.f32 %v383, 6.3484606e-08
        %v3063 = vmul.f32 %v384, 6.3484606e-08
        %v3064 = vmul.f32 %v385, 6.3484606e-08
        %v3065 = vmul.f32 %v386, 6.3484606e-08
        %v3066 = vmul.f32 %v387, 6.3484606e-08
        %v3067 = vmul.f32 %v388, 6.3484606e-08
        %v3068 = vmul.f32 %v389, 6.3484606e-08
        %3085 = vrot.lane.b32.xlu0 %v3053, 127
        %v3086 = vpop.permute.xlu0 %3085
        %3087 = vrot.lane.b32.xlu0 %v3054, 127
        %v3088 = vpop.permute.xlu0 %3087
        %3089 = vrot.lane.b32.xlu0 %v3055, 127
        %v3090 = vpop.permute.xlu0 %3089
        %3091 = vrot.lane.b32.xlu0 %v3056, 127
        %v3092 = vpop.permute.xlu0 %3091
        %3093 = vrot.lane.b32.xlu0 %v3057, 127
        %v3094 = vpop.permute.xlu0 %3093
        %3095 = vrot.lane.b32.xlu0 %v3058, 127
        %v3096 = vpop.permute.xlu0 %3095
        %3097 = vrot.lane.b32.xlu0 %v3059, 127
        %v3098 = vpop.permute.xlu0 %3097
        %3099 = vrot.lane.b32.xlu0 %v3060, 127
        %v3100 = vpop.permute.xlu0 %3099
        %3101 = vrot.lane.b32.xlu0 %v3061, 127
        %v3102 = vpop.permute.xlu0 %3101
        %3103 = vrot.lane.b32.xlu0 %v3062, 127
        %v3104 = vpop.permute.xlu0 %3103
        %3105 = vrot.lane.b32.xlu0 %v3063, 127
        %v3106 = vpop.permute.xlu0 %3105
        %3107 = vrot.lane.b32.xlu0 %v3064, 127
        %v3108 = vpop.permute.xlu0 %3107
        %3109 = vrot.lane.b32.xlu0 %v3065, 127
        %v3110 = vpop.permute.xlu0 %3109
        %3111 = vrot.lane.b32.xlu0 %v3066, 127
        %v3112 = vpop.permute.xlu0 %3111
        %3113 = vrot.lane.b32.xlu0 %v3067, 127
        %v3114 = vpop.permute.xlu0 %3113
        %3115 = vrot.lane.b32.xlu0 %v3068, 127
        %v3116 = vpop.permute.xlu0 %3115
        %v3133 = vadd.f32 %v3037, %v3086
        %v3134 = vadd.f32 %v3038, %v3088
        %v3135 = vadd.f32 %v3039, %v3090
        %v3136 = vadd.f32 %v3040, %v3092
        %v3137 = vadd.f32 %v3041, %v3094
        %v3138 = vadd.f32 %v3042, %v3096
        %v3139 = vadd.f32 %v3043, %v3098
        %v3140 = vadd.f32 %v3044, %v3100
        %v3141 = vadd.f32 %v3045, %v3102
        %v3142 = vadd.f32 %v3046, %v3104
        %v3143 = vadd.f32 %v3047, %v3106
        %v3144 = vadd.f32 %v3048, %v3108
        %v3145 = vadd.f32 %v3049, %v3110
        %v3146 = vadd.f32 %v3050, %v3112
        %v3147 = vadd.f32 %v3051, %v3114
        %v3148 = vadd.f32 %v3052, %v3116
        %v3149 = vmul.f32 %v374, 6.9619324e-05
        %v3150 = vmul.f32 %v375, 6.9619324e-05
        %v3151 = vmul.f32 %v376, 6.9619324e-05
        %v3152 = vmul.f32 %v377, 6.9619324e-05
        %v3153 = vmul.f32 %v378, 6.9619324e-05
        %v3154 = vmul.f32 %v379, 6.9619324e-05
        %v3155 = vmul.f32 %v380, 6.9619324e-05
        %v3156 = vmul.f32 %v381, 6.9619324e-05
        %v3157 = vmul.f32 %v382, 6.9619324e-05
        %v3158 = vmul.f32 %v383, 6.9619324e-05
        %v3159 = vmul.f32 %v384, 6.9619324e-05
        %v3160 = vmul.f32 %v385, 6.9619324e-05
        %v3161 = vmul.f32 %v386, 6.9619324e-05
        %v3162 = vmul.f32 %v387, 6.9619324e-05
        %v3163 = vmul.f32 %v388, 6.9619324e-05
        %v3164 = vmul.f32 %v389, 6.9619324e-05
        %3181 = vrot.lane.b32.xlu0 %v3149, 126
        %v3182 = vpop.permute.xlu0 %3181
        %3183 = vrot.lane.b32.xlu0 %v3150, 126
        %v3184 = vpop.permute.xlu0 %3183
        %3185 = vrot.lane.b32.xlu0 %v3151, 126
        %v3186 = vpop.permute.xlu0 %3185
        %3187 = vrot.lane.b32.xlu0 %v3152, 126
        %v3188 = vpop.permute.xlu0 %3187
        %3189 = vrot.lane.b32.xlu0 %v3153, 126
        %v3190 = vpop.permute.xlu0 %3189
        %3191 = vrot.lane.b32.xlu0 %v3154, 126
        %v3192 = vpop.permute.xlu0 %3191
        %3193 = vrot.lane.b32.xlu0 %v3155, 126
        %v3194 = vpop.permute.xlu0 %3193
        %3195 = vrot.lane.b32.xlu0 %v3156, 126
        %v3196 = vpop.permute.xlu0 %3195
        %3197 = vrot.lane.b32.xlu0 %v3157, 126
        %v3198 = vpop.permute.xlu0 %3197
        %3199 = vrot.lane.b32.xlu0 %v3158, 126
        %v3200 = vpop.permute.xlu0 %3199
        %3201 = vrot.lane.b32.xlu0 %v3159, 126
        %v3202 = vpop.permute.xlu0 %3201
        %3203 = vrot.lane.b32.xlu0 %v3160, 126
        %v3204 = vpop.permute.xlu0 %3203
        %3205 = vrot.lane.b32.xlu0 %v3161, 126
        %v3206 = vpop.permute.xlu0 %3205
        %3207 = vrot.lane.b32.xlu0 %v3162, 126
        %v3208 = vpop.permute.xlu0 %3207
        %3209 = vrot.lane.b32.xlu0 %v3163, 126
        %v3210 = vpop.permute.xlu0 %3209
        %3211 = vrot.lane.b32.xlu0 %v3164, 126
        %v3212 = vpop.permute.xlu0 %3211
        %v3229 = vadd.f32 %v3133, %v3182
        %v3230 = vadd.f32 %v3134, %v3184
        %v3231 = vadd.f32 %v3135, %v3186
        %v3232 = vadd.f32 %v3136, %v3188
        %v3233 = vadd.f32 %v3137, %v3190
        %v3234 = vadd.f32 %v3138, %v3192
        %v3235 = vadd.f32 %v3139, %v3194
        %v3236 = vadd.f32 %v3140, %v3196
        %v3237 = vadd.f32 %v3141, %v3198
        %v3238 = vadd.f32 %v3142, %v3200
        %v3239 = vadd.f32 %v3143, %v3202
        %v3240 = vadd.f32 %v3144, %v3204
        %v3241 = vadd.f32 %v3145, %v3206
        %v3242 = vadd.f32 %v3146, %v3208
        %v3243 = vadd.f32 %v3147, %v3210
        %v3244 = vadd.f32 %v3148, %v3212
        %v3245 = vmul.f32 %v374, 0.010332424
        %v3246 = vmul.f32 %v375, 0.010332424
        %v3247 = vmul.f32 %v376, 0.010332424
        %v3248 = vmul.f32 %v377, 0.010332424
        %v3249 = vmul.f32 %v378, 0.010332424
        %v3250 = vmul.f32 %v379, 0.010332424
        %v3251 = vmul.f32 %v380, 0.010332424
        %v3252 = vmul.f32 %v381, 0.010332424
        %v3253 = vmul.f32 %v382, 0.010332424
        %v3254 = vmul.f32 %v383, 0.010332424
        %v3255 = vmul.f32 %v384, 0.010332424
        %v3256 = vmul.f32 %v385, 0.010332424
        %v3257 = vmul.f32 %v386, 0.010332424
        %v3258 = vmul.f32 %v387, 0.010332424
        %v3259 = vmul.f32 %v388, 0.010332424
        %v3260 = vmul.f32 %v389, 0.010332424
        %3277 = vrot.lane.b32.xlu0 %v3245, 125
        %v3278 = vpop.permute.xlu0 %3277
        %3279 = vrot.lane.b32.xlu0 %v3246, 125
        %v3280 = vpop.permute.xlu0 %3279
        %3281 = vrot.lane.b32.xlu0 %v3247, 125
        %v3282 = vpop.permute.xlu0 %3281
        %3283 = vrot.lane.b32.xlu0 %v3248, 125
        %v3284 = vpop.permute.xlu0 %3283
        %3285 = vrot.lane.b32.xlu0 %v3249, 125
        %v3286 = vpop.permute.xlu0 %3285
        %3287 = vrot.lane.b32.xlu0 %v3250, 125
        %v3288 = vpop.permute.xlu0 %3287
        %3289 = vrot.lane.b32.xlu0 %v3251, 125
        %v3290 = vpop.permute.xlu0 %3289
        %3291 = vrot.lane.b32.xlu0 %v3252, 125
        %v3292 = vpop.permute.xlu0 %3291
        %3293 = vrot.lane.b32.xlu0 %v3253, 125
        %v3294 = vpop.permute.xlu0 %3293
        %3295 = vrot.lane.b32.xlu0 %v3254, 125
        %v3296 = vpop.permute.xlu0 %3295
        %3297 = vrot.lane.b32.xlu0 %v3255, 125
        %v3298 = vpop.permute.xlu0 %3297
        %3299 = vrot.lane.b32.xlu0 %v3256, 125
        %v3300 = vpop.permute.xlu0 %3299
        %3301 = vrot.lane.b32.xlu0 %v3257, 125
        %v3302 = vpop.permute.xlu0 %3301
        %3303 = vrot.lane.b32.xlu0 %v3258, 125
        %v3304 = vpop.permute.xlu0 %3303
        %3305 = vrot.lane.b32.xlu0 %v3259, 125
        %v3306 = vpop.permute.xlu0 %3305
        %3307 = vrot.lane.b32.xlu0 %v3260, 125
        %v3308 = vpop.permute.xlu0 %3307
        %v3325 = vadd.f32 %v3229, %v3278
        %v3326 = vadd.f32 %v3230, %v3280
        %v3327 = vadd.f32 %v3231, %v3282
        %v3328 = vadd.f32 %v3232, %v3284
        %v3329 = vadd.f32 %v3233, %v3286
        %v3330 = vadd.f32 %v3234, %v3288
        %v3331 = vadd.f32 %v3235, %v3290
        %v3332 = vadd.f32 %v3236, %v3292
        %v3333 = vadd.f32 %v3237, %v3294
        %v3334 = vadd.f32 %v3238, %v3296
        %v3335 = vadd.f32 %v3239, %v3298
        %v3336 = vadd.f32 %v3240, %v3300
        %v3337 = vadd.f32 %v3241, %v3302
        %v3338 = vadd.f32 %v3242, %v3304
        %v3339 = vadd.f32 %v3243, %v3306
        %v3340 = vadd.f32 %v3244, %v3308
        %v3341 = vmul.f32 %v374, 0.20753229
        %v3342 = vmul.f32 %v375, 0.20753229
        %v3343 = vmul.f32 %v376, 0.20753229
        %v3344 = vmul.f32 %v377, 0.20753229
        %v3345 = vmul.f32 %v378, 0.20753229
        %v3346 = vmul.f32 %v379, 0.20753229
        %v3347 = vmul.f32 %v380, 0.20753229
        %v3348 = vmul.f32 %v381, 0.20753229
        %v3349 = vmul.f32 %v382, 0.20753229
        %v3350 = vmul.f32 %v383, 0.20753229
        %v3351 = vmul.f32 %v384, 0.20753229
        %v3352 = vmul.f32 %v385, 0.20753229
        %v3353 = vmul.f32 %v386, 0.20753229
        %v3354 = vmul.f32 %v387, 0.20753229
        %v3355 = vmul.f32 %v388, 0.20753229
        %v3356 = vmul.f32 %v389, 0.20753229
        %3373 = vrot.lane.b32.xlu0 %v3341, 124
        %v3374 = vpop.permute.xlu0 %3373
        %3375 = vrot.lane.b32.xlu0 %v3342, 124
        %v3376 = vpop.permute.xlu0 %3375
        %3377 = vrot.lane.b32.xlu0 %v3343, 124
        %v3378 = vpop.permute.xlu0 %3377
        %3379 = vrot.lane.b32.xlu0 %v3344, 124
        %v3380 = vpop.permute.xlu0 %3379
        %3381 = vrot.lane.b32.xlu0 %v3345, 124
        %v3382 = vpop.permute.xlu0 %3381
        %3383 = vrot.lane.b32.xlu0 %v3346, 124
        %v3384 = vpop.permute.xlu0 %3383
        %3385 = vrot.lane.b32.xlu0 %v3347, 124
        %v3386 = vpop.permute.xlu0 %3385
        %3387 = vrot.lane.b32.xlu0 %v3348, 124
        %v3388 = vpop.permute.xlu0 %3387
        %3389 = vrot.lane.b32.xlu0 %v3349, 124
        %v3390 = vpop.permute.xlu0 %3389
        %3391 = vrot.lane.b32.xlu0 %v3350, 124
        %v3392 = vpop.permute.xlu0 %3391
        %3393 = vrot.lane.b32.xlu0 %v3351, 124
        %v3394 = vpop.permute.xlu0 %3393
        %3395 = vrot.lane.b32.xlu0 %v3352, 124
        %v3396 = vpop.permute.xlu0 %3395
        %3397 = vrot.lane.b32.xlu0 %v3353, 124
        %v3398 = vpop.permute.xlu0 %3397
        %3399 = vrot.lane.b32.xlu0 %v3354, 124
        %v3400 = vpop.permute.xlu0 %3399
        %3401 = vrot.lane.b32.xlu0 %v3355, 124
        %v3402 = vpop.permute.xlu0 %3401
        %3403 = vrot.lane.b32.xlu0 %v3356, 124
        %v3404 = vpop.permute.xlu0 %3403
        %v3421 = vadd.f32 %v3325, %v3374
        %v3422 = vadd.f32 %v3326, %v3376
        %v3423 = vadd.f32 %v3327, %v3378
        %v3424 = vadd.f32 %v3328, %v3380
        %v3425 = vadd.f32 %v3329, %v3382
        %v3426 = vadd.f32 %v3330, %v3384
        %v3427 = vadd.f32 %v3331, %v3386
        %v3428 = vadd.f32 %v3332, %v3388
        %v3429 = vadd.f32 %v3333, %v3390
        %v3430 = vadd.f32 %v3334, %v3392
        %v3431 = vadd.f32 %v3335, %v3394
        %v3432 = vadd.f32 %v3336, %v3396
        %v3433 = vadd.f32 %v3337, %v3398
        %v3434 = vadd.f32 %v3338, %v3400
        %v3435 = vadd.f32 %v3339, %v3402
        %v3436 = vadd.f32 %v3340, %v3404
        %v3437 = vmul.f32 %v374, 0.5641312
        %v3438 = vmul.f32 %v375, 0.5641312
        %v3439 = vmul.f32 %v376, 0.5641312
        %v3440 = vmul.f32 %v377, 0.5641312
        %v3441 = vmul.f32 %v378, 0.5641312
        %v3442 = vmul.f32 %v379, 0.5641312
        %v3443 = vmul.f32 %v380, 0.5641312
        %v3444 = vmul.f32 %v381, 0.5641312
        %v3445 = vmul.f32 %v382, 0.5641312
        %v3446 = vmul.f32 %v383, 0.5641312
        %v3447 = vmul.f32 %v384, 0.5641312
        %v3448 = vmul.f32 %v385, 0.5641312
        %v3449 = vmul.f32 %v386, 0.5641312
        %v3450 = vmul.f32 %v387, 0.5641312
        %v3451 = vmul.f32 %v388, 0.5641312
        %v3452 = vmul.f32 %v389, 0.5641312
        %3469 = vrot.lane.b32.xlu0 %v3437, 123
        %v3470 = vpop.permute.xlu0 %3469
        %3471 = vrot.lane.b32.xlu0 %v3438, 123
        %v3472 = vpop.permute.xlu0 %3471
        %3473 = vrot.lane.b32.xlu0 %v3439, 123
        %v3474 = vpop.permute.xlu0 %3473
        %3475 = vrot.lane.b32.xlu0 %v3440, 123
        %v3476 = vpop.permute.xlu0 %3475
        %3477 = vrot.lane.b32.xlu0 %v3441, 123
        %v3478 = vpop.permute.xlu0 %3477
        %3479 = vrot.lane.b32.xlu0 %v3442, 123
        %v3480 = vpop.permute.xlu0 %3479
        %3481 = vrot.lane.b32.xlu0 %v3443, 123
        %v3482 = vpop.permute.xlu0 %3481
        %3483 = vrot.lane.b32.xlu0 %v3444, 123
        %v3484 = vpop.permute.xlu0 %3483
        %3485 = vrot.lane.b32.xlu0 %v3445, 123
        %v3486 = vpop.permute.xlu0 %3485
        %3487 = vrot.lane.b32.xlu0 %v3446, 123
        %v3488 = vpop.permute.xlu0 %3487
        %3489 = vrot.lane.b32.xlu0 %v3447, 123
        %v3490 = vpop.permute.xlu0 %3489
        %3491 = vrot.lane.b32.xlu0 %v3448, 123
        %v3492 = vpop.permute.xlu0 %3491
        %3493 = vrot.lane.b32.xlu0 %v3449, 123
        %v3494 = vpop.permute.xlu0 %3493
        %3495 = vrot.lane.b32.xlu0 %v3450, 123
        %v3496 = vpop.permute.xlu0 %3495
        %3497 = vrot.lane.b32.xlu0 %v3451, 123
        %v3498 = vpop.permute.xlu0 %3497
        %3499 = vrot.lane.b32.xlu0 %v3452, 123
        %v3500 = vpop.permute.xlu0 %3499
        %v3517 = vadd.f32 %v3421, %v3470
        %v3518 = vadd.f32 %v3422, %v3472
        %v3519 = vadd.f32 %v3423, %v3474
        %v3520 = vadd.f32 %v3424, %v3476
        %v3521 = vadd.f32 %v3425, %v3478
        %v3522 = vadd.f32 %v3426, %v3480
        %v3523 = vadd.f32 %v3427, %v3482
        %v3524 = vadd.f32 %v3428, %v3484
        %v3525 = vadd.f32 %v3429, %v3486
        %v3526 = vadd.f32 %v3430, %v3488
        %v3527 = vadd.f32 %v3431, %v3490
        %v3528 = vadd.f32 %v3432, %v3492
        %v3529 = vadd.f32 %v3433, %v3494
        %v3530 = vadd.f32 %v3434, %v3496
        %v3531 = vadd.f32 %v3435, %v3498
        %v3532 = vadd.f32 %v3436, %v3500
        %3533 = vrot.lane.b32.xlu0 %v3341, 122
        %v3534 = vpop.permute.xlu0 %3533
        %3535 = vrot.lane.b32.xlu0 %v3342, 122
        %v3536 = vpop.permute.xlu0 %3535
        %3537 = vrot.lane.b32.xlu0 %v3343, 122
        %v3538 = vpop.permute.xlu0 %3537
        %3539 = vrot.lane.b32.xlu0 %v3344, 122
        %v3540 = vpop.permute.xlu0 %3539
        %3541 = vrot.lane.b32.xlu0 %v3345, 122
        %v3542 = vpop.permute.xlu0 %3541
        %3543 = vrot.lane.b32.xlu0 %v3346, 122
        %v3544 = vpop.permute.xlu0 %3543
        %3545 = vrot.lane.b32.xlu0 %v3347, 122
        %v3546 = vpop.permute.xlu0 %3545
        %3547 = vrot.lane.b32.xlu0 %v3348, 122
        %v3548 = vpop.permute.xlu0 %3547
        %3549 = vrot.lane.b32.xlu0 %v3349, 122
        %v3550 = vpop.permute.xlu0 %3549
        %3551 = vrot.lane.b32.xlu0 %v3350, 122
        %v3552 = vpop.permute.xlu0 %3551
        %3553 = vrot.lane.b32.xlu0 %v3351, 122
        %v3554 = vpop.permute.xlu0 %3553
        %3555 = vrot.lane.b32.xlu0 %v3352, 122
        %v3556 = vpop.permute.xlu0 %3555
        %3557 = vrot.lane.b32.xlu0 %v3353, 122
        %v3558 = vpop.permute.xlu0 %3557
        %3559 = vrot.lane.b32.xlu0 %v3354, 122
        %v3560 = vpop.permute.xlu0 %3559
        %3561 = vrot.lane.b32.xlu0 %v3355, 122
        %v3562 = vpop.permute.xlu0 %3561
        %3563 = vrot.lane.b32.xlu0 %v3356, 122
        %v3564 = vpop.permute.xlu0 %3563
        %v3581 = vadd.f32 %v3517, %v3534
        %v3582 = vadd.f32 %v3518, %v3536
        %v3583 = vadd.f32 %v3519, %v3538
        %v3584 = vadd.f32 %v3520, %v3540
        %v3585 = vadd.f32 %v3521, %v3542
        %v3586 = vadd.f32 %v3522, %v3544
        %v3587 = vadd.f32 %v3523, %v3546
        %v3588 = vadd.f32 %v3524, %v3548
        %v3589 = vadd.f32 %v3525, %v3550
        %v3590 = vadd.f32 %v3526, %v3552
        %v3591 = vadd.f32 %v3527, %v3554
        %v3592 = vadd.f32 %v3528, %v3556
        %v3593 = vadd.f32 %v3529, %v3558
        %v3594 = vadd.f32 %v3530, %v3560
        %v3595 = vadd.f32 %v3531, %v3562
        %v3596 = vadd.f32 %v3532, %v3564
        %3597 = vrot.lane.b32.xlu0 %v3245, 121
        %v3598 = vpop.permute.xlu0 %3597
        %3599 = vrot.lane.b32.xlu0 %v3246, 121
        %v3600 = vpop.permute.xlu0 %3599
        %3601 = vrot.lane.b32.xlu0 %v3247, 121
        %v3602 = vpop.permute.xlu0 %3601
        %3603 = vrot.lane.b32.xlu0 %v3248, 121
        %v3604 = vpop.permute.xlu0 %3603
        %3605 = vrot.lane.b32.xlu0 %v3249, 121
        %v3606 = vpop.permute.xlu0 %3605
        %3607 = vrot.lane.b32.xlu0 %v3250, 121
        %v3608 = vpop.permute.xlu0 %3607
        %3609 = vrot.lane.b32.xlu0 %v3251, 121
        %v3610 = vpop.permute.xlu0 %3609
        %3611 = vrot.lane.b32.xlu0 %v3252, 121
        %v3612 = vpop.permute.xlu0 %3611
        %3613 = vrot.lane.b32.xlu0 %v3253, 121
        %v3614 = vpop.permute.xlu0 %3613
        %3615 = vrot.lane.b32.xlu0 %v3254, 121
        %v3616 = vpop.permute.xlu0 %3615
        %3617 = vrot.lane.b32.xlu0 %v3255, 121
        %v3618 = vpop.permute.xlu0 %3617
        %3619 = vrot.lane.b32.xlu0 %v3256, 121
        %v3620 = vpop.permute.xlu0 %3619
        %3621 = vrot.lane.b32.xlu0 %v3257, 121
        %v3622 = vpop.permute.xlu0 %3621
        %3623 = vrot.lane.b32.xlu0 %v3258, 121
        %v3624 = vpop.permute.xlu0 %3623
        %3625 = vrot.lane.b32.xlu0 %v3259, 121
        %v3626 = vpop.permute.xlu0 %3625
        %3627 = vrot.lane.b32.xlu0 %v3260, 121
        %v3628 = vpop.permute.xlu0 %3627
        %v3645 = vadd.f32 %v3581, %v3598
        %v3646 = vadd.f32 %v3582, %v3600
        %v3647 = vadd.f32 %v3583, %v3602
        %v3648 = vadd.f32 %v3584, %v3604
        %v3649 = vadd.f32 %v3585, %v3606
        %v3650 = vadd.f32 %v3586, %v3608
        %v3651 = vadd.f32 %v3587, %v3610
        %v3652 = vadd.f32 %v3588, %v3612
        %v3653 = vadd.f32 %v3589, %v3614
        %v3654 = vadd.f32 %v3590, %v3616
        %v3655 = vadd.f32 %v3591, %v3618
        %v3656 = vadd.f32 %v3592, %v3620
        %v3657 = vadd.f32 %v3593, %v3622
        %v3658 = vadd.f32 %v3594, %v3624
        %v3659 = vadd.f32 %v3595, %v3626
        %v3660 = vadd.f32 %v3596, %v3628
        %3661 = vrot.lane.b32.xlu0 %v3149, 120
        %v3662 = vpop.permute.xlu0 %3661
        %3663 = vrot.lane.b32.xlu0 %v3150, 120
        %v3664 = vpop.permute.xlu0 %3663
        %3665 = vrot.lane.b32.xlu0 %v3151, 120
        %v3666 = vpop.permute.xlu0 %3665
        %3667 = vrot.lane.b32.xlu0 %v3152, 120
        %v3668 = vpop.permute.xlu0 %3667
        %3669 = vrot.lane.b32.xlu0 %v3153, 120
        %v3670 = vpop.permute.xlu0 %3669
        %3671 = vrot.lane.b32.xlu0 %v3154, 120
        %v3672 = vpop.permute.xlu0 %3671
        %3673 = vrot.lane.b32.xlu0 %v3155, 120
        %v3674 = vpop.permute.xlu0 %3673
        %3675 = vrot.lane.b32.xlu0 %v3156, 120
        %v3676 = vpop.permute.xlu0 %3675
        %3677 = vrot.lane.b32.xlu0 %v3157, 120
        %v3678 = vpop.permute.xlu0 %3677
        %3679 = vrot.lane.b32.xlu0 %v3158, 120
        %v3680 = vpop.permute.xlu0 %3679
        %3681 = vrot.lane.b32.xlu0 %v3159, 120
        %v3682 = vpop.permute.xlu0 %3681
        %3683 = vrot.lane.b32.xlu0 %v3160, 120
        %v3684 = vpop.permute.xlu0 %3683
        %3685 = vrot.lane.b32.xlu0 %v3161, 120
        %v3686 = vpop.permute.xlu0 %3685
        %3687 = vrot.lane.b32.xlu0 %v3162, 120
        %v3688 = vpop.permute.xlu0 %3687
        %3689 = vrot.lane.b32.xlu0 %v3163, 120
        %v3690 = vpop.permute.xlu0 %3689
        %3691 = vrot.lane.b32.xlu0 %v3164, 120
        %v3692 = vpop.permute.xlu0 %3691
        %v3709 = vadd.f32 %v3645, %v3662
        %v3710 = vadd.f32 %v3646, %v3664
        %v3711 = vadd.f32 %v3647, %v3666
        %v3712 = vadd.f32 %v3648, %v3668
        %v3713 = vadd.f32 %v3649, %v3670
        %v3714 = vadd.f32 %v3650, %v3672
        %v3715 = vadd.f32 %v3651, %v3674
        %v3716 = vadd.f32 %v3652, %v3676
        %v3717 = vadd.f32 %v3653, %v3678
        %v3718 = vadd.f32 %v3654, %v3680
        %v3719 = vadd.f32 %v3655, %v3682
        %v3720 = vadd.f32 %v3656, %v3684
        %v3721 = vadd.f32 %v3657, %v3686
        %v3722 = vadd.f32 %v3658, %v3688
        %v3723 = vadd.f32 %v3659, %v3690
        %v3724 = vadd.f32 %v3660, %v3692
        %3725 = vrot.lane.b32.xlu0 %v3053, 119
        %v3726 = vpop.permute.xlu0 %3725
        %3727 = vrot.lane.b32.xlu0 %v3054, 119
        %v3728 = vpop.permute.xlu0 %3727
        %3729 = vrot.lane.b32.xlu0 %v3055, 119
        %v3730 = vpop.permute.xlu0 %3729
        %3731 = vrot.lane.b32.xlu0 %v3056, 119
        %v3732 = vpop.permute.xlu0 %3731
        %3733 = vrot.lane.b32.xlu0 %v3057, 119
        %v3734 = vpop.permute.xlu0 %3733
        %3735 = vrot.lane.b32.xlu0 %v3058, 119
        %v3736 = vpop.permute.xlu0 %3735
        %3737 = vrot.lane.b32.xlu0 %v3059, 119
        %v3738 = vpop.permute.xlu0 %3737
        %3739 = vrot.lane.b32.xlu0 %v3060, 119
        %v3740 = vpop.permute.xlu0 %3739
        %3741 = vrot.lane.b32.xlu0 %v3061, 119
        %v3742 = vpop.permute.xlu0 %3741
        %3743 = vrot.lane.b32.xlu0 %v3062, 119
        %v3744 = vpop.permute.xlu0 %3743
        %3745 = vrot.lane.b32.xlu0 %v3063, 119
        %v3746 = vpop.permute.xlu0 %3745
        %3747 = vrot.lane.b32.xlu0 %v3064, 119
        %v3748 = vpop.permute.xlu0 %3747
        %3749 = vrot.lane.b32.xlu0 %v3065, 119
        %v3750 = vpop.permute.xlu0 %3749
        %3751 = vrot.lane.b32.xlu0 %v3066, 119
        %v3752 = vpop.permute.xlu0 %3751
        %3753 = vrot.lane.b32.xlu0 %v3067, 119
        %v3754 = vpop.permute.xlu0 %3753
        %3755 = vrot.lane.b32.xlu0 %v3068, 119
        %v3756 = vpop.permute.xlu0 %3755
        %v3773 = vadd.f32 %v3709, %v3726
        %v3774 = vadd.f32 %v3710, %v3728
        %v3775 = vadd.f32 %v3711, %v3730
        %v3776 = vadd.f32 %v3712, %v3732
        %v3777 = vadd.f32 %v3713, %v3734
        %v3778 = vadd.f32 %v3714, %v3736
        %v3779 = vadd.f32 %v3715, %v3738
        %v3780 = vadd.f32 %v3716, %v3740
        %v3781 = vadd.f32 %v3717, %v3742
        %v3782 = vadd.f32 %v3718, %v3744
        %v3783 = vadd.f32 %v3719, %v3746
        %v3784 = vadd.f32 %v3720, %v3748
        %v3785 = vadd.f32 %v3721, %v3750
        %v3786 = vadd.f32 %v3722, %v3752
        %v3787 = vadd.f32 %v3723, %v3754
        %v3788 = vadd.f32 %v3724, %v3756
        %3805 = vrot.lane.b32.xlu0 %v3037, 118
        %v3806 = vpop.permute.xlu0 %3805
        %3807 = vrot.lane.b32.xlu0 %v3038, 118
        %v3808 = vpop.permute.xlu0 %3807
        %3809 = vrot.lane.b32.xlu0 %v3039, 118
        %v3810 = vpop.permute.xlu0 %3809
        %3811 = vrot.lane.b32.xlu0 %v3040, 118
        %v3812 = vpop.permute.xlu0 %3811
        %3813 = vrot.lane.b32.xlu0 %v3041, 118
        %v3814 = vpop.permute.xlu0 %3813
        %3815 = vrot.lane.b32.xlu0 %v3042, 118
        %v3816 = vpop.permute.xlu0 %3815
        %3817 = vrot.lane.b32.xlu0 %v3043, 118
        %v3818 = vpop.permute.xlu0 %3817
        %3819 = vrot.lane.b32.xlu0 %v3044, 118
        %v3820 = vpop.permute.xlu0 %3819
        %3821 = vrot.lane.b32.xlu0 %v3045, 118
        %v3822 = vpop.permute.xlu0 %3821
        %3823 = vrot.lane.b32.xlu0 %v3046, 118
        %v3824 = vpop.permute.xlu0 %3823
        %3825 = vrot.lane.b32.xlu0 %v3047, 118
        %v3826 = vpop.permute.xlu0 %3825
        %3827 = vrot.lane.b32.xlu0 %v3048, 118
        %v3828 = vpop.permute.xlu0 %3827
        %3829 = vrot.lane.b32.xlu0 %v3049, 118
        %v3830 = vpop.permute.xlu0 %3829
        %3831 = vrot.lane.b32.xlu0 %v3050, 118
        %v3832 = vpop.permute.xlu0 %3831
        %3833 = vrot.lane.b32.xlu0 %v3051, 118
        %v3834 = vpop.permute.xlu0 %3833
        %3835 = vrot.lane.b32.xlu0 %v3052, 118
        %v3836 = vpop.permute.xlu0 %3835
        %v3853 = vadd.f32 %v3773, %v3806
        %v3854 = vadd.f32 %v3774, %v3808
        %v3855 = vadd.f32 %v3775, %v3810
        %v3856 = vadd.f32 %v3776, %v3812
        %v3857 = vadd.f32 %v3777, %v3814
        %v3858 = vadd.f32 %v3778, %v3816
        %v3859 = vadd.f32 %v3779, %v3818
        %v3860 = vadd.f32 %v3780, %v3820
        %v3861 = vadd.f32 %v3781, %v3822
        %v3862 = vadd.f32 %v3782, %v3824
        %v3863 = vadd.f32 %v3783, %v3826
        %v3864 = vadd.f32 %v3784, %v3828
        %v3865 = vadd.f32 %v3785, %v3830
        %v3866 = vadd.f32 %v3786, %v3832
        %v3867 = vadd.f32 %v3787, %v3834
        %v3868 = vadd.f32 %v3788, %v3836
        %v3869 = vmul.f32 %v3853, 7.834623e-12
        %v3870 = vmul.f32 %v3854, 7.834623e-12
        %v3871 = vmul.f32 %v3857, 7.834623e-12
        %v3872 = vmul.f32 %v3858, 7.834623e-12
        %v3873 = vmul.f32 %v3861, 7.834623e-12
        %v3874 = vmul.f32 %v3862, 7.834623e-12
        %v3875 = vmul.f32 %v3865, 7.834623e-12
        %v3876 = vmul.f32 %v3866, 7.834623e-12
        %v3877 = vmul.f32 %v3853, 6.3484606e-08
        %v3878 = vmul.f32 %v3854, 6.3484606e-08
        %v3879 = vmul.f32 %v3855, 6.3484606e-08
        %v3880 = vmul.f32 %v3857, 6.3484606e-08
        %v3881 = vmul.f32 %v3858, 6.3484606e-08
        %v3882 = vmul.f32 %v3859, 6.3484606e-08
        %v3883 = vmul.f32 %v3861, 6.3484606e-08
        %v3884 = vmul.f32 %v3862, 6.3484606e-08
        %v3885 = vmul.f32 %v3863, 6.3484606e-08
        %v3886 = vmul.f32 %v3865, 6.3484606e-08
        %v3887 = vmul.f32 %v3866, 6.3484606e-08
        %v3888 = vmul.f32 %v3867, 6.3484606e-08
        %v3901 = vrot.slane %v3877, 1
        %v3902 = vrot.slane %v3878, 1
        %v3903 = vsel %vm1286, %v3901, %v3902
        %v3904 = vrot.slane %v3879, 1
        %v3905 = vsel %vm1286, %v3902, %v3904
        %v3906 = vrot.slane %v3880, 1
        %v3907 = vrot.slane %v3881, 1
        %v3908 = vsel %vm1286, %v3906, %v3907
        %v3909 = vrot.slane %v3882, 1
        %v3910 = vsel %vm1286, %v3907, %v3909
        %v3911 = vrot.slane %v3883, 1
        %v3912 = vrot.slane %v3884, 1
        %v3913 = vsel %vm1286, %v3911, %v3912
        %v3914 = vrot.slane %v3885, 1
        %v3915 = vsel %vm1286, %v3912, %v3914
        %v3916 = vrot.slane %v3886, 1
        %v3917 = vrot.slane %v3887, 1
        %v3918 = vsel %vm1286, %v3916, %v3917
        %v3919 = vrot.slane %v3888, 1
        %v3920 = vsel %vm1286, %v3917, %v3919
        %v3929 = vadd.f32 %v3869, %v3903
        %v3930 = vadd.f32 %v3870, %v3905
        %v3931 = vadd.f32 %v3871, %v3908
        %v3932 = vadd.f32 %v3872, %v3910
        %v3933 = vadd.f32 %v3873, %v3913
        %v3934 = vadd.f32 %v3874, %v3915
        %v3935 = vadd.f32 %v3875, %v3918
        %v3936 = vadd.f32 %v3876, %v3920
        %v3937 = vmul.f32 %v3853, 6.9619324e-05
        %v3938 = vmul.f32 %v3854, 6.9619324e-05
        %v3939 = vmul.f32 %v3855, 6.9619324e-05
        %v3940 = vmul.f32 %v3857, 6.9619324e-05
        %v3941 = vmul.f32 %v3858, 6.9619324e-05
        %v3942 = vmul.f32 %v3859, 6.9619324e-05
        %v3943 = vmul.f32 %v3861, 6.9619324e-05
        %v3944 = vmul.f32 %v3862, 6.9619324e-05
        %v3945 = vmul.f32 %v3863, 6.9619324e-05
        %v3946 = vmul.f32 %v3865, 6.9619324e-05
        %v3947 = vmul.f32 %v3866, 6.9619324e-05
        %v3948 = vmul.f32 %v3867, 6.9619324e-05
        %v3961 = vrot.slane %v3937, 2
        %v3962 = vrot.slane %v3938, 2
        %v3963 = vsel %vm1347, %v3961, %v3962
        %v3964 = vrot.slane %v3939, 2
        %v3965 = vsel %vm1347, %v3962, %v3964
        %v3966 = vrot.slane %v3940, 2
        %v3967 = vrot.slane %v3941, 2
        %v3968 = vsel %vm1347, %v3966, %v3967
        %v3969 = vrot.slane %v3942, 2
        %v3970 = vsel %vm1347, %v3967, %v3969
        %v3971 = vrot.slane %v3943, 2
        %v3972 = vrot.slane %v3944, 2
        %v3973 = vsel %vm1347, %v3971, %v3972
        %v3974 = vrot.slane %v3945, 2
        %v3975 = vsel %vm1347, %v3972, %v3974
        %v3976 = vrot.slane %v3946, 2
        %v3977 = vrot.slane %v3947, 2
        %v3978 = vsel %vm1347, %v3976, %v3977
        %v3979 = vrot.slane %v3948, 2
        %v3980 = vsel %vm1347, %v3977, %v3979
        %v3989 = vadd.f32 %v3929, %v3963
        %v3990 = vadd.f32 %v3930, %v3965
        %v3991 = vadd.f32 %v3931, %v3968
        %v3992 = vadd.f32 %v3932, %v3970
        %v3993 = vadd.f32 %v3933, %v3973
        %v3994 = vadd.f32 %v3934, %v3975
        %v3995 = vadd.f32 %v3935, %v3978
        %v3996 = vadd.f32 %v3936, %v3980
        %v3997 = vmul.f32 %v3853, 0.010332424
        %v3998 = vmul.f32 %v3854, 0.010332424
        %v3999 = vmul.f32 %v3855, 0.010332424
        %v4000 = vmul.f32 %v3857, 0.010332424
        %v4001 = vmul.f32 %v3858, 0.010332424
        %v4002 = vmul.f32 %v3859, 0.010332424
        %v4003 = vmul.f32 %v3861, 0.010332424
        %v4004 = vmul.f32 %v3862, 0.010332424
        %v4005 = vmul.f32 %v3863, 0.010332424
        %v4006 = vmul.f32 %v3865, 0.010332424
        %v4007 = vmul.f32 %v3866, 0.010332424
        %v4008 = vmul.f32 %v3867, 0.010332424
        %v4021 = vrot.slane %v3997, 3
        %v4022 = vrot.slane %v3998, 3
        %v4023 = vsel %vm1408, %v4021, %v4022
        %v4024 = vrot.slane %v3999, 3
        %v4025 = vsel %vm1408, %v4022, %v4024
        %v4026 = vrot.slane %v4000, 3
        %v4027 = vrot.slane %v4001, 3
        %v4028 = vsel %vm1408, %v4026, %v4027
        %v4029 = vrot.slane %v4002, 3
        %v4030 = vsel %vm1408, %v4027, %v4029
        %v4031 = vrot.slane %v4003, 3
        %v4032 = vrot.slane %v4004, 3
        %v4033 = vsel %vm1408, %v4031, %v4032
        %v4034 = vrot.slane %v4005, 3
        %v4035 = vsel %vm1408, %v4032, %v4034
        %v4036 = vrot.slane %v4006, 3
        %v4037 = vrot.slane %v4007, 3
        %v4038 = vsel %vm1408, %v4036, %v4037
        %v4039 = vrot.slane %v4008, 3
        %v4040 = vsel %vm1408, %v4037, %v4039
        %v4049 = vadd.f32 %v3989, %v4023
        %v4050 = vadd.f32 %v3990, %v4025
        %v4051 = vadd.f32 %v3991, %v4028
        %v4052 = vadd.f32 %v3992, %v4030
        %v4053 = vadd.f32 %v3993, %v4033
        %v4054 = vadd.f32 %v3994, %v4035
        %v4055 = vadd.f32 %v3995, %v4038
        %v4056 = vadd.f32 %v3996, %v4040
        %v4057 = vmul.f32 %v3853, 0.20753229
        %v4058 = vmul.f32 %v3854, 0.20753229
        %v4059 = vmul.f32 %v3855, 0.20753229
        %v4060 = vmul.f32 %v3857, 0.20753229
        %v4061 = vmul.f32 %v3858, 0.20753229
        %v4062 = vmul.f32 %v3859, 0.20753229
        %v4063 = vmul.f32 %v3861, 0.20753229
        %v4064 = vmul.f32 %v3862, 0.20753229
        %v4065 = vmul.f32 %v3863, 0.20753229
        %v4066 = vmul.f32 %v3865, 0.20753229
        %v4067 = vmul.f32 %v3866, 0.20753229
        %v4068 = vmul.f32 %v3867, 0.20753229
        %v4081 = vrot.slane %v4057, 4
        %v4082 = vrot.slane %v4058, 4
        %v4083 = vsel %vm1469, %v4081, %v4082
        %v4084 = vrot.slane %v4059, 4
        %v4085 = vsel %vm1469, %v4082, %v4084
        %v4086 = vrot.slane %v4060, 4
        %v4087 = vrot.slane %v4061, 4
        %v4088 = vsel %vm1469, %v4086, %v4087
        %v4089 = vrot.slane %v4062, 4
        %v4090 = vsel %vm1469, %v4087, %v4089
        %v4091 = vrot.slane %v4063, 4
        %v4092 = vrot.slane %v4064, 4
        %v4093 = vsel %vm1469, %v4091, %v4092
        %v4094 = vrot.slane %v4065, 4
        %v4095 = vsel %vm1469, %v4092, %v4094
        %v4096 = vrot.slane %v4066, 4
        %v4097 = vrot.slane %v4067, 4
        %v4098 = vsel %vm1469, %v4096, %v4097
        %v4099 = vrot.slane %v4068, 4
        %v4100 = vsel %vm1469, %v4097, %v4099
        %v4109 = vadd.f32 %v4049, %v4083
        %v4110 = vadd.f32 %v4050, %v4085
        %v4111 = vadd.f32 %v4051, %v4088
        %v4112 = vadd.f32 %v4052, %v4090
        %v4113 = vadd.f32 %v4053, %v4093
        %v4114 = vadd.f32 %v4054, %v4095
        %v4115 = vadd.f32 %v4055, %v4098
        %v4116 = vadd.f32 %v4056, %v4100
        %v4117 = vmul.f32 %v3853, 0.5641312
        %v4118 = vmul.f32 %v3854, 0.5641312
        %v4119 = vmul.f32 %v3855, 0.5641312
        %v4120 = vmul.f32 %v3857, 0.5641312
        %v4121 = vmul.f32 %v3858, 0.5641312
        %v4122 = vmul.f32 %v3859, 0.5641312
        %v4123 = vmul.f32 %v3861, 0.5641312
        %v4124 = vmul.f32 %v3862, 0.5641312
        %v4125 = vmul.f32 %v3863, 0.5641312
        %v4126 = vmul.f32 %v3865, 0.5641312
        %v4127 = vmul.f32 %v3866, 0.5641312
        %v4128 = vmul.f32 %v3867, 0.5641312
        %v4141 = vrot.slane %v4117, 5
        %v4142 = vrot.slane %v4118, 5
        %v4143 = vsel %vm1530, %v4141, %v4142
        %v4144 = vrot.slane %v4119, 5
        %v4145 = vsel %vm1530, %v4142, %v4144
        %v4146 = vrot.slane %v4120, 5
        %v4147 = vrot.slane %v4121, 5
        %v4148 = vsel %vm1530, %v4146, %v4147
        %v4149 = vrot.slane %v4122, 5
        %v4150 = vsel %vm1530, %v4147, %v4149
        %v4151 = vrot.slane %v4123, 5
        %v4152 = vrot.slane %v4124, 5
        %v4153 = vsel %vm1530, %v4151, %v4152
        %v4154 = vrot.slane %v4125, 5
        %v4155 = vsel %vm1530, %v4152, %v4154
        %v4156 = vrot.slane %v4126, 5
        %v4157 = vrot.slane %v4127, 5
        %v4158 = vsel %vm1530, %v4156, %v4157
        %v4159 = vrot.slane %v4128, 5
        %v4160 = vsel %vm1530, %v4157, %v4159
        %v4169 = vadd.f32 %v4109, %v4143
        %v4170 = vadd.f32 %v4110, %v4145
        %v4171 = vadd.f32 %v4111, %v4148
        %v4172 = vadd.f32 %v4112, %v4150
        %v4173 = vadd.f32 %v4113, %v4153
        %v4174 = vadd.f32 %v4114, %v4155
        %v4175 = vadd.f32 %v4115, %v4158
        %v4176 = vadd.f32 %v4116, %v4160
        %v4177 = vrot.slane %v4057, 6
        %v4178 = vrot.slane %v4058, 6
        %v4179 = vsel %vm1567, %v4177, %v4178
        %v4180 = vrot.slane %v4059, 6
        %v4181 = vsel %vm1567, %v4178, %v4180
        %v4182 = vrot.slane %v4060, 6
        %v4183 = vrot.slane %v4061, 6
        %v4184 = vsel %vm1567, %v4182, %v4183
        %v4185 = vrot.slane %v4062, 6
        %v4186 = vsel %vm1567, %v4183, %v4185
        %v4187 = vrot.slane %v4063, 6
        %v4188 = vrot.slane %v4064, 6
        %v4189 = vsel %vm1567, %v4187, %v4188
        %v4190 = vrot.slane %v4065, 6
        %v4191 = vsel %vm1567, %v4188, %v4190
        %v4192 = vrot.slane %v4066, 6
        %v4193 = vrot.slane %v4067, 6
        %v4194 = vsel %vm1567, %v4192, %v4193
        %v4195 = vrot.slane %v4068, 6
        %v4196 = vsel %vm1567, %v4193, %v4195
        %v4205 = vadd.f32 %v4169, %v4179
        %v4206 = vadd.f32 %v4170, %v4181
        %v4207 = vadd.f32 %v4171, %v4184
        %v4208 = vadd.f32 %v4172, %v4186
        %v4209 = vadd.f32 %v4173, %v4189
        %v4210 = vadd.f32 %v4174, %v4191
        %v4211 = vadd.f32 %v4175, %v4194
        %v4212 = vadd.f32 %v4176, %v4196
        %v4213 = vrot.slane %v3997, 7
        %v4214 = vrot.slane %v3998, 7
        %v4215 = vsel %vm1604, %v4213, %v4214
        %v4216 = vrot.slane %v3999, 7
        %v4217 = vsel %vm1604, %v4214, %v4216
        %v4218 = vrot.slane %v4000, 7
        %v4219 = vrot.slane %v4001, 7
        %v4220 = vsel %vm1604, %v4218, %v4219
        %v4221 = vrot.slane %v4002, 7
        %v4222 = vsel %vm1604, %v4219, %v4221
        %v4223 = vrot.slane %v4003, 7
        %v4224 = vrot.slane %v4004, 7
        %v4225 = vsel %vm1604, %v4223, %v4224
        %v4226 = vrot.slane %v4005, 7
        %v4227 = vsel %vm1604, %v4224, %v4226
        %v4228 = vrot.slane %v4006, 7
        %v4229 = vrot.slane %v4007, 7
        %v4230 = vsel %vm1604, %v4228, %v4229
        %v4231 = vrot.slane %v4008, 7
        %v4232 = vsel %vm1604, %v4229, %v4231
        %v4241 = vadd.f32 %v4205, %v4215
        %v4242 = vadd.f32 %v4206, %v4217
        %v4243 = vadd.f32 %v4207, %v4220
        %v4244 = vadd.f32 %v4208, %v4222
        %v4245 = vadd.f32 %v4209, %v4225
        %v4246 = vadd.f32 %v4210, %v4227
        %v4247 = vadd.f32 %v4211, %v4230
        %v4248 = vadd.f32 %v4212, %v4232
        %v4249 = vadd.f32 %v4241, %v3938
        %v4250 = vadd.f32 %v4242, %v3939
        %v4251 = vadd.f32 %v4243, %v3941
        %v4252 = vadd.f32 %v4244, %v3942
        %v4253 = vadd.f32 %v4245, %v3944
        %v4254 = vadd.f32 %v4246, %v3945
        %v4255 = vadd.f32 %v4247, %v3947
        %v4256 = vadd.f32 %v4248, %v3948
        %v4257 = vmul.f32 %v3856, 6.3484606e-08
        %v4258 = vmul.f32 %v3860, 6.3484606e-08
        %v4259 = vmul.f32 %v3864, 6.3484606e-08
        %v4260 = vmul.f32 %v3868, 6.3484606e-08
        %v4265 = vrot.slane %v4257, 1
        %v4266 = vsel %vm1286, %v3904, %v4265
        %v4267 = vrot.slane %v4258, 1
        %v4268 = vsel %vm1286, %v3909, %v4267
        %v4269 = vrot.slane %v4259, 1
        %v4270 = vsel %vm1286, %v3914, %v4269
        %v4271 = vrot.slane %v4260, 1
        %v4272 = vsel %vm1286, %v3919, %v4271
        %v4277 = vadd.f32 %v4249, %v3905
        %v4278 = vadd.f32 %v4250, %v4266
        %v4279 = vadd.f32 %v4251, %v3910
        %v4280 = vadd.f32 %v4252, %v4268
        %v4281 = vadd.f32 %v4253, %v3915
        %v4282 = vadd.f32 %v4254, %v4270
        %v4283 = vadd.f32 %v4255, %v3920
        %v4284 = vadd.f32 %v4256, %v4272
        %v4285 = vmul.f32 %v3855, 7.834623e-12
        %v4286 = vmul.f32 %v3856, 7.834623e-12
        %v4287 = vmul.f32 %v3859, 7.834623e-12
        %v4288 = vmul.f32 %v3860, 7.834623e-12
        %v4289 = vmul.f32 %v3863, 7.834623e-12
        %v4290 = vmul.f32 %v3864, 7.834623e-12
        %v4291 = vmul.f32 %v3867, 7.834623e-12
        %v4292 = vmul.f32 %v3868, 7.834623e-12
        %v4305 = vrot.slane %v3870, 2
        %v4306 = vrot.slane %v4285, 2
        %v4307 = vsel %vm1347, %v4305, %v4306
        %v4308 = vrot.slane %v4286, 2
        %v4309 = vsel %vm1347, %v4306, %v4308
        %v4310 = vrot.slane %v3872, 2
        %v4311 = vrot.slane %v4287, 2
        %v4312 = vsel %vm1347, %v4310, %v4311
        %v4313 = vrot.slane %v4288, 2
        %v4314 = vsel %vm1347, %v4311, %v4313
        %v4315 = vrot.slane %v3874, 2
        %v4316 = vrot.slane %v4289, 2
        %v4317 = vsel %vm1347, %v4315, %v4316
        %v4318 = vrot.slane %v4290, 2
        %v4319 = vsel %vm1347, %v4316, %v4318
        %v4320 = vrot.slane %v3876, 2
        %v4321 = vrot.slane %v4291, 2
        %v4322 = vsel %vm1347, %v4320, %v4321
        %v4323 = vrot.slane %v4292, 2
        %v4324 = vsel %vm1347, %v4321, %v4323
        %v4333 = vadd.f32 %v4277, %v4307
        %v4334 = vadd.f32 %v4278, %v4309
        %v4335 = vadd.f32 %v4279, %v4312
        %v4336 = vadd.f32 %v4280, %v4314
        %v4337 = vadd.f32 %v4281, %v4317
        %v4338 = vadd.f32 %v4282, %v4319
        %v4339 = vadd.f32 %v4283, %v4322
        %v4340 = vadd.f32 %v4284, %v4324
        %v4341 = vmul.f32 %v390, 7.834623e-12
        %v4342 = vmul.f32 %v391, 7.834623e-12
        %v4343 = vmul.f32 %v392, 7.834623e-12
        %v4344 = vmul.f32 %v393, 7.834623e-12
        %v4345 = vmul.f32 %v394, 7.834623e-12
        %v4346 = vmul.f32 %v395, 7.834623e-12
        %v4347 = vmul.f32 %v396, 7.834623e-12
        %v4348 = vmul.f32 %v397, 7.834623e-12
        %v4349 = vmul.f32 %v398, 7.834623e-12
        %v4350 = vmul.f32 %v399, 7.834623e-12
        %v4351 = vmul.f32 %v400, 7.834623e-12
        %v4352 = vmul.f32 %v401, 7.834623e-12
        %v4353 = vmul.f32 %v402, 7.834623e-12
        %v4354 = vmul.f32 %v403, 7.834623e-12
        %v4355 = vmul.f32 %v404, 7.834623e-12
        %v4356 = vmul.f32 %v405, 7.834623e-12
        %v4357 = vmul.f32 %v390, 6.3484606e-08
        %v4358 = vmul.f32 %v391, 6.3484606e-08
        %v4359 = vmul.f32 %v392, 6.3484606e-08
        %v4360 = vmul.f32 %v393, 6.3484606e-08
        %v4361 = vmul.f32 %v394, 6.3484606e-08
        %v4362 = vmul.f32 %v395, 6.3484606e-08
        %v4363 = vmul.f32 %v396, 6.3484606e-08
        %v4364 = vmul.f32 %v397, 6.3484606e-08
        %v4365 = vmul.f32 %v398, 6.3484606e-08
        %v4366 = vmul.f32 %v399, 6.3484606e-08
        %v4367 = vmul.f32 %v400, 6.3484606e-08
        %v4368 = vmul.f32 %v401, 6.3484606e-08
        %v4369 = vmul.f32 %v402, 6.3484606e-08
        %v4370 = vmul.f32 %v403, 6.3484606e-08
        %v4371 = vmul.f32 %v404, 6.3484606e-08
        %v4372 = vmul.f32 %v405, 6.3484606e-08
        %4389 = vrot.lane.b32.xlu0 %v4357, 127
        %v4390 = vpop.permute.xlu0 %4389
        %4391 = vrot.lane.b32.xlu0 %v4358, 127
        %v4392 = vpop.permute.xlu0 %4391
        %4393 = vrot.lane.b32.xlu0 %v4359, 127
        %v4394 = vpop.permute.xlu0 %4393
        %4395 = vrot.lane.b32.xlu0 %v4360, 127
        %v4396 = vpop.permute.xlu0 %4395
        %4397 = vrot.lane.b32.xlu0 %v4361, 127
        %v4398 = vpop.permute.xlu0 %4397
        %4399 = vrot.lane.b32.xlu0 %v4362, 127
        %v4400 = vpop.permute.xlu0 %4399
        %4401 = vrot.lane.b32.xlu0 %v4363, 127
        %v4402 = vpop.permute.xlu0 %4401
        %4403 = vrot.lane.b32.xlu0 %v4364, 127
        %v4404 = vpop.permute.xlu0 %4403
        %4405 = vrot.lane.b32.xlu0 %v4365, 127
        %v4406 = vpop.permute.xlu0 %4405
        %4407 = vrot.lane.b32.xlu0 %v4366, 127
        %v4408 = vpop.permute.xlu0 %4407
        %4409 = vrot.lane.b32.xlu0 %v4367, 127
        %v4410 = vpop.permute.xlu0 %4409
        %4411 = vrot.lane.b32.xlu0 %v4368, 127
        %v4412 = vpop.permute.xlu0 %4411
        %4413 = vrot.lane.b32.xlu0 %v4369, 127
        %v4414 = vpop.permute.xlu0 %4413
        %4415 = vrot.lane.b32.xlu0 %v4370, 127
        %v4416 = vpop.permute.xlu0 %4415
        %4417 = vrot.lane.b32.xlu0 %v4371, 127
        %v4418 = vpop.permute.xlu0 %4417
        %4419 = vrot.lane.b32.xlu0 %v4372, 127
        %v4420 = vpop.permute.xlu0 %4419
        %v4437 = vadd.f32 %v4341, %v4390
        %v4438 = vadd.f32 %v4342, %v4392
        %v4439 = vadd.f32 %v4343, %v4394
        %v4440 = vadd.f32 %v4344, %v4396
        %v4441 = vadd.f32 %v4345, %v4398
        %v4442 = vadd.f32 %v4346, %v4400
        %v4443 = vadd.f32 %v4347, %v4402
        %v4444 = vadd.f32 %v4348, %v4404
        %v4445 = vadd.f32 %v4349, %v4406
        %v4446 = vadd.f32 %v4350, %v4408
        %v4447 = vadd.f32 %v4351, %v4410
        %v4448 = vadd.f32 %v4352, %v4412
        %v4449 = vadd.f32 %v4353, %v4414
        %v4450 = vadd.f32 %v4354, %v4416
        %v4451 = vadd.f32 %v4355, %v4418
        %v4452 = vadd.f32 %v4356, %v4420
        %v4453 = vmul.f32 %v390, 6.9619324e-05
        %v4454 = vmul.f32 %v391, 6.9619324e-05
        %v4455 = vmul.f32 %v392, 6.9619324e-05
        %v4456 = vmul.f32 %v393, 6.9619324e-05
        %v4457 = vmul.f32 %v394, 6.9619324e-05
        %v4458 = vmul.f32 %v395, 6.9619324e-05
        %v4459 = vmul.f32 %v396, 6.9619324e-05
        %v4460 = vmul.f32 %v397, 6.9619324e-05
        %v4461 = vmul.f32 %v398, 6.9619324e-05
        %v4462 = vmul.f32 %v399, 6.9619324e-05
        %v4463 = vmul.f32 %v400, 6.9619324e-05
        %v4464 = vmul.f32 %v401, 6.9619324e-05
        %v4465 = vmul.f32 %v402, 6.9619324e-05
        %v4466 = vmul.f32 %v403, 6.9619324e-05
        %v4467 = vmul.f32 %v404, 6.9619324e-05
        %v4468 = vmul.f32 %v405, 6.9619324e-05
        %4485 = vrot.lane.b32.xlu0 %v4453, 126
        %v4486 = vpop.permute.xlu0 %4485
        %4487 = vrot.lane.b32.xlu0 %v4454, 126
        %v4488 = vpop.permute.xlu0 %4487
        %4489 = vrot.lane.b32.xlu0 %v4455, 126
        %v4490 = vpop.permute.xlu0 %4489
        %4491 = vrot.lane.b32.xlu0 %v4456, 126
        %v4492 = vpop.permute.xlu0 %4491
        %4493 = vrot.lane.b32.xlu0 %v4457, 126
        %v4494 = vpop.permute.xlu0 %4493
        %4495 = vrot.lane.b32.xlu0 %v4458, 126
        %v4496 = vpop.permute.xlu0 %4495
        %4497 = vrot.lane.b32.xlu0 %v4459, 126
        %v4498 = vpop.permute.xlu0 %4497
        %4499 = vrot.lane.b32.xlu0 %v4460, 126
        %v4500 = vpop.permute.xlu0 %4499
        %4501 = vrot.lane.b32.xlu0 %v4461, 126
        %v4502 = vpop.permute.xlu0 %4501
        %4503 = vrot.lane.b32.xlu0 %v4462, 126
        %v4504 = vpop.permute.xlu0 %4503
        %4505 = vrot.lane.b32.xlu0 %v4463, 126
        %v4506 = vpop.permute.xlu0 %4505
        %4507 = vrot.lane.b32.xlu0 %v4464, 126
        %v4508 = vpop.permute.xlu0 %4507
        %4509 = vrot.lane.b32.xlu0 %v4465, 126
        %v4510 = vpop.permute.xlu0 %4509
        %4511 = vrot.lane.b32.xlu0 %v4466, 126
        %v4512 = vpop.permute.xlu0 %4511
        %4513 = vrot.lane.b32.xlu0 %v4467, 126
        %v4514 = vpop.permute.xlu0 %4513
        %4515 = vrot.lane.b32.xlu0 %v4468, 126
        %v4516 = vpop.permute.xlu0 %4515
        %v4533 = vadd.f32 %v4437, %v4486
        %v4534 = vadd.f32 %v4438, %v4488
        %v4535 = vadd.f32 %v4439, %v4490
        %v4536 = vadd.f32 %v4440, %v4492
        %v4537 = vadd.f32 %v4441, %v4494
        %v4538 = vadd.f32 %v4442, %v4496
        %v4539 = vadd.f32 %v4443, %v4498
        %v4540 = vadd.f32 %v4444, %v4500
        %v4541 = vadd.f32 %v4445, %v4502
        %v4542 = vadd.f32 %v4446, %v4504
        %v4543 = vadd.f32 %v4447, %v4506
        %v4544 = vadd.f32 %v4448, %v4508
        %v4545 = vadd.f32 %v4449, %v4510
        %v4546 = vadd.f32 %v4450, %v4512
        %v4547 = vadd.f32 %v4451, %v4514
        %v4548 = vadd.f32 %v4452, %v4516
        %v4549 = vmul.f32 %v390, 0.010332424
        %v4550 = vmul.f32 %v391, 0.010332424
        %v4551 = vmul.f32 %v392, 0.010332424
        %v4552 = vmul.f32 %v393, 0.010332424
        %v4553 = vmul.f32 %v394, 0.010332424
        %v4554 = vmul.f32 %v395, 0.010332424
        %v4555 = vmul.f32 %v396, 0.010332424
        %v4556 = vmul.f32 %v397, 0.010332424
        %v4557 = vmul.f32 %v398, 0.010332424
        %v4558 = vmul.f32 %v399, 0.010332424
        %v4559 = vmul.f32 %v400, 0.010332424
        %v4560 = vmul.f32 %v401, 0.010332424
        %v4561 = vmul.f32 %v402, 0.010332424
        %v4562 = vmul.f32 %v403, 0.010332424
        %v4563 = vmul.f32 %v404, 0.010332424
        %v4564 = vmul.f32 %v405, 0.010332424
        %4581 = vrot.lane.b32.xlu0 %v4549, 125
        %v4582 = vpop.permute.xlu0 %4581
        %4583 = vrot.lane.b32.xlu0 %v4550, 125
        %v4584 = vpop.permute.xlu0 %4583
        %4585 = vrot.lane.b32.xlu0 %v4551, 125
        %v4586 = vpop.permute.xlu0 %4585
        %4587 = vrot.lane.b32.xlu0 %v4552, 125
        %v4588 = vpop.permute.xlu0 %4587
        %4589 = vrot.lane.b32.xlu0 %v4553, 125
        %v4590 = vpop.permute.xlu0 %4589
        %4591 = vrot.lane.b32.xlu0 %v4554, 125
        %v4592 = vpop.permute.xlu0 %4591
        %4593 = vrot.lane.b32.xlu0 %v4555, 125
        %v4594 = vpop.permute.xlu0 %4593
        %4595 = vrot.lane.b32.xlu0 %v4556, 125
        %v4596 = vpop.permute.xlu0 %4595
        %4597 = vrot.lane.b32.xlu0 %v4557, 125
        %v4598 = vpop.permute.xlu0 %4597
        %4599 = vrot.lane.b32.xlu0 %v4558, 125
        %v4600 = vpop.permute.xlu0 %4599
        %4601 = vrot.lane.b32.xlu0 %v4559, 125
        %v4602 = vpop.permute.xlu0 %4601
        %4603 = vrot.lane.b32.xlu0 %v4560, 125
        %v4604 = vpop.permute.xlu0 %4603
        %4605 = vrot.lane.b32.xlu0 %v4561, 125
        %v4606 = vpop.permute.xlu0 %4605
        %4607 = vrot.lane.b32.xlu0 %v4562, 125
        %v4608 = vpop.permute.xlu0 %4607
        %4609 = vrot.lane.b32.xlu0 %v4563, 125
        %v4610 = vpop.permute.xlu0 %4609
        %4611 = vrot.lane.b32.xlu0 %v4564, 125
        %v4612 = vpop.permute.xlu0 %4611
        %v4629 = vadd.f32 %v4533, %v4582
        %v4630 = vadd.f32 %v4534, %v4584
        %v4631 = vadd.f32 %v4535, %v4586
        %v4632 = vadd.f32 %v4536, %v4588
        %v4633 = vadd.f32 %v4537, %v4590
        %v4634 = vadd.f32 %v4538, %v4592
        %v4635 = vadd.f32 %v4539, %v4594
        %v4636 = vadd.f32 %v4540, %v4596
        %v4637 = vadd.f32 %v4541, %v4598
        %v4638 = vadd.f32 %v4542, %v4600
        %v4639 = vadd.f32 %v4543, %v4602
        %v4640 = vadd.f32 %v4544, %v4604
        %v4641 = vadd.f32 %v4545, %v4606
        %v4642 = vadd.f32 %v4546, %v4608
        %v4643 = vadd.f32 %v4547, %v4610
        %v4644 = vadd.f32 %v4548, %v4612
        %v4645 = vmul.f32 %v390, 0.20753229
        %v4646 = vmul.f32 %v391, 0.20753229
        %v4647 = vmul.f32 %v392, 0.20753229
        %v4648 = vmul.f32 %v393, 0.20753229
        %v4649 = vmul.f32 %v394, 0.20753229
        %v4650 = vmul.f32 %v395, 0.20753229
        %v4651 = vmul.f32 %v396, 0.20753229
        %v4652 = vmul.f32 %v397, 0.20753229
        %v4653 = vmul.f32 %v398, 0.20753229
        %v4654 = vmul.f32 %v399, 0.20753229
        %v4655 = vmul.f32 %v400, 0.20753229
        %v4656 = vmul.f32 %v401, 0.20753229
        %v4657 = vmul.f32 %v402, 0.20753229
        %v4658 = vmul.f32 %v403, 0.20753229
        %v4659 = vmul.f32 %v404, 0.20753229
        %v4660 = vmul.f32 %v405, 0.20753229
        %4677 = vrot.lane.b32.xlu0 %v4645, 124
        %v4678 = vpop.permute.xlu0 %4677
        %4679 = vrot.lane.b32.xlu0 %v4646, 124
        %v4680 = vpop.permute.xlu0 %4679
        %4681 = vrot.lane.b32.xlu0 %v4647, 124
        %v4682 = vpop.permute.xlu0 %4681
        %4683 = vrot.lane.b32.xlu0 %v4648, 124
        %v4684 = vpop.permute.xlu0 %4683
        %4685 = vrot.lane.b32.xlu0 %v4649, 124
        %v4686 = vpop.permute.xlu0 %4685
        %4687 = vrot.lane.b32.xlu0 %v4650, 124
        %v4688 = vpop.permute.xlu0 %4687
        %4689 = vrot.lane.b32.xlu0 %v4651, 124
        %v4690 = vpop.permute.xlu0 %4689
        %4691 = vrot.lane.b32.xlu0 %v4652, 124
        %v4692 = vpop.permute.xlu0 %4691
        %4693 = vrot.lane.b32.xlu0 %v4653, 124
        %v4694 = vpop.permute.xlu0 %4693
        %4695 = vrot.lane.b32.xlu0 %v4654, 124
        %v4696 = vpop.permute.xlu0 %4695
        %4697 = vrot.lane.b32.xlu0 %v4655, 124
        %v4698 = vpop.permute.xlu0 %4697
        %4699 = vrot.lane.b32.xlu0 %v4656, 124
        %v4700 = vpop.permute.xlu0 %4699
        %4701 = vrot.lane.b32.xlu0 %v4657, 124
        %v4702 = vpop.permute.xlu0 %4701
        %4703 = vrot.lane.b32.xlu0 %v4658, 124
        %v4704 = vpop.permute.xlu0 %4703
        %4705 = vrot.lane.b32.xlu0 %v4659, 124
        %v4706 = vpop.permute.xlu0 %4705
        %4707 = vrot.lane.b32.xlu0 %v4660, 124
        %v4708 = vpop.permute.xlu0 %4707
        %v4725 = vadd.f32 %v4629, %v4678
        %v4726 = vadd.f32 %v4630, %v4680
        %v4727 = vadd.f32 %v4631, %v4682
        %v4728 = vadd.f32 %v4632, %v4684
        %v4729 = vadd.f32 %v4633, %v4686
        %v4730 = vadd.f32 %v4634, %v4688
        %v4731 = vadd.f32 %v4635, %v4690
        %v4732 = vadd.f32 %v4636, %v4692
        %v4733 = vadd.f32 %v4637, %v4694
        %v4734 = vadd.f32 %v4638, %v4696
        %v4735 = vadd.f32 %v4639, %v4698
        %v4736 = vadd.f32 %v4640, %v4700
        %v4737 = vadd.f32 %v4641, %v4702
        %v4738 = vadd.f32 %v4642, %v4704
        %v4739 = vadd.f32 %v4643, %v4706
        %v4740 = vadd.f32 %v4644, %v4708
        %v4741 = vmul.f32 %v390, 0.5641312
        %v4742 = vmul.f32 %v391, 0.5641312
        %v4743 = vmul.f32 %v392, 0.5641312
        %v4744 = vmul.f32 %v393, 0.5641312
        %v4745 = vmul.f32 %v394, 0.5641312
        %v4746 = vmul.f32 %v395, 0.5641312
        %v4747 = vmul.f32 %v396, 0.5641312
        %v4748 = vmul.f32 %v397, 0.5641312
        %v4749 = vmul.f32 %v398, 0.5641312
        %v4750 = vmul.f32 %v399, 0.5641312
        %v4751 = vmul.f32 %v400, 0.5641312
        %v4752 = vmul.f32 %v401, 0.5641312
        %v4753 = vmul.f32 %v402, 0.5641312
        %v4754 = vmul.f32 %v403, 0.5641312
        %v4755 = vmul.f32 %v404, 0.5641312
        %v4756 = vmul.f32 %v405, 0.5641312
        %4773 = vrot.lane.b32.xlu0 %v4741, 123
        %v4774 = vpop.permute.xlu0 %4773
        %4775 = vrot.lane.b32.xlu0 %v4742, 123
        %v4776 = vpop.permute.xlu0 %4775
        %4777 = vrot.lane.b32.xlu0 %v4743, 123
        %v4778 = vpop.permute.xlu0 %4777
        %4779 = vrot.lane.b32.xlu0 %v4744, 123
        %v4780 = vpop.permute.xlu0 %4779
        %4781 = vrot.lane.b32.xlu0 %v4745, 123
        %v4782 = vpop.permute.xlu0 %4781
        %4783 = vrot.lane.b32.xlu0 %v4746, 123
        %v4784 = vpop.permute.xlu0 %4783
        %4785 = vrot.lane.b32.xlu0 %v4747, 123
        %v4786 = vpop.permute.xlu0 %4785
        %4787 = vrot.lane.b32.xlu0 %v4748, 123
        %v4788 = vpop.permute.xlu0 %4787
        %4789 = vrot.lane.b32.xlu0 %v4749, 123
        %v4790 = vpop.permute.xlu0 %4789
        %4791 = vrot.lane.b32.xlu0 %v4750, 123
        %v4792 = vpop.permute.xlu0 %4791
        %4793 = vrot.lane.b32.xlu0 %v4751, 123
        %v4794 = vpop.permute.xlu0 %4793
        %4795 = vrot.lane.b32.xlu0 %v4752, 123
        %v4796 = vpop.permute.xlu0 %4795
        %4797 = vrot.lane.b32.xlu0 %v4753, 123
        %v4798 = vpop.permute.xlu0 %4797
        %4799 = vrot.lane.b32.xlu0 %v4754, 123
        %v4800 = vpop.permute.xlu0 %4799
        %4801 = vrot.lane.b32.xlu0 %v4755, 123
        %v4802 = vpop.permute.xlu0 %4801
        %4803 = vrot.lane.b32.xlu0 %v4756, 123
        %v4804 = vpop.permute.xlu0 %4803
        %v4821 = vadd.f32 %v4725, %v4774
        %v4822 = vadd.f32 %v4726, %v4776
        %v4823 = vadd.f32 %v4727, %v4778
        %v4824 = vadd.f32 %v4728, %v4780
        %v4825 = vadd.f32 %v4729, %v4782
        %v4826 = vadd.f32 %v4730, %v4784
        %v4827 = vadd.f32 %v4731, %v4786
        %v4828 = vadd.f32 %v4732, %v4788
        %v4829 = vadd.f32 %v4733, %v4790
        %v4830 = vadd.f32 %v4734, %v4792
        %v4831 = vadd.f32 %v4735, %v4794
        %v4832 = vadd.f32 %v4736, %v4796
        %v4833 = vadd.f32 %v4737, %v4798
        %v4834 = vadd.f32 %v4738, %v4800
        %v4835 = vadd.f32 %v4739, %v4802
        %v4836 = vadd.f32 %v4740, %v4804
        %4837 = vrot.lane.b32.xlu0 %v4645, 122
        %v4838 = vpop.permute.xlu0 %4837
        %4839 = vrot.lane.b32.xlu0 %v4646, 122
        %v4840 = vpop.permute.xlu0 %4839
        %4841 = vrot.lane.b32.xlu0 %v4647, 122
        %v4842 = vpop.permute.xlu0 %4841
        %4843 = vrot.lane.b32.xlu0 %v4648, 122
        %v4844 = vpop.permute.xlu0 %4843
        %4845 = vrot.lane.b32.xlu0 %v4649, 122
        %v4846 = vpop.permute.xlu0 %4845
        %4847 = vrot.lane.b32.xlu0 %v4650, 122
        %v4848 = vpop.permute.xlu0 %4847
        %4849 = vrot.lane.b32.xlu0 %v4651, 122
        %v4850 = vpop.permute.xlu0 %4849
        %4851 = vrot.lane.b32.xlu0 %v4652, 122
        %v4852 = vpop.permute.xlu0 %4851
        %4853 = vrot.lane.b32.xlu0 %v4653, 122
        %v4854 = vpop.permute.xlu0 %4853
        %4855 = vrot.lane.b32.xlu0 %v4654, 122
        %v4856 = vpop.permute.xlu0 %4855
        %4857 = vrot.lane.b32.xlu0 %v4655, 122
        %v4858 = vpop.permute.xlu0 %4857
        %4859 = vrot.lane.b32.xlu0 %v4656, 122
        %v4860 = vpop.permute.xlu0 %4859
        %4861 = vrot.lane.b32.xlu0 %v4657, 122
        %v4862 = vpop.permute.xlu0 %4861
        %4863 = vrot.lane.b32.xlu0 %v4658, 122
        %v4864 = vpop.permute.xlu0 %4863
        %4865 = vrot.lane.b32.xlu0 %v4659, 122
        %v4866 = vpop.permute.xlu0 %4865
        %4867 = vrot.lane.b32.xlu0 %v4660, 122
        %v4868 = vpop.permute.xlu0 %4867
        %v4885 = vadd.f32 %v4821, %v4838
        %v4886 = vadd.f32 %v4822, %v4840
        %v4887 = vadd.f32 %v4823, %v4842
        %v4888 = vadd.f32 %v4824, %v4844
        %v4889 = vadd.f32 %v4825, %v4846
        %v4890 = vadd.f32 %v4826, %v4848
        %v4891 = vadd.f32 %v4827, %v4850
        %v4892 = vadd.f32 %v4828, %v4852
        %v4893 = vadd.f32 %v4829, %v4854
        %v4894 = vadd.f32 %v4830, %v4856
        %v4895 = vadd.f32 %v4831, %v4858
        %v4896 = vadd.f32 %v4832, %v4860
        %v4897 = vadd.f32 %v4833, %v4862
        %v4898 = vadd.f32 %v4834, %v4864
        %v4899 = vadd.f32 %v4835, %v4866
        %v4900 = vadd.f32 %v4836, %v4868
        %4901 = vrot.lane.b32.xlu0 %v4549, 121
        %v4902 = vpop.permute.xlu0 %4901
        %4903 = vrot.lane.b32.xlu0 %v4550, 121
        %v4904 = vpop.permute.xlu0 %4903
        %4905 = vrot.lane.b32.xlu0 %v4551, 121
        %v4906 = vpop.permute.xlu0 %4905
        %4907 = vrot.lane.b32.xlu0 %v4552, 121
        %v4908 = vpop.permute.xlu0 %4907
        %4909 = vrot.lane.b32.xlu0 %v4553, 121
        %v4910 = vpop.permute.xlu0 %4909
        %4911 = vrot.lane.b32.xlu0 %v4554, 121
        %v4912 = vpop.permute.xlu0 %4911
        %4913 = vrot.lane.b32.xlu0 %v4555, 121
        %v4914 = vpop.permute.xlu0 %4913
        %4915 = vrot.lane.b32.xlu0 %v4556, 121
        %v4916 = vpop.permute.xlu0 %4915
        %4917 = vrot.lane.b32.xlu0 %v4557, 121
        %v4918 = vpop.permute.xlu0 %4917
        %4919 = vrot.lane.b32.xlu0 %v4558, 121
        %v4920 = vpop.permute.xlu0 %4919
        %4921 = vrot.lane.b32.xlu0 %v4559, 121
        %v4922 = vpop.permute.xlu0 %4921
        %4923 = vrot.lane.b32.xlu0 %v4560, 121
        %v4924 = vpop.permute.xlu0 %4923
        %4925 = vrot.lane.b32.xlu0 %v4561, 121
        %v4926 = vpop.permute.xlu0 %4925
        %4927 = vrot.lane.b32.xlu0 %v4562, 121
        %v4928 = vpop.permute.xlu0 %4927
        %4929 = vrot.lane.b32.xlu0 %v4563, 121
        %v4930 = vpop.permute.xlu0 %4929
        %4931 = vrot.lane.b32.xlu0 %v4564, 121
        %v4932 = vpop.permute.xlu0 %4931
        %v4949 = vadd.f32 %v4885, %v4902
        %v4950 = vadd.f32 %v4886, %v4904
        %v4951 = vadd.f32 %v4887, %v4906
        %v4952 = vadd.f32 %v4888, %v4908
        %v4953 = vadd.f32 %v4889, %v4910
        %v4954 = vadd.f32 %v4890, %v4912
        %v4955 = vadd.f32 %v4891, %v4914
        %v4956 = vadd.f32 %v4892, %v4916
        %v4957 = vadd.f32 %v4893, %v4918
        %v4958 = vadd.f32 %v4894, %v4920
        %v4959 = vadd.f32 %v4895, %v4922
        %v4960 = vadd.f32 %v4896, %v4924
        %v4961 = vadd.f32 %v4897, %v4926
        %v4962 = vadd.f32 %v4898, %v4928
        %v4963 = vadd.f32 %v4899, %v4930
        %v4964 = vadd.f32 %v4900, %v4932
        %4965 = vrot.lane.b32.xlu0 %v4453, 120
        %v4966 = vpop.permute.xlu0 %4965
        %4967 = vrot.lane.b32.xlu0 %v4454, 120
        %v4968 = vpop.permute.xlu0 %4967
        %4969 = vrot.lane.b32.xlu0 %v4455, 120
        %v4970 = vpop.permute.xlu0 %4969
        %4971 = vrot.lane.b32.xlu0 %v4456, 120
        %v4972 = vpop.permute.xlu0 %4971
        %4973 = vrot.lane.b32.xlu0 %v4457, 120
        %v4974 = vpop.permute.xlu0 %4973
        %4975 = vrot.lane.b32.xlu0 %v4458, 120
        %v4976 = vpop.permute.xlu0 %4975
        %4977 = vrot.lane.b32.xlu0 %v4459, 120
        %v4978 = vpop.permute.xlu0 %4977
        %4979 = vrot.lane.b32.xlu0 %v4460, 120
        %v4980 = vpop.permute.xlu0 %4979
        %4981 = vrot.lane.b32.xlu0 %v4461, 120
        %v4982 = vpop.permute.xlu0 %4981
        %4983 = vrot.lane.b32.xlu0 %v4462, 120
        %v4984 = vpop.permute.xlu0 %4983
        %4985 = vrot.lane.b32.xlu0 %v4463, 120
        %v4986 = vpop.permute.xlu0 %4985
        %4987 = vrot.lane.b32.xlu0 %v4464, 120
        %v4988 = vpop.permute.xlu0 %4987
        %4989 = vrot.lane.b32.xlu0 %v4465, 120
        %v4990 = vpop.permute.xlu0 %4989
        %4991 = vrot.lane.b32.xlu0 %v4466, 120
        %v4992 = vpop.permute.xlu0 %4991
        %4993 = vrot.lane.b32.xlu0 %v4467, 120
        %v4994 = vpop.permute.xlu0 %4993
        %4995 = vrot.lane.b32.xlu0 %v4468, 120
        %v4996 = vpop.permute.xlu0 %4995
        %v5013 = vadd.f32 %v4949, %v4966
        %v5014 = vadd.f32 %v4950, %v4968
        %v5015 = vadd.f32 %v4951, %v4970
        %v5016 = vadd.f32 %v4952, %v4972
        %v5017 = vadd.f32 %v4953, %v4974
        %v5018 = vadd.f32 %v4954, %v4976
        %v5019 = vadd.f32 %v4955, %v4978
        %v5020 = vadd.f32 %v4956, %v4980
        %v5021 = vadd.f32 %v4957, %v4982
        %v5022 = vadd.f32 %v4958, %v4984
        %v5023 = vadd.f32 %v4959, %v4986
        %v5024 = vadd.f32 %v4960, %v4988
        %v5025 = vadd.f32 %v4961, %v4990
        %v5026 = vadd.f32 %v4962, %v4992
        %v5027 = vadd.f32 %v4963, %v4994
        %v5028 = vadd.f32 %v4964, %v4996
        %5029 = vrot.lane.b32.xlu0 %v4357, 119
        %v5030 = vpop.permute.xlu0 %5029
        %5031 = vrot.lane.b32.xlu0 %v4358, 119
        %v5032 = vpop.permute.xlu0 %5031
        %5033 = vrot.lane.b32.xlu0 %v4359, 119
        %v5034 = vpop.permute.xlu0 %5033
        %5035 = vrot.lane.b32.xlu0 %v4360, 119
        %v5036 = vpop.permute.xlu0 %5035
        %5037 = vrot.lane.b32.xlu0 %v4361, 119
        %v5038 = vpop.permute.xlu0 %5037
        %5039 = vrot.lane.b32.xlu0 %v4362, 119
        %v5040 = vpop.permute.xlu0 %5039
        %5041 = vrot.lane.b32.xlu0 %v4363, 119
        %v5042 = vpop.permute.xlu0 %5041
        %5043 = vrot.lane.b32.xlu0 %v4364, 119
        %v5044 = vpop.permute.xlu0 %5043
        %5045 = vrot.lane.b32.xlu0 %v4365, 119
        %v5046 = vpop.permute.xlu0 %5045
        %5047 = vrot.lane.b32.xlu0 %v4366, 119
        %v5048 = vpop.permute.xlu0 %5047
        %5049 = vrot.lane.b32.xlu0 %v4367, 119
        %v5050 = vpop.permute.xlu0 %5049
        %5051 = vrot.lane.b32.xlu0 %v4368, 119
        %v5052 = vpop.permute.xlu0 %5051
        %5053 = vrot.lane.b32.xlu0 %v4369, 119
        %v5054 = vpop.permute.xlu0 %5053
        %5055 = vrot.lane.b32.xlu0 %v4370, 119
        %v5056 = vpop.permute.xlu0 %5055
        %5057 = vrot.lane.b32.xlu0 %v4371, 119
        %v5058 = vpop.permute.xlu0 %5057
        %5059 = vrot.lane.b32.xlu0 %v4372, 119
        %v5060 = vpop.permute.xlu0 %5059
        %v5077 = vadd.f32 %v5013, %v5030
        %v5078 = vadd.f32 %v5014, %v5032
        %v5079 = vadd.f32 %v5015, %v5034
        %v5080 = vadd.f32 %v5016, %v5036
        %v5081 = vadd.f32 %v5017, %v5038
        %v5082 = vadd.f32 %v5018, %v5040
        %v5083 = vadd.f32 %v5019, %v5042
        %v5084 = vadd.f32 %v5020, %v5044
        %v5085 = vadd.f32 %v5021, %v5046
        %v5086 = vadd.f32 %v5022, %v5048
        %v5087 = vadd.f32 %v5023, %v5050
        %v5088 = vadd.f32 %v5024, %v5052
        %v5089 = vadd.f32 %v5025, %v5054
        %v5090 = vadd.f32 %v5026, %v5056
        %v5091 = vadd.f32 %v5027, %v5058
        %v5092 = vadd.f32 %v5028, %v5060
        %5109 = vrot.lane.b32.xlu0 %v4341, 118
        %v5110 = vpop.permute.xlu0 %5109
        %5111 = vrot.lane.b32.xlu0 %v4342, 118
        %v5112 = vpop.permute.xlu0 %5111
        %5113 = vrot.lane.b32.xlu0 %v4343, 118
        %v5114 = vpop.permute.xlu0 %5113
        %5115 = vrot.lane.b32.xlu0 %v4344, 118
        %v5116 = vpop.permute.xlu0 %5115
        %5117 = vrot.lane.b32.xlu0 %v4345, 118
        %v5118 = vpop.permute.xlu0 %5117
        %5119 = vrot.lane.b32.xlu0 %v4346, 118
        %v5120 = vpop.permute.xlu0 %5119
        %5121 = vrot.lane.b32.xlu0 %v4347, 118
        %v5122 = vpop.permute.xlu0 %5121
        %5123 = vrot.lane.b32.xlu0 %v4348, 118
        %v5124 = vpop.permute.xlu0 %5123
        %5125 = vrot.lane.b32.xlu0 %v4349, 118
        %v5126 = vpop.permute.xlu0 %5125
        %5127 = vrot.lane.b32.xlu0 %v4350, 118
        %v5128 = vpop.permute.xlu0 %5127
        %5129 = vrot.lane.b32.xlu0 %v4351, 118
        %v5130 = vpop.permute.xlu0 %5129
        %5131 = vrot.lane.b32.xlu0 %v4352, 118
        %v5132 = vpop.permute.xlu0 %5131
        %5133 = vrot.lane.b32.xlu0 %v4353, 118
        %v5134 = vpop.permute.xlu0 %5133
        %5135 = vrot.lane.b32.xlu0 %v4354, 118
        %v5136 = vpop.permute.xlu0 %5135
        %5137 = vrot.lane.b32.xlu0 %v4355, 118
        %v5138 = vpop.permute.xlu0 %5137
        %5139 = vrot.lane.b32.xlu0 %v4356, 118
        %v5140 = vpop.permute.xlu0 %5139
        %v5157 = vadd.f32 %v5077, %v5110
        %v5158 = vadd.f32 %v5078, %v5112
        %v5159 = vadd.f32 %v5079, %v5114
        %v5160 = vadd.f32 %v5080, %v5116
        %v5161 = vadd.f32 %v5081, %v5118
        %v5162 = vadd.f32 %v5082, %v5120
        %v5163 = vadd.f32 %v5083, %v5122
        %v5164 = vadd.f32 %v5084, %v5124
        %v5165 = vadd.f32 %v5085, %v5126
        %v5166 = vadd.f32 %v5086, %v5128
        %v5167 = vadd.f32 %v5087, %v5130
        %v5168 = vadd.f32 %v5088, %v5132
        %v5169 = vadd.f32 %v5089, %v5134
        %v5170 = vadd.f32 %v5090, %v5136
        %v5171 = vadd.f32 %v5091, %v5138
        %v5172 = vadd.f32 %v5092, %v5140
        %v5173 = vmul.f32 %v5157, 7.834623e-12
        %v5174 = vmul.f32 %v5158, 7.834623e-12
        %v5175 = vmul.f32 %v5161, 7.834623e-12
        %v5176 = vmul.f32 %v5162, 7.834623e-12
        %v5177 = vmul.f32 %v5165, 7.834623e-12
        %v5178 = vmul.f32 %v5166, 7.834623e-12
        %v5179 = vmul.f32 %v5169, 7.834623e-12
        %v5180 = vmul.f32 %v5170, 7.834623e-12
        %v5181 = vmul.f32 %v5157, 6.3484606e-08
        %v5182 = vmul.f32 %v5158, 6.3484606e-08
        %v5183 = vmul.f32 %v5159, 6.3484606e-08
        %v5184 = vmul.f32 %v5161, 6.3484606e-08
        %v5185 = vmul.f32 %v5162, 6.3484606e-08
        %v5186 = vmul.f32 %v5163, 6.3484606e-08
        %v5187 = vmul.f32 %v5165, 6.3484606e-08
        %v5188 = vmul.f32 %v5166, 6.3484606e-08
        %v5189 = vmul.f32 %v5167, 6.3484606e-08
        %v5190 = vmul.f32 %v5169, 6.3484606e-08
        %v5191 = vmul.f32 %v5170, 6.3484606e-08
        %v5192 = vmul.f32 %v5171, 6.3484606e-08
        %v5205 = vrot.slane %v5181, 1
        %v5206 = vrot.slane %v5182, 1
        %v5207 = vsel %vm1286, %v5205, %v5206
        %v5208 = vrot.slane %v5183, 1
        %v5209 = vsel %vm1286, %v5206, %v5208
        %v5210 = vrot.slane %v5184, 1
        %v5211 = vrot.slane %v5185, 1
        %v5212 = vsel %vm1286, %v5210, %v5211
        %v5213 = vrot.slane %v5186, 1
        %v5214 = vsel %vm1286, %v5211, %v5213
        %v5215 = vrot.slane %v5187, 1
        %v5216 = vrot.slane %v5188, 1
        %v5217 = vsel %vm1286, %v5215, %v5216
        %v5218 = vrot.slane %v5189, 1
        %v5219 = vsel %vm1286, %v5216, %v5218
        %v5220 = vrot.slane %v5190, 1
        %v5221 = vrot.slane %v5191, 1
        %v5222 = vsel %vm1286, %v5220, %v5221
        %v5223 = vrot.slane %v5192, 1
        %v5224 = vsel %vm1286, %v5221, %v5223
        %v5233 = vadd.f32 %v5173, %v5207
        %v5234 = vadd.f32 %v5174, %v5209
        %v5235 = vadd.f32 %v5175, %v5212
        %v5236 = vadd.f32 %v5176, %v5214
        %v5237 = vadd.f32 %v5177, %v5217
        %v5238 = vadd.f32 %v5178, %v5219
        %v5239 = vadd.f32 %v5179, %v5222
        %v5240 = vadd.f32 %v5180, %v5224
        %v5241 = vmul.f32 %v5157, 6.9619324e-05
        %v5242 = vmul.f32 %v5158, 6.9619324e-05
        %v5243 = vmul.f32 %v5159, 6.9619324e-05
        %v5244 = vmul.f32 %v5161, 6.9619324e-05
        %v5245 = vmul.f32 %v5162, 6.9619324e-05
        %v5246 = vmul.f32 %v5163, 6.9619324e-05
        %v5247 = vmul.f32 %v5165, 6.9619324e-05
        %v5248 = vmul.f32 %v5166, 6.9619324e-05
        %v5249 = vmul.f32 %v5167, 6.9619324e-05
        %v5250 = vmul.f32 %v5169, 6.9619324e-05
        %v5251 = vmul.f32 %v5170, 6.9619324e-05
        %v5252 = vmul.f32 %v5171, 6.9619324e-05
        %v5265 = vrot.slane %v5241, 2
        %v5266 = vrot.slane %v5242, 2
        %v5267 = vsel %vm1347, %v5265, %v5266
        %v5268 = vrot.slane %v5243, 2
        %v5269 = vsel %vm1347, %v5266, %v5268
        %v5270 = vrot.slane %v5244, 2
        %v5271 = vrot.slane %v5245, 2
        %v5272 = vsel %vm1347, %v5270, %v5271
        %v5273 = vrot.slane %v5246, 2
        %v5274 = vsel %vm1347, %v5271, %v5273
        %v5275 = vrot.slane %v5247, 2
        %v5276 = vrot.slane %v5248, 2
        %v5277 = vsel %vm1347, %v5275, %v5276
        %v5278 = vrot.slane %v5249, 2
        %v5279 = vsel %vm1347, %v5276, %v5278
        %v5280 = vrot.slane %v5250, 2
        %v5281 = vrot.slane %v5251, 2
        %v5282 = vsel %vm1347, %v5280, %v5281
        %v5283 = vrot.slane %v5252, 2
        %v5284 = vsel %vm1347, %v5281, %v5283
        %v5293 = vadd.f32 %v5233, %v5267
        %v5294 = vadd.f32 %v5234, %v5269
        %v5295 = vadd.f32 %v5235, %v5272
        %v5296 = vadd.f32 %v5236, %v5274
        %v5297 = vadd.f32 %v5237, %v5277
        %v5298 = vadd.f32 %v5238, %v5279
        %v5299 = vadd.f32 %v5239, %v5282
        %v5300 = vadd.f32 %v5240, %v5284
        %v5301 = vmul.f32 %v5157, 0.010332424
        %v5302 = vmul.f32 %v5158, 0.010332424
        %v5303 = vmul.f32 %v5159, 0.010332424
        %v5304 = vmul.f32 %v5161, 0.010332424
        %v5305 = vmul.f32 %v5162, 0.010332424
        %v5306 = vmul.f32 %v5163, 0.010332424
        %v5307 = vmul.f32 %v5165, 0.010332424
        %v5308 = vmul.f32 %v5166, 0.010332424
        %v5309 = vmul.f32 %v5167, 0.010332424
        %v5310 = vmul.f32 %v5169, 0.010332424
        %v5311 = vmul.f32 %v5170, 0.010332424
        %v5312 = vmul.f32 %v5171, 0.010332424
        %v5325 = vrot.slane %v5301, 3
        %v5326 = vrot.slane %v5302, 3
        %v5327 = vsel %vm1408, %v5325, %v5326
        %v5328 = vrot.slane %v5303, 3
        %v5329 = vsel %vm1408, %v5326, %v5328
        %v5330 = vrot.slane %v5304, 3
        %v5331 = vrot.slane %v5305, 3
        %v5332 = vsel %vm1408, %v5330, %v5331
        %v5333 = vrot.slane %v5306, 3
        %v5334 = vsel %vm1408, %v5331, %v5333
        %v5335 = vrot.slane %v5307, 3
        %v5336 = vrot.slane %v5308, 3
        %v5337 = vsel %vm1408, %v5335, %v5336
        %v5338 = vrot.slane %v5309, 3
        %v5339 = vsel %vm1408, %v5336, %v5338
        %v5340 = vrot.slane %v5310, 3
        %v5341 = vrot.slane %v5311, 3
        %v5342 = vsel %vm1408, %v5340, %v5341
        %v5343 = vrot.slane %v5312, 3
        %v5344 = vsel %vm1408, %v5341, %v5343
        %v5353 = vadd.f32 %v5293, %v5327
        %v5354 = vadd.f32 %v5294, %v5329
        %v5355 = vadd.f32 %v5295, %v5332
        %v5356 = vadd.f32 %v5296, %v5334
        %v5357 = vadd.f32 %v5297, %v5337
        %v5358 = vadd.f32 %v5298, %v5339
        %v5359 = vadd.f32 %v5299, %v5342
        %v5360 = vadd.f32 %v5300, %v5344
        %v5361 = vmul.f32 %v5157, 0.20753229
        %v5362 = vmul.f32 %v5158, 0.20753229
        %v5363 = vmul.f32 %v5159, 0.20753229
        %v5364 = vmul.f32 %v5161, 0.20753229
        %v5365 = vmul.f32 %v5162, 0.20753229
        %v5366 = vmul.f32 %v5163, 0.20753229
        %v5367 = vmul.f32 %v5165, 0.20753229
        %v5368 = vmul.f32 %v5166, 0.20753229
        %v5369 = vmul.f32 %v5167, 0.20753229
        %v5370 = vmul.f32 %v5169, 0.20753229
        %v5371 = vmul.f32 %v5170, 0.20753229
        %v5372 = vmul.f32 %v5171, 0.20753229
        %v5385 = vrot.slane %v5361, 4
        %v5386 = vrot.slane %v5362, 4
        %v5387 = vsel %vm1469, %v5385, %v5386
        %v5388 = vrot.slane %v5363, 4
        %v5389 = vsel %vm1469, %v5386, %v5388
        %v5390 = vrot.slane %v5364, 4
        %v5391 = vrot.slane %v5365, 4
        %v5392 = vsel %vm1469, %v5390, %v5391
        %v5393 = vrot.slane %v5366, 4
        %v5394 = vsel %vm1469, %v5391, %v5393
        %v5395 = vrot.slane %v5367, 4
        %v5396 = vrot.slane %v5368, 4
        %v5397 = vsel %vm1469, %v5395, %v5396
        %v5398 = vrot.slane %v5369, 4
        %v5399 = vsel %vm1469, %v5396, %v5398
        %v5400 = vrot.slane %v5370, 4
        %v5401 = vrot.slane %v5371, 4
        %v5402 = vsel %vm1469, %v5400, %v5401
        %v5403 = vrot.slane %v5372, 4
        %v5404 = vsel %vm1469, %v5401, %v5403
        %v5413 = vadd.f32 %v5353, %v5387
        %v5414 = vadd.f32 %v5354, %v5389
        %v5415 = vadd.f32 %v5355, %v5392
        %v5416 = vadd.f32 %v5356, %v5394
        %v5417 = vadd.f32 %v5357, %v5397
        %v5418 = vadd.f32 %v5358, %v5399
        %v5419 = vadd.f32 %v5359, %v5402
        %v5420 = vadd.f32 %v5360, %v5404
        %v5421 = vmul.f32 %v5157, 0.5641312
        %v5422 = vmul.f32 %v5158, 0.5641312
        %v5423 = vmul.f32 %v5159, 0.5641312
        %v5424 = vmul.f32 %v5161, 0.5641312
        %v5425 = vmul.f32 %v5162, 0.5641312
        %v5426 = vmul.f32 %v5163, 0.5641312
        %v5427 = vmul.f32 %v5165, 0.5641312
        %v5428 = vmul.f32 %v5166, 0.5641312
        %v5429 = vmul.f32 %v5167, 0.5641312
        %v5430 = vmul.f32 %v5169, 0.5641312
        %v5431 = vmul.f32 %v5170, 0.5641312
        %v5432 = vmul.f32 %v5171, 0.5641312
        %v5445 = vrot.slane %v5421, 5
        %v5446 = vrot.slane %v5422, 5
        %v5447 = vsel %vm1530, %v5445, %v5446
        %v5448 = vrot.slane %v5423, 5
        %v5449 = vsel %vm1530, %v5446, %v5448
        %v5450 = vrot.slane %v5424, 5
        %v5451 = vrot.slane %v5425, 5
        %v5452 = vsel %vm1530, %v5450, %v5451
        %v5453 = vrot.slane %v5426, 5
        %v5454 = vsel %vm1530, %v5451, %v5453
        %v5455 = vrot.slane %v5427, 5
        %v5456 = vrot.slane %v5428, 5
        %v5457 = vsel %vm1530, %v5455, %v5456
        %v5458 = vrot.slane %v5429, 5
        %v5459 = vsel %vm1530, %v5456, %v5458
        %v5460 = vrot.slane %v5430, 5
        %v5461 = vrot.slane %v5431, 5
        %v5462 = vsel %vm1530, %v5460, %v5461
        %v5463 = vrot.slane %v5432, 5
        %v5464 = vsel %vm1530, %v5461, %v5463
        %v5473 = vadd.f32 %v5413, %v5447
        %v5474 = vadd.f32 %v5414, %v5449
        %v5475 = vadd.f32 %v5415, %v5452
        %v5476 = vadd.f32 %v5416, %v5454
        %v5477 = vadd.f32 %v5417, %v5457
        %v5478 = vadd.f32 %v5418, %v5459
        %v5479 = vadd.f32 %v5419, %v5462
        %v5480 = vadd.f32 %v5420, %v5464
        %v5481 = vrot.slane %v5361, 6
        %v5482 = vrot.slane %v5362, 6
        %v5483 = vsel %vm1567, %v5481, %v5482
        %v5484 = vrot.slane %v5363, 6
        %v5485 = vsel %vm1567, %v5482, %v5484
        %v5486 = vrot.slane %v5364, 6
        %v5487 = vrot.slane %v5365, 6
        %v5488 = vsel %vm1567, %v5486, %v5487
        %v5489 = vrot.slane %v5366, 6
        %v5490 = vsel %vm1567, %v5487, %v5489
        %v5491 = vrot.slane %v5367, 6
        %v5492 = vrot.slane %v5368, 6
        %v5493 = vsel %vm1567, %v5491, %v5492
        %v5494 = vrot.slane %v5369, 6
        %v5495 = vsel %vm1567, %v5492, %v5494
        %v5496 = vrot.slane %v5370, 6
        %v5497 = vrot.slane %v5371, 6
        %v5498 = vsel %vm1567, %v5496, %v5497
        %v5499 = vrot.slane %v5372, 6
        %v5500 = vsel %vm1567, %v5497, %v5499
        %v5509 = vadd.f32 %v5473, %v5483
        %v5510 = vadd.f32 %v5474, %v5485
        %v5511 = vadd.f32 %v5475, %v5488
        %v5512 = vadd.f32 %v5476, %v5490
        %v5513 = vadd.f32 %v5477, %v5493
        %v5514 = vadd.f32 %v5478, %v5495
        %v5515 = vadd.f32 %v5479, %v5498
        %v5516 = vadd.f32 %v5480, %v5500
        %v5517 = vrot.slane %v5301, 7
        %v5518 = vrot.slane %v5302, 7
        %v5519 = vsel %vm1604, %v5517, %v5518
        %v5520 = vrot.slane %v5303, 7
        %v5521 = vsel %vm1604, %v5518, %v5520
        %v5522 = vrot.slane %v5304, 7
        %v5523 = vrot.slane %v5305, 7
        %v5524 = vsel %vm1604, %v5522, %v5523
        %v5525 = vrot.slane %v5306, 7
        %v5526 = vsel %vm1604, %v5523, %v5525
        %v5527 = vrot.slane %v5307, 7
        %v5528 = vrot.slane %v5308, 7
        %v5529 = vsel %vm1604, %v5527, %v5528
        %v5530 = vrot.slane %v5309, 7
        %v5531 = vsel %vm1604, %v5528, %v5530
        %v5532 = vrot.slane %v5310, 7
        %v5533 = vrot.slane %v5311, 7
        %v5534 = vsel %vm1604, %v5532, %v5533
        %v5535 = vrot.slane %v5312, 7
        %v5536 = vsel %vm1604, %v5533, %v5535
        %v5545 = vadd.f32 %v5509, %v5519
        %v5546 = vadd.f32 %v5510, %v5521
        %v5547 = vadd.f32 %v5511, %v5524
        %v5548 = vadd.f32 %v5512, %v5526
        %v5549 = vadd.f32 %v5513, %v5529
        %v5550 = vadd.f32 %v5514, %v5531
        %v5551 = vadd.f32 %v5515, %v5534
        %v5552 = vadd.f32 %v5516, %v5536
        %v5553 = vadd.f32 %v5545, %v5242
        %v5554 = vadd.f32 %v5546, %v5243
        %v5555 = vadd.f32 %v5547, %v5245
        %v5556 = vadd.f32 %v5548, %v5246
        %v5557 = vadd.f32 %v5549, %v5248
        %v5558 = vadd.f32 %v5550, %v5249
        %v5559 = vadd.f32 %v5551, %v5251
        %v5560 = vadd.f32 %v5552, %v5252
        %v5561 = vmul.f32 %v5160, 6.3484606e-08
        %v5562 = vmul.f32 %v5164, 6.3484606e-08
        %v5563 = vmul.f32 %v5168, 6.3484606e-08
        %v5564 = vmul.f32 %v5172, 6.3484606e-08
        %v5569 = vrot.slane %v5561, 1
        %v5570 = vsel %vm1286, %v5208, %v5569
        %v5571 = vrot.slane %v5562, 1
        %v5572 = vsel %vm1286, %v5213, %v5571
        %v5573 = vrot.slane %v5563, 1
        %v5574 = vsel %vm1286, %v5218, %v5573
        %v5575 = vrot.slane %v5564, 1
        %v5576 = vsel %vm1286, %v5223, %v5575
        %v5581 = vadd.f32 %v5553, %v5209
        %v5582 = vadd.f32 %v5554, %v5570
        %v5583 = vadd.f32 %v5555, %v5214
        %v5584 = vadd.f32 %v5556, %v5572
        %v5585 = vadd.f32 %v5557, %v5219
        %v5586 = vadd.f32 %v5558, %v5574
        %v5587 = vadd.f32 %v5559, %v5224
        %v5588 = vadd.f32 %v5560, %v5576
        %v5589 = vmul.f32 %v5159, 7.834623e-12
        %v5590 = vmul.f32 %v5160, 7.834623e-12
        %v5591 = vmul.f32 %v5163, 7.834623e-12
        %v5592 = vmul.f32 %v5164, 7.834623e-12
        %v5593 = vmul.f32 %v5167, 7.834623e-12
        %v5594 = vmul.f32 %v5168, 7.834623e-12
        %v5595 = vmul.f32 %v5171, 7.834623e-12
        %v5596 = vmul.f32 %v5172, 7.834623e-12
        %v5609 = vrot.slane %v5174, 2
        %v5610 = vrot.slane %v5589, 2
        %v5611 = vsel %vm1347, %v5609, %v5610
        %v5612 = vrot.slane %v5590, 2
        %v5613 = vsel %vm1347, %v5610, %v5612
        %v5614 = vrot.slane %v5176, 2
        %v5615 = vrot.slane %v5591, 2
        %v5616 = vsel %vm1347, %v5614, %v5615
        %v5617 = vrot.slane %v5592, 2
        %v5618 = vsel %vm1347, %v5615, %v5617
        %v5619 = vrot.slane %v5178, 2
        %v5620 = vrot.slane %v5593, 2
        %v5621 = vsel %vm1347, %v5619, %v5620
        %v5622 = vrot.slane %v5594, 2
        %v5623 = vsel %vm1347, %v5620, %v5622
        %v5624 = vrot.slane %v5180, 2
        %v5625 = vrot.slane %v5595, 2
        %v5626 = vsel %vm1347, %v5624, %v5625
        %v5627 = vrot.slane %v5596, 2
        %v5628 = vsel %vm1347, %v5625, %v5627
        %v5637 = vadd.f32 %v5581, %v5611
        %v5638 = vadd.f32 %v5582, %v5613
        %v5639 = vadd.f32 %v5583, %v5616
        %v5640 = vadd.f32 %v5584, %v5618
        %v5641 = vadd.f32 %v5585, %v5621
        %v5642 = vadd.f32 %v5586, %v5623
        %v5643 = vadd.f32 %v5587, %v5626
        %v5644 = vadd.f32 %v5588, %v5628
        %v5645 = vmul.f32 %v406, 7.834623e-12
        %v5646 = vmul.f32 %v407, 7.834623e-12
        %v5647 = vmul.f32 %v408, 7.834623e-12
        %v5648 = vmul.f32 %v409, 7.834623e-12
        %v5649 = vmul.f32 %v410, 7.834623e-12
        %v5650 = vmul.f32 %v411, 7.834623e-12
        %v5651 = vmul.f32 %v412, 7.834623e-12
        %v5652 = vmul.f32 %v413, 7.834623e-12
        %v5653 = vmul.f32 %v414, 7.834623e-12
        %v5654 = vmul.f32 %v415, 7.834623e-12
        %v5655 = vmul.f32 %v416, 7.834623e-12
        %v5656 = vmul.f32 %v417, 7.834623e-12
        %v5657 = vmul.f32 %v418, 7.834623e-12
        %v5658 = vmul.f32 %v419, 7.834623e-12
        %v5659 = vmul.f32 %v420, 7.834623e-12
        %v5660 = vmul.f32 %v421, 7.834623e-12
        %v5661 = vmul.f32 %v406, 6.3484606e-08
        %v5662 = vmul.f32 %v407, 6.3484606e-08
        %v5663 = vmul.f32 %v408, 6.3484606e-08
        %v5664 = vmul.f32 %v409, 6.3484606e-08
        %v5665 = vmul.f32 %v410, 6.3484606e-08
        %v5666 = vmul.f32 %v411, 6.3484606e-08
        %v5667 = vmul.f32 %v412, 6.3484606e-08
        %v5668 = vmul.f32 %v413, 6.3484606e-08
        %v5669 = vmul.f32 %v414, 6.3484606e-08
        %v5670 = vmul.f32 %v415, 6.3484606e-08
        %v5671 = vmul.f32 %v416, 6.3484606e-08
        %v5672 = vmul.f32 %v417, 6.3484606e-08
        %v5673 = vmul.f32 %v418, 6.3484606e-08
        %v5674 = vmul.f32 %v419, 6.3484606e-08
        %v5675 = vmul.f32 %v420, 6.3484606e-08
        %v5676 = vmul.f32 %v421, 6.3484606e-08
        %5693 = vrot.lane.b32.xlu0 %v5661, 127
        %v5694 = vpop.permute.xlu0 %5693
        %5695 = vrot.lane.b32.xlu0 %v5662, 127
        %v5696 = vpop.permute.xlu0 %5695
        %5697 = vrot.lane.b32.xlu0 %v5663, 127
        %v5698 = vpop.permute.xlu0 %5697
        %5699 = vrot.lane.b32.xlu0 %v5664, 127
        %v5700 = vpop.permute.xlu0 %5699
        %5701 = vrot.lane.b32.xlu0 %v5665, 127
        %v5702 = vpop.permute.xlu0 %5701
        %5703 = vrot.lane.b32.xlu0 %v5666, 127
        %v5704 = vpop.permute.xlu0 %5703
        %5705 = vrot.lane.b32.xlu0 %v5667, 127
        %v5706 = vpop.permute.xlu0 %5705
        %5707 = vrot.lane.b32.xlu0 %v5668, 127
        %v5708 = vpop.permute.xlu0 %5707
        %5709 = vrot.lane.b32.xlu0 %v5669, 127
        %v5710 = vpop.permute.xlu0 %5709
        %5711 = vrot.lane.b32.xlu0 %v5670, 127
        %v5712 = vpop.permute.xlu0 %5711
        %5713 = vrot.lane.b32.xlu0 %v5671, 127
        %v5714 = vpop.permute.xlu0 %5713
        %5715 = vrot.lane.b32.xlu0 %v5672, 127
        %v5716 = vpop.permute.xlu0 %5715
        %5717 = vrot.lane.b32.xlu0 %v5673, 127
        %v5718 = vpop.permute.xlu0 %5717
        %5719 = vrot.lane.b32.xlu0 %v5674, 127
        %v5720 = vpop.permute.xlu0 %5719
        %5721 = vrot.lane.b32.xlu0 %v5675, 127
        %v5722 = vpop.permute.xlu0 %5721
        %5723 = vrot.lane.b32.xlu0 %v5676, 127
        %v5724 = vpop.permute.xlu0 %5723
        %v5741 = vadd.f32 %v5645, %v5694
        %v5742 = vadd.f32 %v5646, %v5696
        %v5743 = vadd.f32 %v5647, %v5698
        %v5744 = vadd.f32 %v5648, %v5700
        %v5745 = vadd.f32 %v5649, %v5702
        %v5746 = vadd.f32 %v5650, %v5704
        %v5747 = vadd.f32 %v5651, %v5706
        %v5748 = vadd.f32 %v5652, %v5708
        %v5749 = vadd.f32 %v5653, %v5710
        %v5750 = vadd.f32 %v5654, %v5712
        %v5751 = vadd.f32 %v5655, %v5714
        %v5752 = vadd.f32 %v5656, %v5716
        %v5753 = vadd.f32 %v5657, %v5718
        %v5754 = vadd.f32 %v5658, %v5720
        %v5755 = vadd.f32 %v5659, %v5722
        %v5756 = vadd.f32 %v5660, %v5724
        %v5757 = vmul.f32 %v406, 6.9619324e-05
        %v5758 = vmul.f32 %v407, 6.9619324e-05
        %v5759 = vmul.f32 %v408, 6.9619324e-05
        %v5760 = vmul.f32 %v409, 6.9619324e-05
        %v5761 = vmul.f32 %v410, 6.9619324e-05
        %v5762 = vmul.f32 %v411, 6.9619324e-05
        %v5763 = vmul.f32 %v412, 6.9619324e-05
        %v5764 = vmul.f32 %v413, 6.9619324e-05
        %v5765 = vmul.f32 %v414, 6.9619324e-05
        %v5766 = vmul.f32 %v415, 6.9619324e-05
        %v5767 = vmul.f32 %v416, 6.9619324e-05
        %v5768 = vmul.f32 %v417, 6.9619324e-05
        %v5769 = vmul.f32 %v418, 6.9619324e-05
        %v5770 = vmul.f32 %v419, 6.9619324e-05
        %v5771 = vmul.f32 %v420, 6.9619324e-05
        %v5772 = vmul.f32 %v421, 6.9619324e-05
        %5789 = vrot.lane.b32.xlu0 %v5757, 126
        %v5790 = vpop.permute.xlu0 %5789
        %5791 = vrot.lane.b32.xlu0 %v5758, 126
        %v5792 = vpop.permute.xlu0 %5791
        %5793 = vrot.lane.b32.xlu0 %v5759, 126
        %v5794 = vpop.permute.xlu0 %5793
        %5795 = vrot.lane.b32.xlu0 %v5760, 126
        %v5796 = vpop.permute.xlu0 %5795
        %5797 = vrot.lane.b32.xlu0 %v5761, 126
        %v5798 = vpop.permute.xlu0 %5797
        %5799 = vrot.lane.b32.xlu0 %v5762, 126
        %v5800 = vpop.permute.xlu0 %5799
        %5801 = vrot.lane.b32.xlu0 %v5763, 126
        %v5802 = vpop.permute.xlu0 %5801
        %5803 = vrot.lane.b32.xlu0 %v5764, 126
        %v5804 = vpop.permute.xlu0 %5803
        %5805 = vrot.lane.b32.xlu0 %v5765, 126
        %v5806 = vpop.permute.xlu0 %5805
        %5807 = vrot.lane.b32.xlu0 %v5766, 126
        %v5808 = vpop.permute.xlu0 %5807
        %5809 = vrot.lane.b32.xlu0 %v5767, 126
        %v5810 = vpop.permute.xlu0 %5809
        %5811 = vrot.lane.b32.xlu0 %v5768, 126
        %v5812 = vpop.permute.xlu0 %5811
        %5813 = vrot.lane.b32.xlu0 %v5769, 126
        %v5814 = vpop.permute.xlu0 %5813
        %5815 = vrot.lane.b32.xlu0 %v5770, 126
        %v5816 = vpop.permute.xlu0 %5815
        %5817 = vrot.lane.b32.xlu0 %v5771, 126
        %v5818 = vpop.permute.xlu0 %5817
        %5819 = vrot.lane.b32.xlu0 %v5772, 126
        %v5820 = vpop.permute.xlu0 %5819
        %v5837 = vadd.f32 %v5741, %v5790
        %v5838 = vadd.f32 %v5742, %v5792
        %v5839 = vadd.f32 %v5743, %v5794
        %v5840 = vadd.f32 %v5744, %v5796
        %v5841 = vadd.f32 %v5745, %v5798
        %v5842 = vadd.f32 %v5746, %v5800
        %v5843 = vadd.f32 %v5747, %v5802
        %v5844 = vadd.f32 %v5748, %v5804
        %v5845 = vadd.f32 %v5749, %v5806
        %v5846 = vadd.f32 %v5750, %v5808
        %v5847 = vadd.f32 %v5751, %v5810
        %v5848 = vadd.f32 %v5752, %v5812
        %v5849 = vadd.f32 %v5753, %v5814
        %v5850 = vadd.f32 %v5754, %v5816
        %v5851 = vadd.f32 %v5755, %v5818
        %v5852 = vadd.f32 %v5756, %v5820
        %v5853 = vmul.f32 %v406, 0.010332424
        %v5854 = vmul.f32 %v407, 0.010332424
        %v5855 = vmul.f32 %v408, 0.010332424
        %v5856 = vmul.f32 %v409, 0.010332424
        %v5857 = vmul.f32 %v410, 0.010332424
        %v5858 = vmul.f32 %v411, 0.010332424
        %v5859 = vmul.f32 %v412, 0.010332424
        %v5860 = vmul.f32 %v413, 0.010332424
        %v5861 = vmul.f32 %v414, 0.010332424
        %v5862 = vmul.f32 %v415, 0.010332424
        %v5863 = vmul.f32 %v416, 0.010332424
        %v5864 = vmul.f32 %v417, 0.010332424
        %v5865 = vmul.f32 %v418, 0.010332424
        %v5866 = vmul.f32 %v419, 0.010332424
        %v5867 = vmul.f32 %v420, 0.010332424
        %v5868 = vmul.f32 %v421, 0.010332424
        %5885 = vrot.lane.b32.xlu0 %v5853, 125
        %v5886 = vpop.permute.xlu0 %5885
        %5887 = vrot.lane.b32.xlu0 %v5854, 125
        %v5888 = vpop.permute.xlu0 %5887
        %5889 = vrot.lane.b32.xlu0 %v5855, 125
        %v5890 = vpop.permute.xlu0 %5889
        %5891 = vrot.lane.b32.xlu0 %v5856, 125
        %v5892 = vpop.permute.xlu0 %5891
        %5893 = vrot.lane.b32.xlu0 %v5857, 125
        %v5894 = vpop.permute.xlu0 %5893
        %5895 = vrot.lane.b32.xlu0 %v5858, 125
        %v5896 = vpop.permute.xlu0 %5895
        %5897 = vrot.lane.b32.xlu0 %v5859, 125
        %v5898 = vpop.permute.xlu0 %5897
        %5899 = vrot.lane.b32.xlu0 %v5860, 125
        %v5900 = vpop.permute.xlu0 %5899
        %5901 = vrot.lane.b32.xlu0 %v5861, 125
        %v5902 = vpop.permute.xlu0 %5901
        %5903 = vrot.lane.b32.xlu0 %v5862, 125
        %v5904 = vpop.permute.xlu0 %5903
        %5905 = vrot.lane.b32.xlu0 %v5863, 125
        %v5906 = vpop.permute.xlu0 %5905
        %5907 = vrot.lane.b32.xlu0 %v5864, 125
        %v5908 = vpop.permute.xlu0 %5907
        %5909 = vrot.lane.b32.xlu0 %v5865, 125
        %v5910 = vpop.permute.xlu0 %5909
        %5911 = vrot.lane.b32.xlu0 %v5866, 125
        %v5912 = vpop.permute.xlu0 %5911
        %5913 = vrot.lane.b32.xlu0 %v5867, 125
        %v5914 = vpop.permute.xlu0 %5913
        %5915 = vrot.lane.b32.xlu0 %v5868, 125
        %v5916 = vpop.permute.xlu0 %5915
        %v5933 = vadd.f32 %v5837, %v5886
        %v5934 = vadd.f32 %v5838, %v5888
        %v5935 = vadd.f32 %v5839, %v5890
        %v5936 = vadd.f32 %v5840, %v5892
        %v5937 = vadd.f32 %v5841, %v5894
        %v5938 = vadd.f32 %v5842, %v5896
        %v5939 = vadd.f32 %v5843, %v5898
        %v5940 = vadd.f32 %v5844, %v5900
        %v5941 = vadd.f32 %v5845, %v5902
        %v5942 = vadd.f32 %v5846, %v5904
        %v5943 = vadd.f32 %v5847, %v5906
        %v5944 = vadd.f32 %v5848, %v5908
        %v5945 = vadd.f32 %v5849, %v5910
        %v5946 = vadd.f32 %v5850, %v5912
        %v5947 = vadd.f32 %v5851, %v5914
        %v5948 = vadd.f32 %v5852, %v5916
        %v5949 = vmul.f32 %v406, 0.20753229
        %v5950 = vmul.f32 %v407, 0.20753229
        %v5951 = vmul.f32 %v408, 0.20753229
        %v5952 = vmul.f32 %v409, 0.20753229
        %v5953 = vmul.f32 %v410, 0.20753229
        %v5954 = vmul.f32 %v411, 0.20753229
        %v5955 = vmul.f32 %v412, 0.20753229
        %v5956 = vmul.f32 %v413, 0.20753229
        %v5957 = vmul.f32 %v414, 0.20753229
        %v5958 = vmul.f32 %v415, 0.20753229
        %v5959 = vmul.f32 %v416, 0.20753229
        %v5960 = vmul.f32 %v417, 0.20753229
        %v5961 = vmul.f32 %v418, 0.20753229
        %v5962 = vmul.f32 %v419, 0.20753229
        %v5963 = vmul.f32 %v420, 0.20753229
        %v5964 = vmul.f32 %v421, 0.20753229
        %5981 = vrot.lane.b32.xlu0 %v5949, 124
        %v5982 = vpop.permute.xlu0 %5981
        %5983 = vrot.lane.b32.xlu0 %v5950, 124
        %v5984 = vpop.permute.xlu0 %5983
        %5985 = vrot.lane.b32.xlu0 %v5951, 124
        %v5986 = vpop.permute.xlu0 %5985
        %5987 = vrot.lane.b32.xlu0 %v5952, 124
        %v5988 = vpop.permute.xlu0 %5987
        %5989 = vrot.lane.b32.xlu0 %v5953, 124
        %v5990 = vpop.permute.xlu0 %5989
        %5991 = vrot.lane.b32.xlu0 %v5954, 124
        %v5992 = vpop.permute.xlu0 %5991
        %5993 = vrot.lane.b32.xlu0 %v5955, 124
        %v5994 = vpop.permute.xlu0 %5993
        %5995 = vrot.lane.b32.xlu0 %v5956, 124
        %v5996 = vpop.permute.xlu0 %5995
        %5997 = vrot.lane.b32.xlu0 %v5957, 124
        %v5998 = vpop.permute.xlu0 %5997
        %5999 = vrot.lane.b32.xlu0 %v5958, 124
        %v6000 = vpop.permute.xlu0 %5999
        %6001 = vrot.lane.b32.xlu0 %v5959, 124
        %v6002 = vpop.permute.xlu0 %6001
        %6003 = vrot.lane.b32.xlu0 %v5960, 124
        %v6004 = vpop.permute.xlu0 %6003
        %6005 = vrot.lane.b32.xlu0 %v5961, 124
        %v6006 = vpop.permute.xlu0 %6005
        %6007 = vrot.lane.b32.xlu0 %v5962, 124
        %v6008 = vpop.permute.xlu0 %6007
        %6009 = vrot.lane.b32.xlu0 %v5963, 124
        %v6010 = vpop.permute.xlu0 %6009
        %6011 = vrot.lane.b32.xlu0 %v5964, 124
        %v6012 = vpop.permute.xlu0 %6011
        %v6029 = vadd.f32 %v5933, %v5982
        %v6030 = vadd.f32 %v5934, %v5984
        %v6031 = vadd.f32 %v5935, %v5986
        %v6032 = vadd.f32 %v5936, %v5988
        %v6033 = vadd.f32 %v5937, %v5990
        %v6034 = vadd.f32 %v5938, %v5992
        %v6035 = vadd.f32 %v5939, %v5994
        %v6036 = vadd.f32 %v5940, %v5996
        %v6037 = vadd.f32 %v5941, %v5998
        %v6038 = vadd.f32 %v5942, %v6000
        %v6039 = vadd.f32 %v5943, %v6002
        %v6040 = vadd.f32 %v5944, %v6004
        %v6041 = vadd.f32 %v5945, %v6006
        %v6042 = vadd.f32 %v5946, %v6008
        %v6043 = vadd.f32 %v5947, %v6010
        %v6044 = vadd.f32 %v5948, %v6012
        %v6045 = vmul.f32 %v406, 0.5641312
        %v6046 = vmul.f32 %v407, 0.5641312
        %v6047 = vmul.f32 %v408, 0.5641312
        %v6048 = vmul.f32 %v409, 0.5641312
        %v6049 = vmul.f32 %v410, 0.5641312
        %v6050 = vmul.f32 %v411, 0.5641312
        %v6051 = vmul.f32 %v412, 0.5641312
        %v6052 = vmul.f32 %v413, 0.5641312
        %v6053 = vmul.f32 %v414, 0.5641312
        %v6054 = vmul.f32 %v415, 0.5641312
        %v6055 = vmul.f32 %v416, 0.5641312
        %v6056 = vmul.f32 %v417, 0.5641312
        %v6057 = vmul.f32 %v418, 0.5641312
        %v6058 = vmul.f32 %v419, 0.5641312
        %v6059 = vmul.f32 %v420, 0.5641312
        %v6060 = vmul.f32 %v421, 0.5641312
        %6077 = vrot.lane.b32.xlu0 %v6045, 123
        %v6078 = vpop.permute.xlu0 %6077
        %6079 = vrot.lane.b32.xlu0 %v6046, 123
        %v6080 = vpop.permute.xlu0 %6079
        %6081 = vrot.lane.b32.xlu0 %v6047, 123
        %v6082 = vpop.permute.xlu0 %6081
        %6083 = vrot.lane.b32.xlu0 %v6048, 123
        %v6084 = vpop.permute.xlu0 %6083
        %6085 = vrot.lane.b32.xlu0 %v6049, 123
        %v6086 = vpop.permute.xlu0 %6085
        %6087 = vrot.lane.b32.xlu0 %v6050, 123
        %v6088 = vpop.permute.xlu0 %6087
        %6089 = vrot.lane.b32.xlu0 %v6051, 123
        %v6090 = vpop.permute.xlu0 %6089
        %6091 = vrot.lane.b32.xlu0 %v6052, 123
        %v6092 = vpop.permute.xlu0 %6091
        %6093 = vrot.lane.b32.xlu0 %v6053, 123
        %v6094 = vpop.permute.xlu0 %6093
        %6095 = vrot.lane.b32.xlu0 %v6054, 123
        %v6096 = vpop.permute.xlu0 %6095
        %6097 = vrot.lane.b32.xlu0 %v6055, 123
        %v6098 = vpop.permute.xlu0 %6097
        %6099 = vrot.lane.b32.xlu0 %v6056, 123
        %v6100 = vpop.permute.xlu0 %6099
        %6101 = vrot.lane.b32.xlu0 %v6057, 123
        %v6102 = vpop.permute.xlu0 %6101
        %6103 = vrot.lane.b32.xlu0 %v6058, 123
        %v6104 = vpop.permute.xlu0 %6103
        %6105 = vrot.lane.b32.xlu0 %v6059, 123
        %v6106 = vpop.permute.xlu0 %6105
        %6107 = vrot.lane.b32.xlu0 %v6060, 123
        %v6108 = vpop.permute.xlu0 %6107
        %v6125 = vadd.f32 %v6029, %v6078
        %v6126 = vadd.f32 %v6030, %v6080
        %v6127 = vadd.f32 %v6031, %v6082
        %v6128 = vadd.f32 %v6032, %v6084
        %v6129 = vadd.f32 %v6033, %v6086
        %v6130 = vadd.f32 %v6034, %v6088
        %v6131 = vadd.f32 %v6035, %v6090
        %v6132 = vadd.f32 %v6036, %v6092
        %v6133 = vadd.f32 %v6037, %v6094
        %v6134 = vadd.f32 %v6038, %v6096
        %v6135 = vadd.f32 %v6039, %v6098
        %v6136 = vadd.f32 %v6040, %v6100
        %v6137 = vadd.f32 %v6041, %v6102
        %v6138 = vadd.f32 %v6042, %v6104
        %v6139 = vadd.f32 %v6043, %v6106
        %v6140 = vadd.f32 %v6044, %v6108
        %6141 = vrot.lane.b32.xlu0 %v5949, 122
        %v6142 = vpop.permute.xlu0 %6141
        %6143 = vrot.lane.b32.xlu0 %v5950, 122
        %v6144 = vpop.permute.xlu0 %6143
        %6145 = vrot.lane.b32.xlu0 %v5951, 122
        %v6146 = vpop.permute.xlu0 %6145
        %6147 = vrot.lane.b32.xlu0 %v5952, 122
        %v6148 = vpop.permute.xlu0 %6147
        %6149 = vrot.lane.b32.xlu0 %v5953, 122
        %v6150 = vpop.permute.xlu0 %6149
        %6151 = vrot.lane.b32.xlu0 %v5954, 122
        %v6152 = vpop.permute.xlu0 %6151
        %6153 = vrot.lane.b32.xlu0 %v5955, 122
        %v6154 = vpop.permute.xlu0 %6153
        %6155 = vrot.lane.b32.xlu0 %v5956, 122
        %v6156 = vpop.permute.xlu0 %6155
        %6157 = vrot.lane.b32.xlu0 %v5957, 122
        %v6158 = vpop.permute.xlu0 %6157
        %6159 = vrot.lane.b32.xlu0 %v5958, 122
        %v6160 = vpop.permute.xlu0 %6159
        %6161 = vrot.lane.b32.xlu0 %v5959, 122
        %v6162 = vpop.permute.xlu0 %6161
        %6163 = vrot.lane.b32.xlu0 %v5960, 122
        %v6164 = vpop.permute.xlu0 %6163
        %6165 = vrot.lane.b32.xlu0 %v5961, 122
        %v6166 = vpop.permute.xlu0 %6165
        %6167 = vrot.lane.b32.xlu0 %v5962, 122
        %v6168 = vpop.permute.xlu0 %6167
        %6169 = vrot.lane.b32.xlu0 %v5963, 122
        %v6170 = vpop.permute.xlu0 %6169
        %6171 = vrot.lane.b32.xlu0 %v5964, 122
        %v6172 = vpop.permute.xlu0 %6171
        %v6189 = vadd.f32 %v6125, %v6142
        %v6190 = vadd.f32 %v6126, %v6144
        %v6191 = vadd.f32 %v6127, %v6146
        %v6192 = vadd.f32 %v6128, %v6148
        %v6193 = vadd.f32 %v6129, %v6150
        %v6194 = vadd.f32 %v6130, %v6152
        %v6195 = vadd.f32 %v6131, %v6154
        %v6196 = vadd.f32 %v6132, %v6156
        %v6197 = vadd.f32 %v6133, %v6158
        %v6198 = vadd.f32 %v6134, %v6160
        %v6199 = vadd.f32 %v6135, %v6162
        %v6200 = vadd.f32 %v6136, %v6164
        %v6201 = vadd.f32 %v6137, %v6166
        %v6202 = vadd.f32 %v6138, %v6168
        %v6203 = vadd.f32 %v6139, %v6170
        %v6204 = vadd.f32 %v6140, %v6172
        %6205 = vrot.lane.b32.xlu0 %v5853, 121
        %v6206 = vpop.permute.xlu0 %6205
        %6207 = vrot.lane.b32.xlu0 %v5854, 121
        %v6208 = vpop.permute.xlu0 %6207
        %6209 = vrot.lane.b32.xlu0 %v5855, 121
        %v6210 = vpop.permute.xlu0 %6209
        %6211 = vrot.lane.b32.xlu0 %v5856, 121
        %v6212 = vpop.permute.xlu0 %6211
        %6213 = vrot.lane.b32.xlu0 %v5857, 121
        %v6214 = vpop.permute.xlu0 %6213
        %6215 = vrot.lane.b32.xlu0 %v5858, 121
        %v6216 = vpop.permute.xlu0 %6215
        %6217 = vrot.lane.b32.xlu0 %v5859, 121
        %v6218 = vpop.permute.xlu0 %6217
        %6219 = vrot.lane.b32.xlu0 %v5860, 121
        %v6220 = vpop.permute.xlu0 %6219
        %6221 = vrot.lane.b32.xlu0 %v5861, 121
        %v6222 = vpop.permute.xlu0 %6221
        %6223 = vrot.lane.b32.xlu0 %v5862, 121
        %v6224 = vpop.permute.xlu0 %6223
        %6225 = vrot.lane.b32.xlu0 %v5863, 121
        %v6226 = vpop.permute.xlu0 %6225
        %6227 = vrot.lane.b32.xlu0 %v5864, 121
        %v6228 = vpop.permute.xlu0 %6227
        %6229 = vrot.lane.b32.xlu0 %v5865, 121
        %v6230 = vpop.permute.xlu0 %6229
        %6231 = vrot.lane.b32.xlu0 %v5866, 121
        %v6232 = vpop.permute.xlu0 %6231
        %6233 = vrot.lane.b32.xlu0 %v5867, 121
        %v6234 = vpop.permute.xlu0 %6233
        %6235 = vrot.lane.b32.xlu0 %v5868, 121
        %v6236 = vpop.permute.xlu0 %6235
        %v6253 = vadd.f32 %v6189, %v6206
        %v6254 = vadd.f32 %v6190, %v6208
        %v6255 = vadd.f32 %v6191, %v6210
        %v6256 = vadd.f32 %v6192, %v6212
        %v6257 = vadd.f32 %v6193, %v6214
        %v6258 = vadd.f32 %v6194, %v6216
        %v6259 = vadd.f32 %v6195, %v6218
        %v6260 = vadd.f32 %v6196, %v6220
        %v6261 = vadd.f32 %v6197, %v6222
        %v6262 = vadd.f32 %v6198, %v6224
        %v6263 = vadd.f32 %v6199, %v6226
        %v6264 = vadd.f32 %v6200, %v6228
        %v6265 = vadd.f32 %v6201, %v6230
        %v6266 = vadd.f32 %v6202, %v6232
        %v6267 = vadd.f32 %v6203, %v6234
        %v6268 = vadd.f32 %v6204, %v6236
        %6269 = vrot.lane.b32.xlu0 %v5757, 120
        %v6270 = vpop.permute.xlu0 %6269
        %6271 = vrot.lane.b32.xlu0 %v5758, 120
        %v6272 = vpop.permute.xlu0 %6271
        %6273 = vrot.lane.b32.xlu0 %v5759, 120
        %v6274 = vpop.permute.xlu0 %6273
        %6275 = vrot.lane.b32.xlu0 %v5760, 120
        %v6276 = vpop.permute.xlu0 %6275
        %6277 = vrot.lane.b32.xlu0 %v5761, 120
        %v6278 = vpop.permute.xlu0 %6277
        %6279 = vrot.lane.b32.xlu0 %v5762, 120
        %v6280 = vpop.permute.xlu0 %6279
        %6281 = vrot.lane.b32.xlu0 %v5763, 120
        %v6282 = vpop.permute.xlu0 %6281
        %6283 = vrot.lane.b32.xlu0 %v5764, 120
        %v6284 = vpop.permute.xlu0 %6283
        %6285 = vrot.lane.b32.xlu0 %v5765, 120
        %v6286 = vpop.permute.xlu0 %6285
        %6287 = vrot.lane.b32.xlu0 %v5766, 120
        %v6288 = vpop.permute.xlu0 %6287
        %6289 = vrot.lane.b32.xlu0 %v5767, 120
        %v6290 = vpop.permute.xlu0 %6289
        %6291 = vrot.lane.b32.xlu0 %v5768, 120
        %v6292 = vpop.permute.xlu0 %6291
        %6293 = vrot.lane.b32.xlu0 %v5769, 120
        %v6294 = vpop.permute.xlu0 %6293
        %6295 = vrot.lane.b32.xlu0 %v5770, 120
        %v6296 = vpop.permute.xlu0 %6295
        %6297 = vrot.lane.b32.xlu0 %v5771, 120
        %v6298 = vpop.permute.xlu0 %6297
        %6299 = vrot.lane.b32.xlu0 %v5772, 120
        %v6300 = vpop.permute.xlu0 %6299
        %v6317 = vadd.f32 %v6253, %v6270
        %v6318 = vadd.f32 %v6254, %v6272
        %v6319 = vadd.f32 %v6255, %v6274
        %v6320 = vadd.f32 %v6256, %v6276
        %v6321 = vadd.f32 %v6257, %v6278
        %v6322 = vadd.f32 %v6258, %v6280
        %v6323 = vadd.f32 %v6259, %v6282
        %v6324 = vadd.f32 %v6260, %v6284
        %v6325 = vadd.f32 %v6261, %v6286
        %v6326 = vadd.f32 %v6262, %v6288
        %v6327 = vadd.f32 %v6263, %v6290
        %v6328 = vadd.f32 %v6264, %v6292
        %v6329 = vadd.f32 %v6265, %v6294
        %v6330 = vadd.f32 %v6266, %v6296
        %v6331 = vadd.f32 %v6267, %v6298
        %v6332 = vadd.f32 %v6268, %v6300
        %6333 = vrot.lane.b32.xlu0 %v5661, 119
        %v6334 = vpop.permute.xlu0 %6333
        %6335 = vrot.lane.b32.xlu0 %v5662, 119
        %v6336 = vpop.permute.xlu0 %6335
        %6337 = vrot.lane.b32.xlu0 %v5663, 119
        %v6338 = vpop.permute.xlu0 %6337
        %6339 = vrot.lane.b32.xlu0 %v5664, 119
        %v6340 = vpop.permute.xlu0 %6339
        %6341 = vrot.lane.b32.xlu0 %v5665, 119
        %v6342 = vpop.permute.xlu0 %6341
        %6343 = vrot.lane.b32.xlu0 %v5666, 119
        %v6344 = vpop.permute.xlu0 %6343
        %6345 = vrot.lane.b32.xlu0 %v5667, 119
        %v6346 = vpop.permute.xlu0 %6345
        %6347 = vrot.lane.b32.xlu0 %v5668, 119
        %v6348 = vpop.permute.xlu0 %6347
        %6349 = vrot.lane.b32.xlu0 %v5669, 119
        %v6350 = vpop.permute.xlu0 %6349
        %6351 = vrot.lane.b32.xlu0 %v5670, 119
        %v6352 = vpop.permute.xlu0 %6351
        %6353 = vrot.lane.b32.xlu0 %v5671, 119
        %v6354 = vpop.permute.xlu0 %6353
        %6355 = vrot.lane.b32.xlu0 %v5672, 119
        %v6356 = vpop.permute.xlu0 %6355
        %6357 = vrot.lane.b32.xlu0 %v5673, 119
        %v6358 = vpop.permute.xlu0 %6357
        %6359 = vrot.lane.b32.xlu0 %v5674, 119
        %v6360 = vpop.permute.xlu0 %6359
        %6361 = vrot.lane.b32.xlu0 %v5675, 119
        %v6362 = vpop.permute.xlu0 %6361
        %6363 = vrot.lane.b32.xlu0 %v5676, 119
        %v6364 = vpop.permute.xlu0 %6363
        %v6381 = vadd.f32 %v6317, %v6334
        %v6382 = vadd.f32 %v6318, %v6336
        %v6383 = vadd.f32 %v6319, %v6338
        %v6384 = vadd.f32 %v6320, %v6340
        %v6385 = vadd.f32 %v6321, %v6342
        %v6386 = vadd.f32 %v6322, %v6344
        %v6387 = vadd.f32 %v6323, %v6346
        %v6388 = vadd.f32 %v6324, %v6348
        %v6389 = vadd.f32 %v6325, %v6350
        %v6390 = vadd.f32 %v6326, %v6352
        %v6391 = vadd.f32 %v6327, %v6354
        %v6392 = vadd.f32 %v6328, %v6356
        %v6393 = vadd.f32 %v6329, %v6358
        %v6394 = vadd.f32 %v6330, %v6360
        %v6395 = vadd.f32 %v6331, %v6362
        %v6396 = vadd.f32 %v6332, %v6364
        %6413 = vrot.lane.b32.xlu0 %v5645, 118
        %v6414 = vpop.permute.xlu0 %6413
        %6415 = vrot.lane.b32.xlu0 %v5646, 118
        %v6416 = vpop.permute.xlu0 %6415
        %6417 = vrot.lane.b32.xlu0 %v5647, 118
        %v6418 = vpop.permute.xlu0 %6417
        %6419 = vrot.lane.b32.xlu0 %v5648, 118
        %v6420 = vpop.permute.xlu0 %6419
        %6421 = vrot.lane.b32.xlu0 %v5649, 118
        %v6422 = vpop.permute.xlu0 %6421
        %6423 = vrot.lane.b32.xlu0 %v5650, 118
        %v6424 = vpop.permute.xlu0 %6423
        %6425 = vrot.lane.b32.xlu0 %v5651, 118
        %v6426 = vpop.permute.xlu0 %6425
        %6427 = vrot.lane.b32.xlu0 %v5652, 118
        %v6428 = vpop.permute.xlu0 %6427
        %6429 = vrot.lane.b32.xlu0 %v5653, 118
        %v6430 = vpop.permute.xlu0 %6429
        %6431 = vrot.lane.b32.xlu0 %v5654, 118
        %v6432 = vpop.permute.xlu0 %6431
        %6433 = vrot.lane.b32.xlu0 %v5655, 118
        %v6434 = vpop.permute.xlu0 %6433
        %6435 = vrot.lane.b32.xlu0 %v5656, 118
        %v6436 = vpop.permute.xlu0 %6435
        %6437 = vrot.lane.b32.xlu0 %v5657, 118
        %v6438 = vpop.permute.xlu0 %6437
        %6439 = vrot.lane.b32.xlu0 %v5658, 118
        %v6440 = vpop.permute.xlu0 %6439
        %6441 = vrot.lane.b32.xlu0 %v5659, 118
        %v6442 = vpop.permute.xlu0 %6441
        %6443 = vrot.lane.b32.xlu0 %v5660, 118
        %v6444 = vpop.permute.xlu0 %6443
        %v6461 = vadd.f32 %v6381, %v6414
        %v6462 = vadd.f32 %v6382, %v6416
        %v6463 = vadd.f32 %v6383, %v6418
        %v6464 = vadd.f32 %v6384, %v6420
        %v6465 = vadd.f32 %v6385, %v6422
        %v6466 = vadd.f32 %v6386, %v6424
        %v6467 = vadd.f32 %v6387, %v6426
        %v6468 = vadd.f32 %v6388, %v6428
        %v6469 = vadd.f32 %v6389, %v6430
        %v6470 = vadd.f32 %v6390, %v6432
        %v6471 = vadd.f32 %v6391, %v6434
        %v6472 = vadd.f32 %v6392, %v6436
        %v6473 = vadd.f32 %v6393, %v6438
        %v6474 = vadd.f32 %v6394, %v6440
        %v6475 = vadd.f32 %v6395, %v6442
        %v6476 = vadd.f32 %v6396, %v6444
        %v6477 = vmul.f32 %v6461, 7.834623e-12
        %v6478 = vmul.f32 %v6462, 7.834623e-12
        %v6479 = vmul.f32 %v6465, 7.834623e-12
        %v6480 = vmul.f32 %v6466, 7.834623e-12
        %v6481 = vmul.f32 %v6469, 7.834623e-12
        %v6482 = vmul.f32 %v6470, 7.834623e-12
        %v6483 = vmul.f32 %v6473, 7.834623e-12
        %v6484 = vmul.f32 %v6474, 7.834623e-12
        %v6485 = vmul.f32 %v6461, 6.3484606e-08
        %v6486 = vmul.f32 %v6462, 6.3484606e-08
        %v6487 = vmul.f32 %v6463, 6.3484606e-08
        %v6488 = vmul.f32 %v6465, 6.3484606e-08
        %v6489 = vmul.f32 %v6466, 6.3484606e-08
        %v6490 = vmul.f32 %v6467, 6.3484606e-08
        %v6491 = vmul.f32 %v6469, 6.3484606e-08
        %v6492 = vmul.f32 %v6470, 6.3484606e-08
        %v6493 = vmul.f32 %v6471, 6.3484606e-08
        %v6494 = vmul.f32 %v6473, 6.3484606e-08
        %v6495 = vmul.f32 %v6474, 6.3484606e-08
        %v6496 = vmul.f32 %v6475, 6.3484606e-08
        %v6509 = vrot.slane %v6485, 1
        %v6510 = vrot.slane %v6486, 1
        %v6511 = vsel %vm1286, %v6509, %v6510
        %v6512 = vrot.slane %v6487, 1
        %v6513 = vsel %vm1286, %v6510, %v6512
        %v6514 = vrot.slane %v6488, 1
        %v6515 = vrot.slane %v6489, 1
        %v6516 = vsel %vm1286, %v6514, %v6515
        %v6517 = vrot.slane %v6490, 1
        %v6518 = vsel %vm1286, %v6515, %v6517
        %v6519 = vrot.slane %v6491, 1
        %v6520 = vrot.slane %v6492, 1
        %v6521 = vsel %vm1286, %v6519, %v6520
        %v6522 = vrot.slane %v6493, 1
        %v6523 = vsel %vm1286, %v6520, %v6522
        %v6524 = vrot.slane %v6494, 1
        %v6525 = vrot.slane %v6495, 1
        %v6526 = vsel %vm1286, %v6524, %v6525
        %v6527 = vrot.slane %v6496, 1
        %v6528 = vsel %vm1286, %v6525, %v6527
        %v6537 = vadd.f32 %v6477, %v6511
        %v6538 = vadd.f32 %v6478, %v6513
        %v6539 = vadd.f32 %v6479, %v6516
        %v6540 = vadd.f32 %v6480, %v6518
        %v6541 = vadd.f32 %v6481, %v6521
        %v6542 = vadd.f32 %v6482, %v6523
        %v6543 = vadd.f32 %v6483, %v6526
        %v6544 = vadd.f32 %v6484, %v6528
        %v6545 = vmul.f32 %v6461, 6.9619324e-05
        %v6546 = vmul.f32 %v6462, 6.9619324e-05
        %v6547 = vmul.f32 %v6463, 6.9619324e-05
        %v6548 = vmul.f32 %v6465, 6.9619324e-05
        %v6549 = vmul.f32 %v6466, 6.9619324e-05
        %v6550 = vmul.f32 %v6467, 6.9619324e-05
        %v6551 = vmul.f32 %v6469, 6.9619324e-05
        %v6552 = vmul.f32 %v6470, 6.9619324e-05
        %v6553 = vmul.f32 %v6471, 6.9619324e-05
        %v6554 = vmul.f32 %v6473, 6.9619324e-05
        %v6555 = vmul.f32 %v6474, 6.9619324e-05
        %v6556 = vmul.f32 %v6475, 6.9619324e-05
        %v6569 = vrot.slane %v6545, 2
        %v6570 = vrot.slane %v6546, 2
        %v6571 = vsel %vm1347, %v6569, %v6570
        %v6572 = vrot.slane %v6547, 2
        %v6573 = vsel %vm1347, %v6570, %v6572
        %v6574 = vrot.slane %v6548, 2
        %v6575 = vrot.slane %v6549, 2
        %v6576 = vsel %vm1347, %v6574, %v6575
        %v6577 = vrot.slane %v6550, 2
        %v6578 = vsel %vm1347, %v6575, %v6577
        %v6579 = vrot.slane %v6551, 2
        %v6580 = vrot.slane %v6552, 2
        %v6581 = vsel %vm1347, %v6579, %v6580
        %v6582 = vrot.slane %v6553, 2
        %v6583 = vsel %vm1347, %v6580, %v6582
        %v6584 = vrot.slane %v6554, 2
        %v6585 = vrot.slane %v6555, 2
        %v6586 = vsel %vm1347, %v6584, %v6585
        %v6587 = vrot.slane %v6556, 2
        %v6588 = vsel %vm1347, %v6585, %v6587
        %v6597 = vadd.f32 %v6537, %v6571
        %v6598 = vadd.f32 %v6538, %v6573
        %v6599 = vadd.f32 %v6539, %v6576
        %v6600 = vadd.f32 %v6540, %v6578
        %v6601 = vadd.f32 %v6541, %v6581
        %v6602 = vadd.f32 %v6542, %v6583
        %v6603 = vadd.f32 %v6543, %v6586
        %v6604 = vadd.f32 %v6544, %v6588
        %v6605 = vmul.f32 %v6461, 0.010332424
        %v6606 = vmul.f32 %v6462, 0.010332424
        %v6607 = vmul.f32 %v6463, 0.010332424
        %v6608 = vmul.f32 %v6465, 0.010332424
        %v6609 = vmul.f32 %v6466, 0.010332424
        %v6610 = vmul.f32 %v6467, 0.010332424
        %v6611 = vmul.f32 %v6469, 0.010332424
        %v6612 = vmul.f32 %v6470, 0.010332424
        %v6613 = vmul.f32 %v6471, 0.010332424
        %v6614 = vmul.f32 %v6473, 0.010332424
        %v6615 = vmul.f32 %v6474, 0.010332424
        %v6616 = vmul.f32 %v6475, 0.010332424
        %v6629 = vrot.slane %v6605, 3
        %v6630 = vrot.slane %v6606, 3
        %v6631 = vsel %vm1408, %v6629, %v6630
        %v6632 = vrot.slane %v6607, 3
        %v6633 = vsel %vm1408, %v6630, %v6632
        %v6634 = vrot.slane %v6608, 3
        %v6635 = vrot.slane %v6609, 3
        %v6636 = vsel %vm1408, %v6634, %v6635
        %v6637 = vrot.slane %v6610, 3
        %v6638 = vsel %vm1408, %v6635, %v6637
        %v6639 = vrot.slane %v6611, 3
        %v6640 = vrot.slane %v6612, 3
        %v6641 = vsel %vm1408, %v6639, %v6640
        %v6642 = vrot.slane %v6613, 3
        %v6643 = vsel %vm1408, %v6640, %v6642
        %v6644 = vrot.slane %v6614, 3
        %v6645 = vrot.slane %v6615, 3
        %v6646 = vsel %vm1408, %v6644, %v6645
        %v6647 = vrot.slane %v6616, 3
        %v6648 = vsel %vm1408, %v6645, %v6647
        %v6657 = vadd.f32 %v6597, %v6631
        %v6658 = vadd.f32 %v6598, %v6633
        %v6659 = vadd.f32 %v6599, %v6636
        %v6660 = vadd.f32 %v6600, %v6638
        %v6661 = vadd.f32 %v6601, %v6641
        %v6662 = vadd.f32 %v6602, %v6643
        %v6663 = vadd.f32 %v6603, %v6646
        %v6664 = vadd.f32 %v6604, %v6648
        %v6665 = vmul.f32 %v6461, 0.20753229
        %v6666 = vmul.f32 %v6462, 0.20753229
        %v6667 = vmul.f32 %v6463, 0.20753229
        %v6668 = vmul.f32 %v6465, 0.20753229
        %v6669 = vmul.f32 %v6466, 0.20753229
        %v6670 = vmul.f32 %v6467, 0.20753229
        %v6671 = vmul.f32 %v6469, 0.20753229
        %v6672 = vmul.f32 %v6470, 0.20753229
        %v6673 = vmul.f32 %v6471, 0.20753229
        %v6674 = vmul.f32 %v6473, 0.20753229
        %v6675 = vmul.f32 %v6474, 0.20753229
        %v6676 = vmul.f32 %v6475, 0.20753229
        %v6689 = vrot.slane %v6665, 4
        %v6690 = vrot.slane %v6666, 4
        %v6691 = vsel %vm1469, %v6689, %v6690
        %v6692 = vrot.slane %v6667, 4
        %v6693 = vsel %vm1469, %v6690, %v6692
        %v6694 = vrot.slane %v6668, 4
        %v6695 = vrot.slane %v6669, 4
        %v6696 = vsel %vm1469, %v6694, %v6695
        %v6697 = vrot.slane %v6670, 4
        %v6698 = vsel %vm1469, %v6695, %v6697
        %v6699 = vrot.slane %v6671, 4
        %v6700 = vrot.slane %v6672, 4
        %v6701 = vsel %vm1469, %v6699, %v6700
        %v6702 = vrot.slane %v6673, 4
        %v6703 = vsel %vm1469, %v6700, %v6702
        %v6704 = vrot.slane %v6674, 4
        %v6705 = vrot.slane %v6675, 4
        %v6706 = vsel %vm1469, %v6704, %v6705
        %v6707 = vrot.slane %v6676, 4
        %v6708 = vsel %vm1469, %v6705, %v6707
        %v6717 = vadd.f32 %v6657, %v6691
        %v6718 = vadd.f32 %v6658, %v6693
        %v6719 = vadd.f32 %v6659, %v6696
        %v6720 = vadd.f32 %v6660, %v6698
        %v6721 = vadd.f32 %v6661, %v6701
        %v6722 = vadd.f32 %v6662, %v6703
        %v6723 = vadd.f32 %v6663, %v6706
        %v6724 = vadd.f32 %v6664, %v6708
        %v6725 = vmul.f32 %v6461, 0.5641312
        %v6726 = vmul.f32 %v6462, 0.5641312
        %v6727 = vmul.f32 %v6463, 0.5641312
        %v6728 = vmul.f32 %v6465, 0.5641312
        %v6729 = vmul.f32 %v6466, 0.5641312
        %v6730 = vmul.f32 %v6467, 0.5641312
        %v6731 = vmul.f32 %v6469, 0.5641312
        %v6732 = vmul.f32 %v6470, 0.5641312
        %v6733 = vmul.f32 %v6471, 0.5641312
        %v6734 = vmul.f32 %v6473, 0.5641312
        %v6735 = vmul.f32 %v6474, 0.5641312
        %v6736 = vmul.f32 %v6475, 0.5641312
        %v6749 = vrot.slane %v6725, 5
        %v6750 = vrot.slane %v6726, 5
        %v6751 = vsel %vm1530, %v6749, %v6750
        %v6752 = vrot.slane %v6727, 5
        %v6753 = vsel %vm1530, %v6750, %v6752
        %v6754 = vrot.slane %v6728, 5
        %v6755 = vrot.slane %v6729, 5
        %v6756 = vsel %vm1530, %v6754, %v6755
        %v6757 = vrot.slane %v6730, 5
        %v6758 = vsel %vm1530, %v6755, %v6757
        %v6759 = vrot.slane %v6731, 5
        %v6760 = vrot.slane %v6732, 5
        %v6761 = vsel %vm1530, %v6759, %v6760
        %v6762 = vrot.slane %v6733, 5
        %v6763 = vsel %vm1530, %v6760, %v6762
        %v6764 = vrot.slane %v6734, 5
        %v6765 = vrot.slane %v6735, 5
        %v6766 = vsel %vm1530, %v6764, %v6765
        %v6767 = vrot.slane %v6736, 5
        %v6768 = vsel %vm1530, %v6765, %v6767
        %v6777 = vadd.f32 %v6717, %v6751
        %v6778 = vadd.f32 %v6718, %v6753
        %v6779 = vadd.f32 %v6719, %v6756
        %v6780 = vadd.f32 %v6720, %v6758
        %v6781 = vadd.f32 %v6721, %v6761
        %v6782 = vadd.f32 %v6722, %v6763
        %v6783 = vadd.f32 %v6723, %v6766
        %v6784 = vadd.f32 %v6724, %v6768
        %v6785 = vrot.slane %v6665, 6
        %v6786 = vrot.slane %v6666, 6
        %v6787 = vsel %vm1567, %v6785, %v6786
        %v6788 = vrot.slane %v6667, 6
        %v6789 = vsel %vm1567, %v6786, %v6788
        %v6790 = vrot.slane %v6668, 6
        %v6791 = vrot.slane %v6669, 6
        %v6792 = vsel %vm1567, %v6790, %v6791
        %v6793 = vrot.slane %v6670, 6
        %v6794 = vsel %vm1567, %v6791, %v6793
        %v6795 = vrot.slane %v6671, 6
        %v6796 = vrot.slane %v6672, 6
        %v6797 = vsel %vm1567, %v6795, %v6796
        %v6798 = vrot.slane %v6673, 6
        %v6799 = vsel %vm1567, %v6796, %v6798
        %v6800 = vrot.slane %v6674, 6
        %v6801 = vrot.slane %v6675, 6
        %v6802 = vsel %vm1567, %v6800, %v6801
        %v6803 = vrot.slane %v6676, 6
        %v6804 = vsel %vm1567, %v6801, %v6803
        %v6813 = vadd.f32 %v6777, %v6787
        %v6814 = vadd.f32 %v6778, %v6789
        %v6815 = vadd.f32 %v6779, %v6792
        %v6816 = vadd.f32 %v6780, %v6794
        %v6817 = vadd.f32 %v6781, %v6797
        %v6818 = vadd.f32 %v6782, %v6799
        %v6819 = vadd.f32 %v6783, %v6802
        %v6820 = vadd.f32 %v6784, %v6804
        %v6821 = vrot.slane %v6605, 7
        %v6822 = vrot.slane %v6606, 7
        %v6823 = vsel %vm1604, %v6821, %v6822
        %v6824 = vrot.slane %v6607, 7
        %v6825 = vsel %vm1604, %v6822, %v6824
        %v6826 = vrot.slane %v6608, 7
        %v6827 = vrot.slane %v6609, 7
        %v6828 = vsel %vm1604, %v6826, %v6827
        %v6829 = vrot.slane %v6610, 7
        %v6830 = vsel %vm1604, %v6827, %v6829
        %v6831 = vrot.slane %v6611, 7
        %v6832 = vrot.slane %v6612, 7
        %v6833 = vsel %vm1604, %v6831, %v6832
        %v6834 = vrot.slane %v6613, 7
        %v6835 = vsel %vm1604, %v6832, %v6834
        %v6836 = vrot.slane %v6614, 7
        %v6837 = vrot.slane %v6615, 7
        %v6838 = vsel %vm1604, %v6836, %v6837
        %v6839 = vrot.slane %v6616, 7
        %v6840 = vsel %vm1604, %v6837, %v6839
        %v6849 = vadd.f32 %v6813, %v6823
        %v6850 = vadd.f32 %v6814, %v6825
        %v6851 = vadd.f32 %v6815, %v6828
        %v6852 = vadd.f32 %v6816, %v6830
        %v6853 = vadd.f32 %v6817, %v6833
        %v6854 = vadd.f32 %v6818, %v6835
        %v6855 = vadd.f32 %v6819, %v6838
        %v6856 = vadd.f32 %v6820, %v6840
        %v6857 = vadd.f32 %v6849, %v6546
        %v6858 = vadd.f32 %v6850, %v6547
        %v6859 = vadd.f32 %v6851, %v6549
        %v6860 = vadd.f32 %v6852, %v6550
        %v6861 = vadd.f32 %v6853, %v6552
        %v6862 = vadd.f32 %v6854, %v6553
        %v6863 = vadd.f32 %v6855, %v6555
        %v6864 = vadd.f32 %v6856, %v6556
        %v6865 = vmul.f32 %v6464, 6.3484606e-08
        %v6866 = vmul.f32 %v6468, 6.3484606e-08
        %v6867 = vmul.f32 %v6472, 6.3484606e-08
        %v6868 = vmul.f32 %v6476, 6.3484606e-08
        %v6873 = vrot.slane %v6865, 1
        %v6874 = vsel %vm1286, %v6512, %v6873
        %v6875 = vrot.slane %v6866, 1
        %v6876 = vsel %vm1286, %v6517, %v6875
        %v6877 = vrot.slane %v6867, 1
        %v6878 = vsel %vm1286, %v6522, %v6877
        %v6879 = vrot.slane %v6868, 1
        %v6880 = vsel %vm1286, %v6527, %v6879
        %v6885 = vadd.f32 %v6857, %v6513
        %v6886 = vadd.f32 %v6858, %v6874
        %v6887 = vadd.f32 %v6859, %v6518
        %v6888 = vadd.f32 %v6860, %v6876
        %v6889 = vadd.f32 %v6861, %v6523
        %v6890 = vadd.f32 %v6862, %v6878
        %v6891 = vadd.f32 %v6863, %v6528
        %v6892 = vadd.f32 %v6864, %v6880
        %v6893 = vmul.f32 %v6463, 7.834623e-12
        %v6894 = vmul.f32 %v6464, 7.834623e-12
        %v6895 = vmul.f32 %v6467, 7.834623e-12
        %v6896 = vmul.f32 %v6468, 7.834623e-12
        %v6897 = vmul.f32 %v6471, 7.834623e-12
        %v6898 = vmul.f32 %v6472, 7.834623e-12
        %v6899 = vmul.f32 %v6475, 7.834623e-12
        %v6900 = vmul.f32 %v6476, 7.834623e-12
        %v6913 = vrot.slane %v6478, 2
        %v6914 = vrot.slane %v6893, 2
        %v6915 = vsel %vm1347, %v6913, %v6914
        %v6916 = vrot.slane %v6894, 2
        %v6917 = vsel %vm1347, %v6914, %v6916
        %v6918 = vrot.slane %v6480, 2
        %v6919 = vrot.slane %v6895, 2
        %v6920 = vsel %vm1347, %v6918, %v6919
        %v6921 = vrot.slane %v6896, 2
        %v6922 = vsel %vm1347, %v6919, %v6921
        %v6923 = vrot.slane %v6482, 2
        %v6924 = vrot.slane %v6897, 2
        %v6925 = vsel %vm1347, %v6923, %v6924
        %v6926 = vrot.slane %v6898, 2
        %v6927 = vsel %vm1347, %v6924, %v6926
        %v6928 = vrot.slane %v6484, 2
        %v6929 = vrot.slane %v6899, 2
        %v6930 = vsel %vm1347, %v6928, %v6929
        %v6931 = vrot.slane %v6900, 2
        %v6932 = vsel %vm1347, %v6929, %v6931
        %v6941 = vadd.f32 %v6885, %v6915
        %v6942 = vadd.f32 %v6886, %v6917
        %v6943 = vadd.f32 %v6887, %v6920
        %v6944 = vadd.f32 %v6888, %v6922
        %v6945 = vadd.f32 %v6889, %v6925
        %v6946 = vadd.f32 %v6890, %v6927
        %v6947 = vadd.f32 %v6891, %v6930
        %v6948 = vadd.f32 %v6892, %v6932
        %v6949 = vmul.f32 %v1725, %v1725
        %v6950 = vmul.f32 %v1726, %v1726
        %v6951 = vmul.f32 %v1727, %v1727
        %v6952 = vmul.f32 %v1728, %v1728
        %v6953 = vmul.f32 %v1729, %v1729
        %v6954 = vmul.f32 %v1730, %v1730
        %v6955 = vmul.f32 %v1731, %v1731
        %v6956 = vmul.f32 %v1732, %v1732
        %v6957 = vmul.f32 %v3029, %v3029
        %v6958 = vmul.f32 %v3030, %v3030
        %v6959 = vmul.f32 %v3031, %v3031
        %v6960 = vmul.f32 %v3032, %v3032
        %v6961 = vmul.f32 %v3033, %v3033
        %v6962 = vmul.f32 %v3034, %v3034
        %v6963 = vmul.f32 %v3035, %v3035
        %v6964 = vmul.f32 %v3036, %v3036
        %v6965 = vmul.f32 %v1725, %v3029
        %v6966 = vmul.f32 %v1726, %v3030
        %v6967 = vmul.f32 %v1727, %v3031
        %v6968 = vmul.f32 %v1728, %v3032
        %v6969 = vmul.f32 %v1729, %v3033
        %v6970 = vmul.f32 %v1730, %v3034
        %v6971 = vmul.f32 %v1731, %v3035
        %v6972 = vmul.f32 %v1732, %v3036
        %v6973 = vsub.f32 %v4333, %v6949
        %v6974 = vsub.f32 %v4334, %v6950
        %v6975 = vsub.f32 %v4335, %v6951
        %v6976 = vsub.f32 %v4336, %v6952
        %v6977 = vsub.f32 %v4337, %v6953
        %v6978 = vsub.f32 %v4338, %v6954
        %v6979 = vsub.f32 %v4339, %v6955
        %v6980 = vsub.f32 %v4340, %v6956
        %v6981 = vsub.f32 %v5637, %v6957
        %v6982 = vsub.f32 %v5638, %v6958
        %v6983 = vsub.f32 %v5639, %v6959
        %v6984 = vsub.f32 %v5640, %v6960
        %v6985 = vsub.f32 %v5641, %v6961
        %v6986 = vsub.f32 %v5642, %v6962
        %v6987 = vsub.f32 %v5643, %v6963
        %v6988 = vsub.f32 %v5644, %v6964
        %v6989 = vsub.f32 %v6941, %v6965
        %v6990 = vsub.f32 %v6942, %v6966
        %v6991 = vsub.f32 %v6943, %v6967
        %v6992 = vsub.f32 %v6944, %v6968
        %v6993 = vsub.f32 %v6945, %v6969
        %v6994 = vsub.f32 %v6946, %v6970
        %v6995 = vsub.f32 %v6947, %v6971
        %v6996 = vsub.f32 %v6948, %v6972
        %v6997 = vmul.f32 %v6965, 2.0
        %v6998 = vmul.f32 %v6966, 2.0
        %v6999 = vmul.f32 %v6967, 2.0
        %v7000 = vmul.f32 %v6968, 2.0
        %v7001 = vmul.f32 %v6969, 2.0
        %v7002 = vmul.f32 %v6970, 2.0
        %v7003 = vmul.f32 %v6971, 2.0
        %v7004 = vmul.f32 %v6972, 2.0
        %v7005 = vadd.f32 %v6997, 0.0001
        %v7006 = vadd.f32 %v6998, 0.0001
        %v7007 = vadd.f32 %v6999, 0.0001
        %v7008 = vadd.f32 %v7000, 0.0001
        %v7009 = vadd.f32 %v7001, 0.0001
        %v7010 = vadd.f32 %v7002, 0.0001
        %v7011 = vadd.f32 %v7003, 0.0001
        %v7012 = vadd.f32 %v7004, 0.0001
        %v7013 = vmul.f32 %v6989, 2.0
        %v7014 = vmul.f32 %v6990, 2.0
        %v7015 = vmul.f32 %v6991, 2.0
        %v7016 = vmul.f32 %v6992, 2.0
        %v7017 = vmul.f32 %v6993, 2.0
        %v7018 = vmul.f32 %v6994, 2.0
        %v7019 = vmul.f32 %v6995, 2.0
        %v7020 = vmul.f32 %v6996, 2.0
        %v7021 = vadd.f32 %v7013, 0.0009
        %v7022 = vadd.f32 %v7014, 0.0009
        %v7023 = vadd.f32 %v7015, 0.0009
        %v7024 = vadd.f32 %v7016, 0.0009
        %v7025 = vadd.f32 %v7017, 0.0009
        %v7026 = vadd.f32 %v7018, 0.0009
        %v7027 = vadd.f32 %v7019, 0.0009
        %v7028 = vadd.f32 %v7020, 0.0009
        %v7029 = vmul.f32 %v7005, %v7021
        %v7030 = vmul.f32 %v7006, %v7022
        %v7031 = vmul.f32 %v7007, %v7023
        %v7032 = vmul.f32 %v7008, %v7024
        %v7033 = vmul.f32 %v7009, %v7025
        %v7034 = vmul.f32 %v7010, %v7026
        %v7035 = vmul.f32 %v7011, %v7027
        %v7036 = vmul.f32 %v7012, %v7028
        %v7037 = vadd.f32 %v6949, %v6957
        %v7038 = vadd.f32 %v6950, %v6958
        %v7039 = vadd.f32 %v6951, %v6959
        %v7040 = vadd.f32 %v6952, %v6960
        %v7041 = vadd.f32 %v6953, %v6961
        %v7042 = vadd.f32 %v6954, %v6962
        %v7043 = vadd.f32 %v6955, %v6963
        %v7044 = vadd.f32 %v6956, %v6964
        %v7045 = vadd.f32 %v7037, 0.0001
        %v7046 = vadd.f32 %v7038, 0.0001
        %v7047 = vadd.f32 %v7039, 0.0001
        %v7048 = vadd.f32 %v7040, 0.0001
        %v7049 = vadd.f32 %v7041, 0.0001
        %v7050 = vadd.f32 %v7042, 0.0001
        %v7051 = vadd.f32 %v7043, 0.0001
        %v7052 = vadd.f32 %v7044, 0.0001
        %v7053 = vadd.f32 %v6973, %v6981
        %v7054 = vadd.f32 %v6974, %v6982
        %v7055 = vadd.f32 %v6975, %v6983
        %v7056 = vadd.f32 %v6976, %v6984
        %v7057 = vadd.f32 %v6977, %v6985
        %v7058 = vadd.f32 %v6978, %v6986
        %v7059 = vadd.f32 %v6979, %v6987
        %v7060 = vadd.f32 %v6980, %v6988
        %v7061 = vadd.f32 %v7053, 0.0009
        %v7062 = vadd.f32 %v7054, 0.0009
        %v7063 = vadd.f32 %v7055, 0.0009
        %v7064 = vadd.f32 %v7056, 0.0009
        %v7065 = vadd.f32 %v7057, 0.0009
        %v7066 = vadd.f32 %v7058, 0.0009
        %v7067 = vadd.f32 %v7059, 0.0009
        %v7068 = vadd.f32 %v7060, 0.0009
        %v7069 = vmul.f32 %v7045, %v7061
        %v7070 = vmul.f32 %v7046, %v7062
        %v7071 = vmul.f32 %v7047, %v7063
        %v7072 = vmul.f32 %v7048, %v7064
        %v7073 = vmul.f32 %v7049, %v7065
        %v7074 = vmul.f32 %v7050, %v7066
        %v7075 = vmul.f32 %v7051, %v7067
        %v7076 = vmul.f32 %v7052, %v7068
        %v7077 = vrcp.pop %v7069
        %v7078 = vmul.f32 %v7069, %v7077
        %v7079 = vsub.f32 1.0, %v7078
        %v7080 = vmul.f32 %v7077, %v7079
        %v7081 = vadd.f32 %v7077, %v7080
        %vm7082 = vweird.f32 %v7069
        %vm7083 = vweird.f32 %v7077
        %vm7084 = vmor %vm7082, %vm7083
        %v7085 = vsel %vm7084, %v7077, %v7081
        %v7086 = vand.u32 2147483647, %v7069
        %vm7087 = vcmp.eq.f32.partialorder %v7086, 8.507059e+37
        %v7088 = vand.u32 %v7069, 2147483648
        %v7089 = vor.u32 1.1754944e-38, %v7088
        %v7090 = vsel %vm7087, %v7089, %v7085
        %v7091 = vmul.f32 %v7029, %v7090
        %v7092 = vrcp.pop %v7070
        %v7093 = vmul.f32 %v7070, %v7092
        %v7094 = vsub.f32 1.0, %v7093
        %v7095 = vmul.f32 %v7092, %v7094
        %v7096 = vadd.f32 %v7092, %v7095
        %vm7097 = vweird.f32 %v7070
        %vm7098 = vweird.f32 %v7092
        %vm7099 = vmor %vm7097, %vm7098
        %v7100 = vsel %vm7099, %v7092, %v7096
        %v7101 = vand.u32 2147483647, %v7070
        %vm7102 = vcmp.eq.f32.partialorder %v7101, 8.507059e+37
        %v7103 = vand.u32 %v7070, 2147483648
        %v7104 = vor.u32 1.1754944e-38, %v7103
        %v7105 = vsel %vm7102, %v7104, %v7100
        %v7106 = vmul.f32 %v7030, %v7105
        %v7107 = vrcp.pop %v7071
        %v7108 = vmul.f32 %v7071, %v7107
        %v7109 = vsub.f32 1.0, %v7108
        %v7110 = vmul.f32 %v7107, %v7109
        %v7111 = vadd.f32 %v7107, %v7110
        %vm7112 = vweird.f32 %v7071
        %vm7113 = vweird.f32 %v7107
        %vm7114 = vmor %vm7112, %vm7113
        %v7115 = vsel %vm7114, %v7107, %v7111
        %v7116 = vand.u32 2147483647, %v7071
        %vm7117 = vcmp.eq.f32.partialorder %v7116, 8.507059e+37
        %v7118 = vand.u32 %v7071, 2147483648
        %v7119 = vor.u32 1.1754944e-38, %v7118
        %v7120 = vsel %vm7117, %v7119, %v7115
        %v7121 = vmul.f32 %v7031, %v7120
        %v7122 = vrcp.pop %v7072
        %v7123 = vmul.f32 %v7072, %v7122
        %v7124 = vsub.f32 1.0, %v7123
        %v7125 = vmul.f32 %v7122, %v7124
        %v7126 = vadd.f32 %v7122, %v7125
        %vm7127 = vweird.f32 %v7072
        %vm7128 = vweird.f32 %v7122
        %vm7129 = vmor %vm7127, %vm7128
        %v7130 = vsel %vm7129, %v7122, %v7126
        %v7131 = vand.u32 2147483647, %v7072
        %vm7132 = vcmp.eq.f32.partialorder %v7131, 8.507059e+37
        %v7133 = vand.u32 %v7072, 2147483648
        %v7134 = vor.u32 1.1754944e-38, %v7133
        %v7135 = vsel %vm7132, %v7134, %v7130
        %v7136 = vmul.f32 %v7032, %v7135
        %v7137 = vrcp.pop %v7073
        %v7138 = vmul.f32 %v7073, %v7137
        %v7139 = vsub.f32 1.0, %v7138
        %v7140 = vmul.f32 %v7137, %v7139
        %v7141 = vadd.f32 %v7137, %v7140
        %vm7142 = vweird.f32 %v7073
        %vm7143 = vweird.f32 %v7137
        %vm7144 = vmor %vm7142, %vm7143
        %v7145 = vsel %vm7144, %v7137, %v7141
        %v7146 = vand.u32 2147483647, %v7073
        %vm7147 = vcmp.eq.f32.partialorder %v7146, 8.507059e+37
        %v7148 = vand.u32 %v7073, 2147483648
        %v7149 = vor.u32 1.1754944e-38, %v7148
        %v7150 = vsel %vm7147, %v7149, %v7145
        %v7151 = vmul.f32 %v7033, %v7150
        %v7152 = vrcp.pop %v7074
        %v7153 = vmul.f32 %v7074, %v7152
        %v7154 = vsub.f32 1.0, %v7153
        %v7155 = vmul.f32 %v7152, %v7154
        %v7156 = vadd.f32 %v7152, %v7155
        %vm7157 = vweird.f32 %v7074
        %vm7158 = vweird.f32 %v7152
        %vm7159 = vmor %vm7157, %vm7158
        %v7160 = vsel %vm7159, %v7152, %v7156
        %v7161 = vand.u32 2147483647, %v7074
        %vm7162 = vcmp.eq.f32.partialorder %v7161, 8.507059e+37
        %v7163 = vand.u32 %v7074, 2147483648
        %v7164 = vor.u32 1.1754944e-38, %v7163
        %v7165 = vsel %vm7162, %v7164, %v7160
        %v7166 = vmul.f32 %v7034, %v7165
        %v7167 = vrcp.pop %v7075
        %v7168 = vmul.f32 %v7075, %v7167
        %v7169 = vsub.f32 1.0, %v7168
        %v7170 = vmul.f32 %v7167, %v7169
        %v7171 = vadd.f32 %v7167, %v7170
        %vm7172 = vweird.f32 %v7075
        %vm7173 = vweird.f32 %v7167
        %vm7174 = vmor %vm7172, %vm7173
        %v7175 = vsel %vm7174, %v7167, %v7171
        %v7176 = vand.u32 2147483647, %v7075
        %vm7177 = vcmp.eq.f32.partialorder %v7176, 8.507059e+37
        %v7178 = vand.u32 %v7075, 2147483648
        %v7179 = vor.u32 1.1754944e-38, %v7178
        %v7180 = vsel %vm7177, %v7179, %v7175
        %v7181 = vmul.f32 %v7035, %v7180
        %v7182 = vrcp.pop %v7076
        %v7183 = vmul.f32 %v7076, %v7182
        %v7184 = vsub.f32 1.0, %v7183
        %v7185 = vmul.f32 %v7182, %v7184
        %v7186 = vadd.f32 %v7182, %v7185
        %vm7187 = vweird.f32 %v7076
        %vm7188 = vweird.f32 %v7182
        %vm7189 = vmor %vm7187, %vm7188
        %v7190 = vsel %vm7189, %v7182, %v7186
        %v7191 = vand.u32 2147483647, %v7076
        %vm7192 = vcmp.eq.f32.partialorder %v7191, 8.507059e+37
        %v7193 = vand.u32 %v7076, 2147483648
        %v7194 = vor.u32 1.1754944e-38, %v7193
        %v7195 = vsel %vm7192, %v7194, %v7190
        %v7196 = vmul.f32 %v7036, %v7195
        %vm7197 = vcmask 130048
        %v7198 = vsel %vm7197, %v7091, 0.0
        %7199 = vadd.xlane.f32.xlu0 %v7198
        %v7200 = vpop.xlane.xlu0 %7199
        %v7201 = vsel %vm7197, %v7106, 0.0
        %7202 = vadd.xlane.f32.xlu0 %v7201
        %v7203 = vpop.xlane.xlu0 %7202
        %v7204 = vsel %vm7197, %v7121, 0.0
        %7205 = vadd.xlane.f32.xlu0 %v7204
        %v7206 = vpop.xlane.xlu0 %7205
        %v7207 = vsel %vm7197, %v7136, 0.0
        %7208 = vadd.xlane.f32.xlu0 %v7207
        %v7209 = vpop.xlane.xlu0 %7208
        %v7210 = vsel %vm7197, %v7151, 0.0
        %7211 = vadd.xlane.f32.xlu0 %v7210
        %v7212 = vpop.xlane.xlu0 %7211
        %v7213 = vsel %vm7197, %v7166, 0.0
        %7214 = vadd.xlane.f32.xlu0 %v7213
        %v7215 = vpop.xlane.xlu0 %7214
        %v7216 = vsel %vm7197, %v7181, 0.0
        %7217 = vadd.xlane.f32.xlu0 %v7216
        %v7218 = vpop.xlane.xlu0 %7217
        %v7219 = vsel %vm7197, %v7196, 0.0
        %7220 = vadd.xlane.f32.xlu0 %v7219
        %v7221 = vpop.xlane.xlu0 %7220
        %v7222 = vadd.f32 %v7200, %v7203
        %v7223 = vrot.slane %v7222, 4
        %v7224 = vadd.f32 %v7222, %v7223
        %v7225 = vrot.slane %v7224, 2
        %v7226 = vadd.f32 %v7224, %v7225
        %v7227 = vrot.slane %v7226, 1
        %v7228 = vadd.f32 %v7226, %v7227
        %v7229 = vadd.f32 %v7206, %v7209
        %v7230 = vrot.slane %v7229, 4
        %v7231 = vadd.f32 %v7229, %v7230
        %v7232 = vrot.slane %v7231, 2
        %v7233 = vadd.f32 %v7231, %v7232
        %v7234 = vrot.slane %v7233, 1
        %v7235 = vadd.f32 %v7233, %v7234
        %v7236 = vadd.f32 %v7212, %v7215
        %v7237 = vrot.slane %v7236, 4
        %v7238 = vadd.f32 %v7236, %v7237
        %v7239 = vrot.slane %v7238, 2
        %v7240 = vadd.f32 %v7238, %v7239
        %v7241 = vrot.slane %v7240, 1
        %v7242 = vadd.f32 %v7240, %v7241
        %v7243 = vadd.f32 %v7218, %v7221
        %v7244 = vrot.slane %v7243, 4
        %v7245 = vadd.f32 %v7243, %v7244
        %v7246 = vrot.slane %v7245, 2
        %v7247 = vadd.f32 %v7245, %v7246
        %v7248 = vrot.slane %v7247, 1
        %v7249 = vadd.f32 %v7247, %v7248
        %7250 = vst [vmem:[%s207] sm:$0x1] %v7228
        %7251 = vst [vmem:[%s207 + $0x1] sm:$0x1] %v7235
        %7252 = vst [vmem:[%s207 + $0x2] sm:$0x1] %v7242
        %7253 = vst [vmem:[%s207 + $0x3] sm:$0x1] %v7249
        %s7254 = sand.u32 %s82, 1
        %s7255 = scalar_lea.sflag [#allocation6], %s7254
        %s7256 = sand.u32 %s82, 1
        %s7257 = smul.addr %s7256, 4
        %s7258 = scalar_lea.vmem [#allocation9], %s7257
        // Predicated region
        $region37: #{tpu_custom_call.1} parent=27 // pred_check
          %p7259 = pneg %p92
        $region38: #{tpu_custom_call.1} parent=27 // pred_check_branch
          %7261 = sbr.rel (%p7259) target = $region40
        $region39: #{tpu_custom_call.1} parent=27 // pred_region
          %s7262 = smul.u32 4, %s22
          %7264 = vsyncadd %s7255, 0
          %s7265 = scalar_lea.hbm %s2, %s7262
          %s7266 = sshll.u32 %s7258, 4
          %s7267 = int_to_ptr.vmem [resolvable:$true] %s7266
          %s7268 = sshll.u32 %s7265, 4
          %s7269 = int_to_ptr.hbm [resolvable:$true] %s7268
          %7274 = dma.vmem_to_hbm [thread:$0]  %s7267, 64, %s7269, %s7255, 16, 16, 1
        $region40: #{tpu_custom_call.1} parent=27 // pred_fallthru
          _
      $region28: #{tpu_custom_call.1} parent=5 // pred_fallthru
        _
      %p7275 = scmp.le.s32.totalorder 2, %s17
      // Predicated region
      $region41: #{tpu_custom_call.1} parent=5 // pred_check
        %p7276 = pneg %p7275
      $region42: #{tpu_custom_call.1} parent=5 // pred_check_branch
        %7278 = sbr.rel (%p7276) target = $region44
      $region43: #{tpu_custom_call.1} parent=5 // pred_region
        %s7279 = ssub.s32 %s17, 2
        // Predicated region
        $region45: #{tpu_custom_call.1} parent=43 // pred_check
          %p7280 = pneg %p98
        $region46: #{tpu_custom_call.1} parent=43 // pred_check_branch
          %7282 = sbr.rel (%p7280) target = $region48
        $region47: #{tpu_custom_call.1} parent=43 // pred_region
          %s7283 = sand.u32 %s83, 1
          %s7284 = scalar_lea.sflag [#allocation6], %s7283
          %s7285 = sand.u32 %s83, 1
          %s7286 = smul.addr %s7285, 4
          %s7287 = scalar_lea.vmem [#allocation9], %s7286
          %7289 = dma.done %s7284, 64
        $region48: #{tpu_custom_call.1} parent=43 // pred_fallthru
          _
      $region44: #{tpu_custom_call.1} parent=5 // pred_fallthru
        _
    $region6: #{tpu_custom_call.1} parent=1 // loop_footer
      %s21 = sadd.s32 1, %s17
    $region7: #{tpu_custom_call.1} parent=1 // loop_footer_branch
      %16 = sbr.rel target = $region3
    $region8: #{tpu_custom_call.1} parent=1 // loop_exit
      _
    %7290 = vsyncpa [#allocation5], 1
    %s7291 = scalar_lea.sflag [#allocation5], 1
    %7292 = vsyncpa %s7291, 1
    %7293 = vsyncpa [#allocation8], 1
    %s7294 = scalar_lea.sflag [#allocation8], 1
    %7295 = vsyncpa %s7294, 1
    %7296 = vsyncpa [#allocation6], 1
    %s7297 = scalar_lea.sflag [#allocation6], 1
    %7298 = vsyncpa %s7297, 1

</llo_original>
